<compile_context>
chip_gen: v5e
topology: v5e:2x2
jax: 0.10.0
libtpu: 0.0.40
codegen_flags: <defaults>
</compile_context>

<pallas_src>
import jax
import jax.numpy as jnp
import numpy as np
from jax import lax
from jax.experimental import pallas as pl
from jax.experimental.pallas import tpu as pltpu


_DIL = (3, 5, 7)


def _out_hw(hw, d):
    H, W = hw
    return H + 4 - 2 * d, W + 4 - 2 * d


# ----------------------------------------------------------------------------
# Host-side (numpy) constant matrices — shape-derived, compile-time constants.
# ----------------------------------------------------------------------------
def _bilinear_matrix(n_in, n_out):
    """(n_out, n_in) 1-D bilinear interpolation matrix, align_corners=True."""
    if n_in == 1:
        return np.ones((n_out, 1), np.float32)
    m = np.zeros((n_out, n_in), np.float32)
    src = np.arange(n_out, dtype=np.float64) * (n_in - 1) / (n_out - 1)
    lo = np.clip(np.floor(src).astype(np.int64), 0, n_in - 2)
    frac = (src - lo).astype(np.float32)
    rows = np.arange(n_out)
    m[rows, lo] += 1.0 - frac
    m[rows, lo + 1] += frac
    return m


def _avgpool_matrix(n_in):
    """(n_in//2, n_in) matrix of AvgPool2d(kernel=2, stride=2) along one axis."""
    n_out = n_in // 2
    m = np.zeros((n_out, n_in), np.float32)
    rows = np.arange(n_out)
    m[rows, 2 * rows] = 0.5
    m[rows, 2 * rows + 1] = 0.5
    return m


# ----------------------------------------------------------------------------
# Constant packing: two slabs + static row offsets.
# ----------------------------------------------------------------------------
def _pack_constants(params, Bblk, C, spatial):
    (Ho1, Wo1) = _out_hw(spatial[0], _DIL[0])
    (Ho2, Wo2) = _out_hw(spatial[1], _DIL[1])
    (Ho3, Wo3) = _out_hw(spatial[2], _DIL[2])

    # Fold eval-mode BatchNorm scale into the atrous conv weights (per Cout).
    def fold(w, scale):
        return (w.reshape(9 * C, C) * scale).astype(jnp.float32)

    aw = [fold(params[f'aw{i}'], params[f'as{i}']) for i in (1, 2, 3)]
    sh = [params[f'ash{i}'].astype(jnp.float32) for i in (1, 2, 3)]
    ws = [params[f'w{i}'].astype(jnp.float32) for i in (1, 2, 3)]
    bs = [params[f'b{i}'].astype(jnp.float32) for i in (1, 2, 3)]

    # Row offsets inside the weight slab (all sections 8-row aligned for C=8).
    naw = 9 * C
    offs = {'aw1': 0, 'aw2': naw, 'aw3': 2 * naw,
            'w1': 3 * naw, 'w2': 3 * naw + C, 'w3': 3 * naw + 2 * C}
    vrow = 3 * naw + 3 * C
    for i, name in enumerate(('sh1', 'sh2', 'sh3', 'b1', 'b2', 'b3')):
        offs[name] = vrow + 8 * i
    offs['up'] = vrow + 48

    eyeb = np.eye(Bblk, dtype=np.float32)
    # Bilinear x2 upsample of a3 as one (batch-block-diagonal) matrix.
    up = np.kron(eyeb, np.kron(_bilinear_matrix(Ho3, 2 * Ho3),
                               _bilinear_matrix(Wo3, 2 * Wo3)))

    def rpad(a, rows):
        return jnp.pad(a, ((0, rows - a.shape[0]), (0, 0)))

    cpart = jnp.concatenate(aw + ws + [rpad(v, 8) for v in sh + bs], axis=0)
    width = max(C, Bblk * Ho3 * Wo3)
    wslab = jnp.concatenate(
        [jnp.pad(cpart, ((0, 0), (0, width - C))),
         jnp.pad(jnp.asarray(up), ((0, 0), (0, width - Bblk * Ho3 * Wo3)))],
        axis=0)                                       # (offs['up'] + Bblk*Ho2*Wo2, width)

    # GAP-mean matrix + avgpool/center-crop matrix share one 128-wide slab.
    mean = np.kron(eyeb, np.full((1, Ho1 * Wo1), 1.0 / (Ho1 * Wo1), np.float32))
    Hf, Wf = Ho2 + 2, Wo2 + 2
    ph, pw = _avgpool_matrix(Hf), _avgpool_matrix(Wf)
    offp, offq = (ph.shape[0] - 3) // 2, (pw.shape[0] - 3) // 2
    assert offp >= 0 and offq >= 0, "feature maps too small for the 3x3 crop"
    # Rows/cols restricted to conv2's interior (border of the padded conv2
    # output is bias-only and never touched by the surviving pool windows).
    pool = np.kron(eyeb, np.kron(ph[offp:offp + 3, 1:1 + Ho2],
                                 pw[offq:offq + 3, 1:1 + Wo2]))  # (Bblk*9, Bblk*Ho2*Wo2)
    mrows = ((Bblk + 7) // 8) * 8
    offs['pool'] = mrows
    pslab = jnp.concatenate(
        [jnp.asarray(np.pad(mean, ((0, mrows - Bblk), (0, 0)))),
         jnp.asarray(pool)], axis=0)

    return wslab, pslab, offs


# ----------------------------------------------------------------------------
# Fused FFM kernel (one grid step = Bblk batch elements, default: the whole B).
# ----------------------------------------------------------------------------
def _make_ffm_kernel(Bblk, C, spatial, offs):
    outs = tuple(_out_hw(hw, d) for hw, d in zip(spatial, _DIL))
    (Ho1, Wo1), (Ho2, Wo2), (Ho3, Wo3) = outs

    def kernel(x1_ref, x2_ref, x3_ref, wsl_ref, psl_ref, o_ref,
               pad1_ref, pad2_ref, pad3_ref):

        def vec(row):                         # (1, C) constant row from the slab
            return wsl_ref[row:row + 1, 0:C]

        def mat(row, rows):                   # (rows, C) constant block
            return wsl_ref[row:row + rows, 0:C]

        def atrous(x_ref, pad_ref, aw_row, sh_row, hw, d, out_hw):
            H, W = hw
            Ho, Wo = out_hw
            Wp = W + 4
            # Halo-only zeroing of the padding ring (4 thin stores); the
            # interior is fully overwritten right below, so nothing is stale.
            zr = jnp.zeros((Bblk, 2, Wp, C), jnp.float32)
            zc = jnp.zeros((Bblk, H, 2, C), jnp.float32)
            pad_ref[:, 0:2, :, :] = zr
            pad_ref[:, H + 2:H + 4, :, :] = zr
            pad_ref[:, 2:2 + H, 0:2, :] = zc
            pad_ref[:, 2:2 + H, W + 2:W + 4, :] = zc
            pad_ref[:, 2:2 + H, 2:2 + W, :] = x_ref[...].astype(jnp.float32)

            # 9 small MXU dots accumulated in vregs — no im2col scatter buffer.
            M = Bblk * Ho * Wo
            acc = jnp.zeros((M, C), jnp.float32)
            for ky in range(3):
                for kx in range(3):
                    k = ky * 3 + kx
                    patch = pad_ref[:, ky * d:ky * d + Ho,
                                    kx * d:kx * d + Wo, :].reshape(M, C)
                    acc = acc + jnp.dot(patch, mat(aw_row + k * C, C),
                                        preferred_element_type=jnp.float32)
            # BN(eval) is folded into the weights (scale) / sh (shift); ReLU.
            return jnp.maximum(acc + vec(sh_row), 0.0)          # (M, C)

        a1 = atrous(x1_ref, pad1_ref, offs['aw1'], offs['sh1'],
                    spatial[0], _DIL[0], outs[0])
        a2 = atrous(x2_ref, pad2_ref, offs['aw2'], offs['sh2'],
                    spatial[1], _DIL[1], outs[1])
        a3 = atrous(x3_ref, pad3_ref, offs['aw3'], offs['sh3'],
                    spatial[2], _DIL[2], outs[2])

        # gap2 = sigmoid(conv1(softmax(GAP(a1 + a2)))).  conv1 is a 1x1 conv
        # with padding=1 on a 1x1 map -> 3x3: center = conv result, border =
        # bias only.  GAP is the folded mean matrix (rows 0..Bblk of pslab).
        gap1 = jnp.dot(psl_ref[0:Bblk, :], a1 + a2,
                       preferred_element_type=jnp.float32)       # (Bblk, C)
        z = gap1 - jnp.max(gap1, axis=1, keepdims=True)
        e = jnp.exp(z)
        p = e * pl.reciprocal(jnp.sum(e, axis=1, keepdims=True), approx=True)
        b1 = vec(offs['b1'])
        center = jax.nn.sigmoid(
            jnp.dot(p, mat(offs['w1'], C), preferred_element_type=jnp.float32) + b1)
        border = jax.nn.sigmoid(b1)                              # (1, C)

        # fs3 = bilinear x2 upsample of a3 via the folded (block-diag) matrix.
        up = wsl_ref[offs['up']:offs['up'] + Bblk * Ho2 * Wo2, 0:Bblk * Ho3 * Wo3]
        fs3 = jnp.dot(up, a3, preferred_element_type=jnp.float32)  # (Bblk*Ho2*Wo2, C)

        # conv2(a2 + fs3) interior; avg-pool + conv3 restricted to the
        # center-3x3 crop via the folded pool matrix (biases re-added since
        # every surviving pool row sums to 1).
        t = jnp.dot(a2 + fs3, mat(offs['w2'], C), preferred_element_type=jnp.float32)
        pooled = jnp.dot(psl_ref[offs['pool']:offs['pool'] + Bblk * 9, :], t,
                         preferred_element_type=jnp.float32) + vec(offs['b2'])
        gap = jnp.dot(pooled, mat(offs['w3'], C),
                      preferred_element_type=jnp.float32) + vec(offs['b3'])  # (Bblk*9, C)

        # TODO(synk): the original PyTorch graph `ffs = gap + gap2` is shape-
        # inconsistent (gap2 is always 3x3); as before we use the center 3x3
        # window of conv3's padded output so the residual add is well defined.
        gap3 = gap.reshape(Bblk, 9, C)
        pix = lax.broadcasted_iota(jnp.int32, (Bblk, 9, C), 1)
        gap2 = jnp.where(pix == 4, center.reshape(Bblk, 1, C),
                         border.reshape(1, 1, C))
        o_ref[...] = jax.nn.sigmoid(gap3 + gap2).astype(o_ref.dtype)

    return kernel


# ----------------------------------------------------------------------------
# Parameters (deterministic, mirroring weight_init: kaiming weights, zero bias,
# BatchNorm gamma=1 / beta=0, eval-mode running stats 0 / 1).
# ----------------------------------------------------------------------------
def init_params(key, C):
    ks = jax.random.split(key, 6)

    def kaiming(k, shape, fan_in):
        return jax.random.normal(k, shape, jnp.float32) * jnp.sqrt(2.0 / fan_in)

    params = {}
    params['aw1'] = kaiming(ks[0], (9, C, C), C * 9)
    params['aw2'] = kaiming(ks[1], (9, C, C), C * 9)
    params['aw3'] = kaiming(ks[2], (9, C, C), C * 9)
    eps = 1e-5
    bn_scale = jnp.full((1, C), 1.0 / float(np.sqrt(1.0 + eps)), jnp.float32)
    bn_shift = jnp.zeros((1, C), jnp.float32)
    for i in (1, 2, 3):
        params[f'as{i}'] = bn_scale
        params[f'ash{i}'] = bn_shift
    params['w1'] = kaiming(ks[3], (C, C), C)
    params['w2'] = kaiming(ks[4], (C, C), C)
    params['w3'] = kaiming(ks[5], (C, C), C)
    params['b1'] = jnp.zeros((1, C), jnp.float32)
    params['b2'] = jnp.zeros((1, C), jnp.float32)
    params['b3'] = jnp.zeros((1, C), jnp.float32)
    return params


# ----------------------------------------------------------------------------
# Full forward (accepts NCHW like the PyTorch module, returns NCHW).
#   batch_blocks=1 (default): whole batch in one grid step (best on v5e/v6e).
#   batch_blocks=2: "parallel" batch grid for v7x's two TensorCores (even B).
# ----------------------------------------------------------------------------
def ffm_forward(params, f1, f2, f3, *, batch_blocks=1):
    # NCHW -> NHWC at the boundary (channels on the lane axis in-kernel).
    # TODO(synk): these three transposes disappear if upstream emits NHWC.
    x1 = jnp.transpose(f1, (0, 2, 3, 1))
    x2 = jnp.transpose(f2, (0, 2, 3, 1))
    x3 = jnp.transpose(f3, (0, 2, 3, 1))

    B, H1, W1, C = x1.shape
    _, H2, W2, _ = x2.shape
    _, H3, W3, _ = x3.shape
    spatial = ((H1, W1), (H2, W2), (H3, W3))
    (Ho1, Wo1) = _out_hw(spatial[0], _DIL[0])
    (Ho2, Wo2) = _out_hw(spatial[1], _DIL[1])
    (Ho3, Wo3) = _out_hw(spatial[2], _DIL[2])
    assert (Ho1, Wo1) == (Ho2, Wo2), "atrous1/atrous2 outputs must match"
    assert (2 * Ho3, 2 * Wo3) == (Ho2, Wo2), "upsampled atrous3 must match atrous2"

    g = batch_blocks if (batch_blocks >= 1 and B % batch_blocks == 0) else 1
    Bblk = B // g

    wslab, pslab, offs = _pack_constants(params, Bblk, C, spatial)
    kernel = _make_ffm_kernel(Bblk, C, spatial, offs)

    def const_spec(a):
        n = a.ndim
        return pl.BlockSpec(tuple(a.shape), lambda i: (0,) * n)

    def x_spec(H, W):
        return pl.BlockSpec((Bblk, H, W, C), lambda i: (i, 0, 0, 0))

    out = pl.pallas_call(
        kernel,
        out_shape=jax.ShapeDtypeStruct((B, 9, C), x1.dtype),
        grid=(g,),
        in_specs=[x_spec(H1, W1), x_spec(H2, W2), x_spec(H3, W3),
                  const_spec(wslab), const_spec(pslab)],
        out_specs=pl.BlockSpec((Bblk, 9, C), lambda i: (i, 0, 0)),
        scratch_shapes=[pltpu.VMEM((Bblk, H1 + 4, W1 + 4, C), jnp.float32),
                        pltpu.VMEM((Bblk, H2 + 4, W2 + 4, C), jnp.float32),
                        pltpu.VMEM((Bblk, H3 + 4, W3 + 4, C), jnp.float32)],
        compiler_params=pltpu.CompilerParams(
            dimension_semantics=("parallel",) if g > 1 else ("arbitrary",)),
    )(x1, x2, x3, wslab, pslab)

    # (B, 9, C) -> (B, 3, 3, C) -> NCHW
    return jnp.transpose(out.reshape(B, 3, 3, C), (0, 3, 1, 2))


if __name__ == "__main__":
    key = jax.random.PRNGKey(0)
    B, C = 2, 8
    kp, k1, k2, k3 = jax.random.split(key, 4)
    params = init_params(kp, C)

    # Spatial sizes chosen so the residual adds in the graph line up:
    #   atrous1 (d=3): 10 -> 8 ; atrous2 (d=5): 14 -> 8 ; atrous3 (d=7): 14 -> 4
    #   upsample x2: 4 -> 8 ; conv2(pad=1): 8 -> 10 ; avg_pool: 10 -> 5
    f1 = jax.random.normal(k1, (B, C, 10, 10), jnp.float32)
    f2 = jax.random.normal(k2, (B, C, 14, 14), jnp.float32)
    f3 = jax.random.normal(k3, (B, C, 14, 14), jnp.float32)

    out = jax.jit(ffm_forward)(params, f1, f2, f3)
    jax.block_until_ready(out)
    assert out.shape == (B, C, 3, 3), out.shape
    print("KERNEL_OK")
</pallas_src>

<mosaic_0001>
module attributes {stable_mosaic.version = 11 : i64} {
  func.func @kernel(%arg0: i32, %arg1: memref<2x10x10x8xf32, #tpu.memory_space<vmem>>, %arg2: memref<2x14x14x8xf32, #tpu.memory_space<vmem>>, %arg3: memref<2x14x14x8xf32, #tpu.memory_space<vmem>>, %arg4: memref<416x32xf32, #tpu.memory_space<vmem>>, %arg5: memref<26x128xf32, #tpu.memory_space<vmem>>, %arg6: memref<2x9x8xf32, #tpu.memory_space<vmem>>, %arg7: memref<2x14x14x8xf32, #tpu.memory_space<vmem>>, %arg8: memref<2x18x18x8xf32, #tpu.memory_space<vmem>>, %arg9: memref<2x18x18x8xf32, #tpu.memory_space<vmem>>) attributes {dimension_semantics = [#tpu.dimension_semantics<arbitrary>], iteration_bounds = array<i64: 1>, scalar_prefetch = 0 : i64, scratch_operands = 3 : i64, tpu.core_type = #tpu.core_type<tc>, window_params = [{transform_indices = @transform_0, window_bounds = array<i64: 2, 10, 10, 8>}, {transform_indices = @transform_1, window_bounds = array<i64: 2, 14, 14, 8>}, {transform_indices = @transform_2, window_bounds = array<i64: 2, 14, 14, 8>}, {pipeline_mode = #tpu.pipeline_mode<synchronous>, transform_indices = @transform_3, window_bounds = array<i64: 416, 32>}, {pipeline_mode = #tpu.pipeline_mode<synchronous>, transform_indices = @transform_4, window_bounds = array<i64: 26, 128>}, {transform_indices = @transform_5, window_bounds = array<i64: 2, 9, 8>}]} {
    %cst = arith.constant 0.000000e+00 : f32
    %0 = vector.broadcast %cst : f32 to vector<2x2x14x8xf32>
    %cst_0 = arith.constant 0.000000e+00 : f32
    %1 = vector.broadcast %cst_0 : f32 to vector<2x10x2x8xf32>
    %c0 = arith.constant 0 : index
    %c0_1 = arith.constant 0 : index
    %c0_2 = arith.constant 0 : index
    %c0_3 = arith.constant 0 : index
    %2 = vector.load %arg7[%c0, %c0_1, %c0_2, %c0_3] : memref<2x14x14x8xf32, #tpu.memory_space<vmem>>, vector<2x2x14x8xf32>
    tpu.vector_store %arg7[%c0, %c0_1, %c0_2, %c0_3], %0 {strides = array<i32>} : memref<2x14x14x8xf32, #tpu.memory_space<vmem>>, vector<2x2x14x8xf32>,
    %c0_4 = arith.constant 0 : index
    %c12 = arith.constant 12 : index
    %c0_5 = arith.constant 0 : index
    %c0_6 = arith.constant 0 : index
    %3 = vector.load %arg7[%c0_4, %c12, %c0_5, %c0_6] : memref<2x14x14x8xf32, #tpu.memory_space<vmem>>, vector<2x2x14x8xf32>
    tpu.vector_store %arg7[%c0_4, %c12, %c0_5, %c0_6], %0 {strides = array<i32>} : memref<2x14x14x8xf32, #tpu.memory_space<vmem>>, vector<2x2x14x8xf32>,
    %c0_7 = arith.constant 0 : index
    %c2 = arith.constant 2 : index
    %c0_8 = arith.constant 0 : index
    %c0_9 = arith.constant 0 : index
    %4 = vector.load %arg7[%c0_7, %c2, %c0_8, %c0_9] : memref<2x14x14x8xf32, #tpu.memory_space<vmem>>, vector<2x10x2x8xf32>
    tpu.vector_store %arg7[%c0_7, %c2, %c0_8, %c0_9], %1 {strides = array<i32>} : memref<2x14x14x8xf32, #tpu.memory_space<vmem>>, vector<2x10x2x8xf32>,
    %c0_10 = arith.constant 0 : index
    %c2_11 = arith.constant 2 : index
    %c12_12 = arith.constant 12 : index
    %c0_13 = arith.constant 0 : index
    %5 = vector.load %arg7[%c0_10, %c2_11, %c12_12, %c0_13] : memref<2x14x14x8xf32, #tpu.memory_space<vmem>>, vector<2x10x2x8xf32>
    tpu.vector_store %arg7[%c0_10, %c2_11, %c12_12, %c0_13], %1 {strides = array<i32>} : memref<2x14x14x8xf32, #tpu.memory_space<vmem>>, vector<2x10x2x8xf32>,
    %c0_14 = arith.constant 0 : index
    %c0_15 = arith.constant 0 : index
    %c0_16 = arith.constant 0 : index
    %c0_17 = arith.constant 0 : index
    %6 = vector.load %arg1[%c0_14, %c0_15, %c0_16, %c0_17] : memref<2x10x10x8xf32, #tpu.memory_space<vmem>>, vector<2x10x10x8xf32>
    %c0_18 = arith.constant 0 : index
    %c2_19 = arith.constant 2 : index
    %c2_20 = arith.constant 2 : index
    %c0_21 = arith.constant 0 : index
    %7 = vector.load %arg7[%c0_18, %c2_19, %c2_20, %c0_21] : memref<2x14x14x8xf32, #tpu.memory_space<vmem>>, vector<2x10x10x8xf32>
    tpu.vector_store %arg7[%c0_18, %c2_19, %c2_20, %c0_21], %6 {strides = array<i32>} : memref<2x14x14x8xf32, #tpu.memory_space<vmem>>, vector<2x10x10x8xf32>,
    %cst_22 = arith.constant 0.000000e+00 : f32
    %8 = vector.broadcast %cst_22 : f32 to vector<128x8xf32>
    %c0_23 = arith.constant 0 : index
    %c0_24 = arith.constant 0 : index
    %c0_25 = arith.constant 0 : index
    %c0_26 = arith.constant 0 : index
    %9 = vector.load %arg7[%c0_23, %c0_24, %c0_25, %c0_26] : memref<2x14x14x8xf32, #tpu.memory_space<vmem>>, vector<2x8x8x8xf32>
    %10 = vector.shape_cast %9 : vector<2x8x8x8xf32> to vector<128x8xf32>
    %c0_27 = arith.constant 0 : index
    %c0_28 = arith.constant 0 : index
    %11 = vector.load %arg4[%c0_27, %c0_28] : memref<416x32xf32, #tpu.memory_space<vmem>>, vector<8x8xf32>
    %cst_29 = arith.constant dense<0.000000e+00> : vector<128x8xf32>
    %12 = tpu.matmul %10, %11, %cst_29 {dimension_numbers = #tpu.dot_dimension_numbers<[1], [0], [0], [1], [0, 0, 1, 1], [], []>} : vector<128x8xf32>, vector<8x8xf32>, vector<128x8xf32> -> vector<128x8xf32>
    %13 = arith.addf %8, %12 : vector<128x8xf32>
    %c0_30 = arith.constant 0 : index
    %c0_31 = arith.constant 0 : index
    %c3 = arith.constant 3 : index
    %c0_32 = arith.constant 0 : index
    %14 = vector.load %arg7[%c0_30, %c0_31, %c3, %c0_32] : memref<2x14x14x8xf32, #tpu.memory_space<vmem>>, vector<2x8x8x8xf32>
    %15 = vector.shape_cast %14 : vector<2x8x8x8xf32> to vector<128x8xf32>
    %c8 = arith.constant 8 : index
    %c0_33 = arith.constant 0 : index
    %16 = vector.load %arg4[%c8, %c0_33] : memref<416x32xf32, #tpu.memory_space<vmem>>, vector<8x8xf32>
    %cst_34 = arith.constant dense<0.000000e+00> : vector<128x8xf32>
    %17 = tpu.matmul %15, %16, %cst_34 {dimension_numbers = #tpu.dot_dimension_numbers<[1], [0], [0], [1], [0, 0, 1, 1], [], []>} : vector<128x8xf32>, vector<8x8xf32>, vector<128x8xf32> -> vector<128x8xf32>
    %18 = arith.addf %13, %17 : vector<128x8xf32>
    %c0_35 = arith.constant 0 : index
    %c0_36 = arith.constant 0 : index
    %c6 = arith.constant 6 : index
    %c0_37 = arith.constant 0 : index
    %19 = vector.load %arg7[%c0_35, %c0_36, %c6, %c0_37] : memref<2x14x14x8xf32, #tpu.memory_space<vmem>>, vector<2x8x8x8xf32>
    %20 = vector.shape_cast %19 : vector<2x8x8x8xf32> to vector<128x8xf32>
    %c16 = arith.constant 16 : index
    %c0_38 = arith.constant 0 : index
    %21 = vector.load %arg4[%c16, %c0_38] : memref<416x32xf32, #tpu.memory_space<vmem>>, vector<8x8xf32>
    %cst_39 = arith.constant dense<0.000000e+00> : vector<128x8xf32>
    %22 = tpu.matmul %20, %21, %cst_39 {dimension_numbers = #tpu.dot_dimension_numbers<[1], [0], [0], [1], [0, 0, 1, 1], [], []>} : vector<128x8xf32>, vector<8x8xf32>, vector<128x8xf32> -> vector<128x8xf32>
    %23 = arith.addf %18, %22 : vector<128x8xf32>
    %c0_40 = arith.constant 0 : index
    %c3_41 = arith.constant 3 : index
    %c0_42 = arith.constant 0 : index
    %c0_43 = arith.constant 0 : index
    %24 = vector.load %arg7[%c0_40, %c3_41, %c0_42, %c0_43] : memref<2x14x14x8xf32, #tpu.memory_space<vmem>>, vector<2x8x8x8xf32>
    %25 = vector.shape_cast %24 : vector<2x8x8x8xf32> to vector<128x8xf32>
    %c24 = arith.constant 24 : index
    %c0_44 = arith.constant 0 : index
    %26 = vector.load %arg4[%c24, %c0_44] : memref<416x32xf32, #tpu.memory_space<vmem>>, vector<8x8xf32>
    %cst_45 = arith.constant dense<0.000000e+00> : vector<128x8xf32>
    %27 = tpu.matmul %25, %26, %cst_45 {dimension_numbers = #tpu.dot_dimension_numbers<[1], [0], [0], [1], [0, 0, 1, 1], [], []>} : vector<128x8xf32>, vector<8x8xf32>, vector<128x8xf32> -> vector<128x8xf32>
    %28 = arith.addf %23, %27 : vector<128x8xf32>
    %c0_46 = arith.constant 0 : index
    %c3_47 = arith.constant 3 : index
    %c3_48 = arith.constant 3 : index
    %c0_49 = arith.constant 0 : index
    %29 = vector.load %arg7[%c0_46, %c3_47, %c3_48, %c0_49] : memref<2x14x14x8xf32, #tpu.memory_space<vmem>>, vector<2x8x8x8xf32>
    %30 = vector.shape_cast %29 : vector<2x8x8x8xf32> to vector<128x8xf32>
    %c32 = arith.constant 32 : index
    %c0_50 = arith.constant 0 : index
    %31 = vector.load %arg4[%c32, %c0_50] : memref<416x32xf32, #tpu.memory_space<vmem>>, vector<8x8xf32>
    %cst_51 = arith.constant dense<0.000000e+00> : vector<128x8xf32>
    %32 = tpu.matmul %30, %31, %cst_51 {dimension_numbers = #tpu.dot_dimension_numbers<[1], [0], [0], [1], [0, 0, 1, 1], [], []>} : vector<128x8xf32>, vector<8x8xf32>, vector<128x8xf32> -> vector<128x8xf32>
    %33 = arith.addf %28, %32 : vector<128x8xf32>
    %c0_52 = arith.constant 0 : index
    %c3_53 = arith.constant 3 : index
    %c6_54 = arith.constant 6 : index
    %c0_55 = arith.constant 0 : index
    %34 = vector.load %arg7[%c0_52, %c3_53, %c6_54, %c0_55] : memref<2x14x14x8xf32, #tpu.memory_space<vmem>>, vector<2x8x8x8xf32>
    %35 = vector.shape_cast %34 : vector<2x8x8x8xf32> to vector<128x8xf32>
    %c40 = arith.constant 40 : index
    %c0_56 = arith.constant 0 : index
    %36 = vector.load %arg4[%c40, %c0_56] : memref<416x32xf32, #tpu.memory_space<vmem>>, vector<8x8xf32>
    %cst_57 = arith.constant dense<0.000000e+00> : vector<128x8xf32>
    %37 = tpu.matmul %35, %36, %cst_57 {dimension_numbers = #tpu.dot_dimension_numbers<[1], [0], [0], [1], [0, 0, 1, 1], [], []>} : vector<128x8xf32>, vector<8x8xf32>, vector<128x8xf32> -> vector<128x8xf32>
    %38 = arith.addf %33, %37 : vector<128x8xf32>
    %c0_58 = arith.constant 0 : index
    %c6_59 = arith.constant 6 : index
    %c0_60 = arith.constant 0 : index
    %c0_61 = arith.constant 0 : index
    %39 = vector.load %arg7[%c0_58, %c6_59, %c0_60, %c0_61] : memref<2x14x14x8xf32, #tpu.memory_space<vmem>>, vector<2x8x8x8xf32>
    %40 = vector.shape_cast %39 : vector<2x8x8x8xf32> to vector<128x8xf32>
    %c48 = arith.constant 48 : index
    %c0_62 = arith.constant 0 : index
    %41 = vector.load %arg4[%c48, %c0_62] : memref<416x32xf32, #tpu.memory_space<vmem>>, vector<8x8xf32>
    %cst_63 = arith.constant dense<0.000000e+00> : vector<128x8xf32>
    %42 = tpu.matmul %40, %41, %cst_63 {dimension_numbers = #tpu.dot_dimension_numbers<[1], [0], [0], [1], [0, 0, 1, 1], [], []>} : vector<128x8xf32>, vector<8x8xf32>, vector<128x8xf32> -> vector<128x8xf32>
    %43 = arith.addf %38, %42 : vector<128x8xf32>
    %c0_64 = arith.constant 0 : index
    %c6_65 = arith.constant 6 : index
    %c3_66 = arith.constant 3 : index
    %c0_67 = arith.constant 0 : index
    %44 = vector.load %arg7[%c0_64, %c6_65, %c3_66, %c0_67] : memref<2x14x14x8xf32, #tpu.memory_space<vmem>>, vector<2x8x8x8xf32>
    %45 = vector.shape_cast %44 : vector<2x8x8x8xf32> to vector<128x8xf32>
    %c56 = arith.constant 56 : index
    %c0_68 = arith.constant 0 : index
    %46 = vector.load %arg4[%c56, %c0_68] : memref<416x32xf32, #tpu.memory_space<vmem>>, vector<8x8xf32>
    %cst_69 = arith.constant dense<0.000000e+00> : vector<128x8xf32>
    %47 = tpu.matmul %45, %46, %cst_69 {dimension_numbers = #tpu.dot_dimension_numbers<[1], [0], [0], [1], [0, 0, 1, 1], [], []>} : vector<128x8xf32>, vector<8x8xf32>, vector<128x8xf32> -> vector<128x8xf32>
    %48 = arith.addf %43, %47 : vector<128x8xf32>
    %c0_70 = arith.constant 0 : index
    %c6_71 = arith.constant 6 : index
    %c6_72 = arith.constant 6 : index
    %c0_73 = arith.constant 0 : index
    %49 = vector.load %arg7[%c0_70, %c6_71, %c6_72, %c0_73] : memref<2x14x14x8xf32, #tpu.memory_space<vmem>>, vector<2x8x8x8xf32>
    %50 = vector.shape_cast %49 : vector<2x8x8x8xf32> to vector<128x8xf32>
    %c64 = arith.constant 64 : index
    %c0_74 = arith.constant 0 : index
    %51 = vector.load %arg4[%c64, %c0_74] : memref<416x32xf32, #tpu.memory_space<vmem>>, vector<8x8xf32>
    %cst_75 = arith.constant dense<0.000000e+00> : vector<128x8xf32>
    %52 = tpu.matmul %50, %51, %cst_75 {dimension_numbers = #tpu.dot_dimension_numbers<[1], [0], [0], [1], [0, 0, 1, 1], [], []>} : vector<128x8xf32>, vector<8x8xf32>, vector<128x8xf32> -> vector<128x8xf32>
    %53 = arith.addf %48, %52 : vector<128x8xf32>
    %c240 = arith.constant 240 : index
    %c0_76 = arith.constant 0 : index
    %54 = vector.load %arg4[%c240, %c0_76] : memref<416x32xf32, #tpu.memory_space<vmem>>, vector<1x8xf32>
    %55 = vector.broadcast %54 : vector<1x8xf32> to vector<128x8xf32>
    %56 = arith.addf %53, %55 : vector<128x8xf32>
    %cst_77 = arith.constant 0.000000e+00 : f32
    %57 = vector.broadcast %cst_77 : f32 to vector<128x8xf32>
    %58 = arith.maximumf %56, %57 : vector<128x8xf32>
    %cst_78 = arith.constant 0.000000e+00 : f32
    %59 = vector.broadcast %cst_78 : f32 to vector<2x2x18x8xf32>
    %cst_79 = arith.constant 0.000000e+00 : f32
    %60 = vector.broadcast %cst_79 : f32 to vector<2x14x2x8xf32>
    %c0_80 = arith.constant 0 : index
    %c0_81 = arith.constant 0 : index
    %c0_82 = arith.constant 0 : index
    %c0_83 = arith.constant 0 : index
    %61 = vector.load %arg8[%c0_80, %c0_81, %c0_82, %c0_83] : memref<2x18x18x8xf32, #tpu.memory_space<vmem>>, vector<2x2x18x8xf32>
    tpu.vector_store %arg8[%c0_80, %c0_81, %c0_82, %c0_83], %59 {strides = array<i32>} : memref<2x18x18x8xf32, #tpu.memory_space<vmem>>, vector<2x2x18x8xf32>,
    %c0_84 = arith.constant 0 : index
    %c16_85 = arith.constant 16 : index
    %c0_86 = arith.constant 0 : index
    %c0_87 = arith.constant 0 : index
    %62 = vector.load %arg8[%c0_84, %c16_85, %c0_86, %c0_87] : memref<2x18x18x8xf32, #tpu.memory_space<vmem>>, vector<2x2x18x8xf32>
    tpu.vector_store %arg8[%c0_84, %c16_85, %c0_86, %c0_87], %59 {strides = array<i32>} : memref<2x18x18x8xf32, #tpu.memory_space<vmem>>, vector<2x2x18x8xf32>,
    %c0_88 = arith.constant 0 : index
    %c2_89 = arith.constant 2 : index
    %c0_90 = arith.constant 0 : index
    %c0_91 = arith.constant 0 : index
    %63 = vector.load %arg8[%c0_88, %c2_89, %c0_90, %c0_91] : memref<2x18x18x8xf32, #tpu.memory_space<vmem>>, vector<2x14x2x8xf32>
    tpu.vector_store %arg8[%c0_88, %c2_89, %c0_90, %c0_91], %60 {strides = array<i32>} : memref<2x18x18x8xf32, #tpu.memory_space<vmem>>, vector<2x14x2x8xf32>,
    %c0_92 = arith.constant 0 : index
    %c2_93 = arith.constant 2 : index
    %c16_94 = arith.constant 16 : index
    %c0_95 = arith.constant 0 : index
    %64 = vector.load %arg8[%c0_92, %c2_93, %c16_94, %c0_95] : memref<2x18x18x8xf32, #tpu.memory_space<vmem>>, vector<2x14x2x8xf32>
    tpu.vector_store %arg8[%c0_92, %c2_93, %c16_94, %c0_95], %60 {strides = array<i32>} : memref<2x18x18x8xf32, #tpu.memory_space<vmem>>, vector<2x14x2x8xf32>,
    %c0_96 = arith.constant 0 : index
    %c0_97 = arith.constant 0 : index
    %c0_98 = arith.constant 0 : index
    %c0_99 = arith.constant 0 : index
    %65 = vector.load %arg2[%c0_96, %c0_97, %c0_98, %c0_99] : memref<2x14x14x8xf32, #tpu.memory_space<vmem>>, vector<2x14x14x8xf32>
    %c0_100 = arith.constant 0 : index
    %c2_101 = arith.constant 2 : index
    %c2_102 = arith.constant 2 : index
    %c0_103 = arith.constant 0 : index
    %66 = vector.load %arg8[%c0_100, %c2_101, %c2_102, %c0_103] : memref<2x18x18x8xf32, #tpu.memory_space<vmem>>, vector<2x14x14x8xf32>
    tpu.vector_store %arg8[%c0_100, %c2_101, %c2_102, %c0_103], %65 {strides = array<i32>} : memref<2x18x18x8xf32, #tpu.memory_space<vmem>>, vector<2x14x14x8xf32>,
    %cst_104 = arith.constant 0.000000e+00 : f32
    %67 = vector.broadcast %cst_104 : f32 to vector<128x8xf32>
    %c0_105 = arith.constant 0 : index
    %c0_106 = arith.constant 0 : index
    %c0_107 = arith.constant 0 : index
    %c0_108 = arith.constant 0 : index
    %68 = vector.load %arg8[%c0_105, %c0_106, %c0_107, %c0_108] : memref<2x18x18x8xf32, #tpu.memory_space<vmem>>, vector<2x8x8x8xf32>
    %69 = vector.shape_cast %68 : vector<2x8x8x8xf32> to vector<128x8xf32>
    %c72 = arith.constant 72 : index
    %c0_109 = arith.constant 0 : index
    %70 = vector.load %arg4[%c72, %c0_109] : memref<416x32xf32, #tpu.memory_space<vmem>>, vector<8x8xf32>
    %cst_110 = arith.constant dense<0.000000e+00> : vector<128x8xf32>
    %71 = tpu.matmul %69, %70, %cst_110 {dimension_numbers = #tpu.dot_dimension_numbers<[1], [0], [0], [1], [0, 0, 1, 1], [], []>} : vector<128x8xf32>, vector<8x8xf32>, vector<128x8xf32> -> vector<128x8xf32>
    %72 = arith.addf %67, %71 : vector<128x8xf32>
    %c0_111 = arith.constant 0 : index
    %c0_112 = arith.constant 0 : index
    %c5 = arith.constant 5 : index
    %c0_113 = arith.constant 0 : index
    %73 = vector.load %arg8[%c0_111, %c0_112, %c5, %c0_113] : memref<2x18x18x8xf32, #tpu.memory_space<vmem>>, vector<2x8x8x8xf32>
    %74 = vector.shape_cast %73 : vector<2x8x8x8xf32> to vector<128x8xf32>
    %c80 = arith.constant 80 : index
    %c0_114 = arith.constant 0 : index
    %75 = vector.load %arg4[%c80, %c0_114] : memref<416x32xf32, #tpu.memory_space<vmem>>, vector<8x8xf32>
    %cst_115 = arith.constant dense<0.000000e+00> : vector<128x8xf32>
    %76 = tpu.matmul %74, %75, %cst_115 {dimension_numbers = #tpu.dot_dimension_numbers<[1], [0], [0], [1], [0, 0, 1, 1], [], []>} : vector<128x8xf32>, vector<8x8xf32>, vector<128x8xf32> -> vector<128x8xf32>
    %77 = arith.addf %72, %76 : vector<128x8xf32>
    %c0_116 = arith.constant 0 : index
    %c0_117 = arith.constant 0 : index
    %c10 = arith.constant 10 : index
    %c0_118 = arith.constant 0 : index
    %78 = vector.load %arg8[%c0_116, %c0_117, %c10, %c0_118] : memref<2x18x18x8xf32, #tpu.memory_space<vmem>>, vector<2x8x8x8xf32>
    %79 = vector.shape_cast %78 : vector<2x8x8x8xf32> to vector<128x8xf32>
    %c88 = arith.constant 88 : index
    %c0_119 = arith.constant 0 : index
    %80 = vector.load %arg4[%c88, %c0_119] : memref<416x32xf32, #tpu.memory_space<vmem>>, vector<8x8xf32>
    %cst_120 = arith.constant dense<0.000000e+00> : vector<128x8xf32>
    %81 = tpu.matmul %79, %80, %cst_120 {dimension_numbers = #tpu.dot_dimension_numbers<[1], [0], [0], [1], [0, 0, 1, 1], [], []>} : vector<128x8xf32>, vector<8x8xf32>, vector<128x8xf32> -> vector<128x8xf32>
    %82 = arith.addf %77, %81 : vector<128x8xf32>
    %c0_121 = arith.constant 0 : index
    %c5_122 = arith.constant 5 : index
    %c0_123 = arith.constant 0 : index
    %c0_124 = arith.constant 0 : index
    %83 = vector.load %arg8[%c0_121, %c5_122, %c0_123, %c0_124] : memref<2x18x18x8xf32, #tpu.memory_space<vmem>>, vector<2x8x8x8xf32>
    %84 = vector.shape_cast %83 : vector<2x8x8x8xf32> to vector<128x8xf32>
    %c96 = arith.constant 96 : index
    %c0_125 = arith.constant 0 : index
    %85 = vector.load %arg4[%c96, %c0_125] : memref<416x32xf32, #tpu.memory_space<vmem>>, vector<8x8xf32>
    %cst_126 = arith.constant dense<0.000000e+00> : vector<128x8xf32>
    %86 = tpu.matmul %84, %85, %cst_126 {dimension_numbers = #tpu.dot_dimension_numbers<[1], [0], [0], [1], [0, 0, 1, 1], [], []>} : vector<128x8xf32>, vector<8x8xf32>, vector<128x8xf32> -> vector<128x8xf32>
    %87 = arith.addf %82, %86 : vector<128x8xf32>
    %c0_127 = arith.constant 0 : index
    %c5_128 = arith.constant 5 : index
    %c5_129 = arith.constant 5 : index
    %c0_130 = arith.constant 0 : index
    %88 = vector.load %arg8[%c0_127, %c5_128, %c5_129, %c0_130] : memref<2x18x18x8xf32, #tpu.memory_space<vmem>>, vector<2x8x8x8xf32>
    %89 = vector.shape_cast %88 : vector<2x8x8x8xf32> to vector<128x8xf32>
    %c104 = arith.constant 104 : index
    %c0_131 = arith.constant 0 : index
    %90 = vector.load %arg4[%c104, %c0_131] : memref<416x32xf32, #tpu.memory_space<vmem>>, vector<8x8xf32>
    %cst_132 = arith.constant dense<0.000000e+00> : vector<128x8xf32>
    %91 = tpu.matmul %89, %90, %cst_132 {dimension_numbers = #tpu.dot_dimension_numbers<[1], [0], [0], [1], [0, 0, 1, 1], [], []>} : vector<128x8xf32>, vector<8x8xf32>, vector<128x8xf32> -> vector<128x8xf32>
    %92 = arith.addf %87, %91 : vector<128x8xf32>
    %c0_133 = arith.constant 0 : index
    %c5_134 = arith.constant 5 : index
    %c10_135 = arith.constant 10 : index
    %c0_136 = arith.constant 0 : index
    %93 = vector.load %arg8[%c0_133, %c5_134, %c10_135, %c0_136] : memref<2x18x18x8xf32, #tpu.memory_space<vmem>>, vector<2x8x8x8xf32>
    %94 = vector.shape_cast %93 : vector<2x8x8x8xf32> to vector<128x8xf32>
    %c112 = arith.constant 112 : index
    %c0_137 = arith.constant 0 : index
    %95 = vector.load %arg4[%c112, %c0_137] : memref<416x32xf32, #tpu.memory_space<vmem>>, vector<8x8xf32>
    %cst_138 = arith.constant dense<0.000000e+00> : vector<128x8xf32>
    %96 = tpu.matmul %94, %95, %cst_138 {dimension_numbers = #tpu.dot_dimension_numbers<[1], [0], [0], [1], [0, 0, 1, 1], [], []>} : vector<128x8xf32>, vector<8x8xf32>, vector<128x8xf32> -> vector<128x8xf32>
    %97 = arith.addf %92, %96 : vector<128x8xf32>
    %c0_139 = arith.constant 0 : index
    %c10_140 = arith.constant 10 : index
    %c0_141 = arith.constant 0 : index
    %c0_142 = arith.constant 0 : index
    %98 = vector.load %arg8[%c0_139, %c10_140, %c0_141, %c0_142] : memref<2x18x18x8xf32, #tpu.memory_space<vmem>>, vector<2x8x8x8xf32>
    %99 = vector.shape_cast %98 : vector<2x8x8x8xf32> to vector<128x8xf32>
    %c120 = arith.constant 120 : index
    %c0_143 = arith.constant 0 : index
    %100 = vector.load %arg4[%c120, %c0_143] : memref<416x32xf32, #tpu.memory_space<vmem>>, vector<8x8xf32>
    %cst_144 = arith.constant dense<0.000000e+00> : vector<128x8xf32>
    %101 = tpu.matmul %99, %100, %cst_144 {dimension_numbers = #tpu.dot_dimension_numbers<[1], [0], [0], [1], [0, 0, 1, 1], [], []>} : vector<128x8xf32>, vector<8x8xf32>, vector<128x8xf32> -> vector<128x8xf32>
    %102 = arith.addf %97, %101 : vector<128x8xf32>
    %c0_145 = arith.constant 0 : index
    %c10_146 = arith.constant 10 : index
    %c5_147 = arith.constant 5 : index
    %c0_148 = arith.constant 0 : index
    %103 = vector.load %arg8[%c0_145, %c10_146, %c5_147, %c0_148] : memref<2x18x18x8xf32, #tpu.memory_space<vmem>>, vector<2x8x8x8xf32>
    %104 = vector.shape_cast %103 : vector<2x8x8x8xf32> to vector<128x8xf32>
    %c128 = arith.constant 128 : index
    %c0_149 = arith.constant 0 : index
    %105 = vector.load %arg4[%c128, %c0_149] : memref<416x32xf32, #tpu.memory_space<vmem>>, vector<8x8xf32>
    %cst_150 = arith.constant dense<0.000000e+00> : vector<128x8xf32>
    %106 = tpu.matmul %104, %105, %cst_150 {dimension_numbers = #tpu.dot_dimension_numbers<[1], [0], [0], [1], [0, 0, 1, 1], [], []>} : vector<128x8xf32>, vector<8x8xf32>, vector<128x8xf32> -> vector<128x8xf32>
    %107 = arith.addf %102, %106 : vector<128x8xf32>
    %c0_151 = arith.constant 0 : index
    %c10_152 = arith.constant 10 : index
    %c10_153 = arith.constant 10 : index
    %c0_154 = arith.constant 0 : index
    %108 = vector.load %arg8[%c0_151, %c10_152, %c10_153, %c0_154] : memref<2x18x18x8xf32, #tpu.memory_space<vmem>>, vector<2x8x8x8xf32>
    %109 = vector.shape_cast %108 : vector<2x8x8x8xf32> to vector<128x8xf32>
    %c136 = arith.constant 136 : index
    %c0_155 = arith.constant 0 : index
    %110 = vector.load %arg4[%c136, %c0_155] : memref<416x32xf32, #tpu.memory_space<vmem>>, vector<8x8xf32>
    %cst_156 = arith.constant dense<0.000000e+00> : vector<128x8xf32>
    %111 = tpu.matmul %109, %110, %cst_156 {dimension_numbers = #tpu.dot_dimension_numbers<[1], [0], [0], [1], [0, 0, 1, 1], [], []>} : vector<128x8xf32>, vector<8x8xf32>, vector<128x8xf32> -> vector<128x8xf32>
    %112 = arith.addf %107, %111 : vector<128x8xf32>
    %c248 = arith.constant 248 : index
    %c0_157 = arith.constant 0 : index
    %113 = vector.load %arg4[%c248, %c0_157] : memref<416x32xf32, #tpu.memory_space<vmem>>, vector<1x8xf32>
    %114 = vector.broadcast %113 : vector<1x8xf32> to vector<128x8xf32>
    %115 = arith.addf %112, %114 : vector<128x8xf32>
    %cst_158 = arith.constant 0.000000e+00 : f32
    %116 = vector.broadcast %cst_158 : f32 to vector<128x8xf32>
    %117 = arith.maximumf %115, %116 : vector<128x8xf32>
    %cst_159 = arith.constant 0.000000e+00 : f32
    %118 = vector.broadcast %cst_159 : f32 to vector<2x2x18x8xf32>
    %cst_160 = arith.constant 0.000000e+00 : f32
    %119 = vector.broadcast %cst_160 : f32 to vector<2x14x2x8xf32>
    %c0_161 = arith.constant 0 : index
    %c0_162 = arith.constant 0 : index
    %c0_163 = arith.constant 0 : index
    %c0_164 = arith.constant 0 : index
    %120 = vector.load %arg9[%c0_161, %c0_162, %c0_163, %c0_164] : memref<2x18x18x8xf32, #tpu.memory_space<vmem>>, vector<2x2x18x8xf32>
    tpu.vector_store %arg9[%c0_161, %c0_162, %c0_163, %c0_164], %118 {strides = array<i32>} : memref<2x18x18x8xf32, #tpu.memory_space<vmem>>, vector<2x2x18x8xf32>,
    %c0_165 = arith.constant 0 : index
    %c16_166 = arith.constant 16 : index
    %c0_167 = arith.constant 0 : index
    %c0_168 = arith.constant 0 : index
    %121 = vector.load %arg9[%c0_165, %c16_166, %c0_167, %c0_168] : memref<2x18x18x8xf32, #tpu.memory_space<vmem>>, vector<2x2x18x8xf32>
    tpu.vector_store %arg9[%c0_165, %c16_166, %c0_167, %c0_168], %118 {strides = array<i32>} : memref<2x18x18x8xf32, #tpu.memory_space<vmem>>, vector<2x2x18x8xf32>,
    %c0_169 = arith.constant 0 : index
    %c2_170 = arith.constant 2 : index
    %c0_171 = arith.constant 0 : index
    %c0_172 = arith.constant 0 : index
    %122 = vector.load %arg9[%c0_169, %c2_170, %c0_171, %c0_172] : memref<2x18x18x8xf32, #tpu.memory_space<vmem>>, vector<2x14x2x8xf32>
    tpu.vector_store %arg9[%c0_169, %c2_170, %c0_171, %c0_172], %119 {strides = array<i32>} : memref<2x18x18x8xf32, #tpu.memory_space<vmem>>, vector<2x14x2x8xf32>,
    %c0_173 = arith.constant 0 : index
    %c2_174 = arith.constant 2 : index
    %c16_175 = arith.constant 16 : index
    %c0_176 = arith.constant 0 : index
    %123 = vector.load %arg9[%c0_173, %c2_174, %c16_175, %c0_176] : memref<2x18x18x8xf32, #tpu.memory_space<vmem>>, vector<2x14x2x8xf32>
    tpu.vector_store %arg9[%c0_173, %c2_174, %c16_175, %c0_176], %119 {strides = array<i32>} : memref<2x18x18x8xf32, #tpu.memory_space<vmem>>, vector<2x14x2x8xf32>,
    %c0_177 = arith.constant 0 : index
    %c0_178 = arith.constant 0 : index
    %c0_179 = arith.constant 0 : index
    %c0_180 = arith.constant 0 : index
    %124 = vector.load %arg3[%c0_177, %c0_178, %c0_179, %c0_180] : memref<2x14x14x8xf32, #tpu.memory_space<vmem>>, vector<2x14x14x8xf32>
    %c0_181 = arith.constant 0 : index
    %c2_182 = arith.constant 2 : index
    %c2_183 = arith.constant 2 : index
    %c0_184 = arith.constant 0 : index
    %125 = vector.load %arg9[%c0_181, %c2_182, %c2_183, %c0_184] : memref<2x18x18x8xf32, #tpu.memory_space<vmem>>, vector<2x14x14x8xf32>
    tpu.vector_store %arg9[%c0_181, %c2_182, %c2_183, %c0_184], %124 {strides = array<i32>} : memref<2x18x18x8xf32, #tpu.memory_space<vmem>>, vector<2x14x14x8xf32>,
    %cst_185 = arith.constant 0.000000e+00 : f32
    %126 = vector.broadcast %cst_185 : f32 to vector<32x8xf32>
    %c0_186 = arith.constant 0 : index
    %c0_187 = arith.constant 0 : index
    %c0_188 = arith.constant 0 : index
    %c0_189 = arith.constant 0 : index
    %127 = vector.load %arg9[%c0_186, %c0_187, %c0_188, %c0_189] : memref<2x18x18x8xf32, #tpu.memory_space<vmem>>, vector<2x4x4x8xf32>
    %128 = vector.shape_cast %127 : vector<2x4x4x8xf32> to vector<32x8xf32>
    %c144 = arith.constant 144 : index
    %c0_190 = arith.constant 0 : index
    %129 = vector.load %arg4[%c144, %c0_190] : memref<416x32xf32, #tpu.memory_space<vmem>>, vector<8x8xf32>
    %cst_191 = arith.constant dense<0.000000e+00> : vector<32x8xf32>
    %130 = tpu.matmul %128, %129, %cst_191 {dimension_numbers = #tpu.dot_dimension_numbers<[1], [0], [0], [1], [0, 0, 1, 1], [], []>} : vector<32x8xf32>, vector<8x8xf32>, vector<32x8xf32> -> vector<32x8xf32>
    %131 = arith.addf %126, %130 : vector<32x8xf32>
    %c0_192 = arith.constant 0 : index
    %c0_193 = arith.constant 0 : index
    %c7 = arith.constant 7 : index
    %c0_194 = arith.constant 0 : index
    %132 = vector.load %arg9[%c0_192, %c0_193, %c7, %c0_194] : memref<2x18x18x8xf32, #tpu.memory_space<vmem>>, vector<2x4x4x8xf32>
    %133 = vector.shape_cast %132 : vector<2x4x4x8xf32> to vector<32x8xf32>
    %c152 = arith.constant 152 : index
    %c0_195 = arith.constant 0 : index
    %134 = vector.load %arg4[%c152, %c0_195] : memref<416x32xf32, #tpu.memory_space<vmem>>, vector<8x8xf32>
    %cst_196 = arith.constant dense<0.000000e+00> : vector<32x8xf32>
    %135 = tpu.matmul %133, %134, %cst_196 {dimension_numbers = #tpu.dot_dimension_numbers<[1], [0], [0], [1], [0, 0, 1, 1], [], []>} : vector<32x8xf32>, vector<8x8xf32>, vector<32x8xf32> -> vector<32x8xf32>
    %136 = arith.addf %131, %135 : vector<32x8xf32>
    %c0_197 = arith.constant 0 : index
    %c0_198 = arith.constant 0 : index
    %c14 = arith.constant 14 : index
    %c0_199 = arith.constant 0 : index
    %137 = vector.load %arg9[%c0_197, %c0_198, %c14, %c0_199] : memref<2x18x18x8xf32, #tpu.memory_space<vmem>>, vector<2x4x4x8xf32>
    %138 = vector.shape_cast %137 : vector<2x4x4x8xf32> to vector<32x8xf32>
    %c160 = arith.constant 160 : index
    %c0_200 = arith.constant 0 : index
    %139 = vector.load %arg4[%c160, %c0_200] : memref<416x32xf32, #tpu.memory_space<vmem>>, vector<8x8xf32>
    %cst_201 = arith.constant dense<0.000000e+00> : vector<32x8xf32>
    %140 = tpu.matmul %138, %139, %cst_201 {dimension_numbers = #tpu.dot_dimension_numbers<[1], [0], [0], [1], [0, 0, 1, 1], [], []>} : vector<32x8xf32>, vector<8x8xf32>, vector<32x8xf32> -> vector<32x8xf32>
    %141 = arith.addf %136, %140 : vector<32x8xf32>
    %c0_202 = arith.constant 0 : index
    %c7_203 = arith.constant 7 : index
    %c0_204 = arith.constant 0 : index
    %c0_205 = arith.constant 0 : index
    %142 = vector.load %arg9[%c0_202, %c7_203, %c0_204, %c0_205] : memref<2x18x18x8xf32, #tpu.memory_space<vmem>>, vector<2x4x4x8xf32>
    %143 = vector.shape_cast %142 : vector<2x4x4x8xf32> to vector<32x8xf32>
    %c168 = arith.constant 168 : index
    %c0_206 = arith.constant 0 : index
    %144 = vector.load %arg4[%c168, %c0_206] : memref<416x32xf32, #tpu.memory_space<vmem>>, vector<8x8xf32>
    %cst_207 = arith.constant dense<0.000000e+00> : vector<32x8xf32>
    %145 = tpu.matmul %143, %144, %cst_207 {dimension_numbers = #tpu.dot_dimension_numbers<[1], [0], [0], [1], [0, 0, 1, 1], [], []>} : vector<32x8xf32>, vector<8x8xf32>, vector<32x8xf32> -> vector<32x8xf32>
    %146 = arith.addf %141, %145 : vector<32x8xf32>
    %c0_208 = arith.constant 0 : index
    %c7_209 = arith.constant 7 : index
    %c7_210 = arith.constant 7 : index
    %c0_211 = arith.constant 0 : index
    %147 = vector.load %arg9[%c0_208, %c7_209, %c7_210, %c0_211] : memref<2x18x18x8xf32, #tpu.memory_space<vmem>>, vector<2x4x4x8xf32>
    %148 = vector.shape_cast %147 : vector<2x4x4x8xf32> to vector<32x8xf32>
    %c176 = arith.constant 176 : index
    %c0_212 = arith.constant 0 : index
    %149 = vector.load %arg4[%c176, %c0_212] : memref<416x32xf32, #tpu.memory_space<vmem>>, vector<8x8xf32>
    %cst_213 = arith.constant dense<0.000000e+00> : vector<32x8xf32>
    %150 = tpu.matmul %148, %149, %cst_213 {dimension_numbers = #tpu.dot_dimension_numbers<[1], [0], [0], [1], [0, 0, 1, 1], [], []>} : vector<32x8xf32>, vector<8x8xf32>, vector<32x8xf32> -> vector<32x8xf32>
    %151 = arith.addf %146, %150 : vector<32x8xf32>
    %c0_214 = arith.constant 0 : index
    %c7_215 = arith.constant 7 : index
    %c14_216 = arith.constant 14 : index
    %c0_217 = arith.constant 0 : index
    %152 = vector.load %arg9[%c0_214, %c7_215, %c14_216, %c0_217] : memref<2x18x18x8xf32, #tpu.memory_space<vmem>>, vector<2x4x4x8xf32>
    %153 = vector.shape_cast %152 : vector<2x4x4x8xf32> to vector<32x8xf32>
    %c184 = arith.constant 184 : index
    %c0_218 = arith.constant 0 : index
    %154 = vector.load %arg4[%c184, %c0_218] : memref<416x32xf32, #tpu.memory_space<vmem>>, vector<8x8xf32>
    %cst_219 = arith.constant dense<0.000000e+00> : vector<32x8xf32>
    %155 = tpu.matmul %153, %154, %cst_219 {dimension_numbers = #tpu.dot_dimension_numbers<[1], [0], [0], [1], [0, 0, 1, 1], [], []>} : vector<32x8xf32>, vector<8x8xf32>, vector<32x8xf32> -> vector<32x8xf32>
    %156 = arith.addf %151, %155 : vector<32x8xf32>
    %c0_220 = arith.constant 0 : index
    %c14_221 = arith.constant 14 : index
    %c0_222 = arith.constant 0 : index
    %c0_223 = arith.constant 0 : index
    %157 = vector.load %arg9[%c0_220, %c14_221, %c0_222, %c0_223] : memref<2x18x18x8xf32, #tpu.memory_space<vmem>>, vector<2x4x4x8xf32>
    %158 = vector.shape_cast %157 : vector<2x4x4x8xf32> to vector<32x8xf32>
    %c192 = arith.constant 192 : index
    %c0_224 = arith.constant 0 : index
    %159 = vector.load %arg4[%c192, %c0_224] : memref<416x32xf32, #tpu.memory_space<vmem>>, vector<8x8xf32>
    %cst_225 = arith.constant dense<0.000000e+00> : vector<32x8xf32>
    %160 = tpu.matmul %158, %159, %cst_225 {dimension_numbers = #tpu.dot_dimension_numbers<[1], [0], [0], [1], [0, 0, 1, 1], [], []>} : vector<32x8xf32>, vector<8x8xf32>, vector<32x8xf32> -> vector<32x8xf32>
    %161 = arith.addf %156, %160 : vector<32x8xf32>
    %c0_226 = arith.constant 0 : index
    %c14_227 = arith.constant 14 : index
    %c7_228 = arith.constant 7 : index
    %c0_229 = arith.constant 0 : index
    %162 = vector.load %arg9[%c0_226, %c14_227, %c7_228, %c0_229] : memref<2x18x18x8xf32, #tpu.memory_space<vmem>>, vector<2x4x4x8xf32>
    %163 = vector.shape_cast %162 : vector<2x4x4x8xf32> to vector<32x8xf32>
    %c200 = arith.constant 200 : index
    %c0_230 = arith.constant 0 : index
    %164 = vector.load %arg4[%c200, %c0_230] : memref<416x32xf32, #tpu.memory_space<vmem>>, vector<8x8xf32>
    %cst_231 = arith.constant dense<0.000000e+00> : vector<32x8xf32>
    %165 = tpu.matmul %163, %164, %cst_231 {dimension_numbers = #tpu.dot_dimension_numbers<[1], [0], [0], [1], [0, 0, 1, 1], [], []>} : vector<32x8xf32>, vector<8x8xf32>, vector<32x8xf32> -> vector<32x8xf32>
    %166 = arith.addf %161, %165 : vector<32x8xf32>
    %c0_232 = arith.constant 0 : index
    %c14_233 = arith.constant 14 : index
    %c14_234 = arith.constant 14 : index
    %c0_235 = arith.constant 0 : index
    %167 = vector.load %arg9[%c0_232, %c14_233, %c14_234, %c0_235] : memref<2x18x18x8xf32, #tpu.memory_space<vmem>>, vector<2x4x4x8xf32>
    %168 = vector.shape_cast %167 : vector<2x4x4x8xf32> to vector<32x8xf32>
    %c208 = arith.constant 208 : index
    %c0_236 = arith.constant 0 : index
    %169 = vector.load %arg4[%c208, %c0_236] : memref<416x32xf32, #tpu.memory_space<vmem>>, vector<8x8xf32>
    %cst_237 = arith.constant dense<0.000000e+00> : vector<32x8xf32>
    %170 = tpu.matmul %168, %169, %cst_237 {dimension_numbers = #tpu.dot_dimension_numbers<[1], [0], [0], [1], [0, 0, 1, 1], [], []>} : vector<32x8xf32>, vector<8x8xf32>, vector<32x8xf32> -> vector<32x8xf32>
    %171 = arith.addf %166, %170 : vector<32x8xf32>
    %c256 = arith.constant 256 : index
    %c0_238 = arith.constant 0 : index
    %172 = vector.load %arg4[%c256, %c0_238] : memref<416x32xf32, #tpu.memory_space<vmem>>, vector<1x8xf32>
    %173 = vector.broadcast %172 : vector<1x8xf32> to vector<32x8xf32>
    %174 = arith.addf %171, %173 : vector<32x8xf32>
    %cst_239 = arith.constant 0.000000e+00 : f32
    %175 = vector.broadcast %cst_239 : f32 to vector<32x8xf32>
    %176 = arith.maximumf %174, %175 : vector<32x8xf32>
    %c0_240 = arith.constant 0 : index
    %c0_241 = arith.constant 0 : index
    %177 = vector.load %arg5[%c0_240, %c0_241] : memref<26x128xf32, #tpu.memory_space<vmem>>, vector<2x128xf32>
    %178 = arith.addf %58, %117 : vector<128x8xf32>
    %cst_242 = arith.constant dense<0.000000e+00> : vector<2x8xf32>
    %179 = tpu.matmul %177, %178, %cst_242 {dimension_numbers = #tpu.dot_dimension_numbers<[1], [0], [0], [1], [0, 0, 1, 1], [], []>} : vector<2x128xf32>, vector<128x8xf32>, vector<2x8xf32> -> vector<2x8xf32>
    %cst_243 = arith.constant dense<0xFF800000> : vector<2xf32>
    %180 = vector.multi_reduction <maximumf>, %179, %cst_243 [1] : vector<2x8xf32> to vector<2xf32>
    %181 = vector.shape_cast %180 : vector<2xf32> to vector<2x1xf32>
    %182 = vector.broadcast %181 : vector<2x1xf32> to vector<2x8xf32>
    %183 = arith.subf %179, %182 : vector<2x8xf32>
    %184 = math.exp %183 : vector<2x8xf32>
    %cst_244 = arith.constant dense<0.000000e+00> : vector<2xf32>
    %185 = vector.multi_reduction <add>, %184, %cst_244 [1] : vector<2x8xf32> to vector<2xf32>
    %186 = vector.shape_cast %185 : vector<2xf32> to vector<2x1xf32>
    %187 = tpu.reciprocal %186 {approx = true} : vector<2x1xf32> -> vector<2x1xf32>
    %188 = vector.broadcast %187 : vector<2x1xf32> to vector<2x8xf32>
    %189 = arith.mulf %184, %188 : vector<2x8xf32>
    %c264 = arith.constant 264 : index
    %c0_245 = arith.constant 0 : index
    %190 = vector.load %arg4[%c264, %c0_245] : memref<416x32xf32, #tpu.memory_space<vmem>>, vector<1x8xf32>
    %c216 = arith.constant 216 : index
    %c0_246 = arith.constant 0 : index
    %191 = vector.load %arg4[%c216, %c0_246] : memref<416x32xf32, #tpu.memory_space<vmem>>, vector<8x8xf32>
    %cst_247 = arith.constant dense<0.000000e+00> : vector<2x8xf32>
    %192 = tpu.matmul %189, %191, %cst_247 {dimension_numbers = #tpu.dot_dimension_numbers<[1], [0], [0], [1], [0, 0, 1, 1], [], []>} : vector<2x8xf32>, vector<8x8xf32>, vector<2x8xf32> -> vector<2x8xf32>
    %193 = vector.broadcast %190 : vector<1x8xf32> to vector<2x8xf32>
    %194 = arith.addf %192, %193 : vector<2x8xf32>
    %195 = arith.negf %194 : vector<2x8xf32>
    %196 = math.exp %195 : vector<2x8xf32>
    %cst_248 = arith.constant 1.000000e+00 : f32
    %197 = vector.broadcast %cst_248 : f32 to vector<2x8xf32>
    %198 = arith.addf %197, %196 : vector<2x8xf32>
    %199 = arith.divf %197, %198 : vector<2x8xf32>
    %200 = arith.negf %190 : vector<1x8xf32>
    %201 = math.exp %200 : vector<1x8xf32>
    %cst_249 = arith.constant 1.000000e+00 : f32
    %202 = vector.broadcast %cst_249 : f32 to vector<1x8xf32>
    %203 = arith.addf %202, %201 : vector<1x8xf32>
    %204 = arith.divf %202, %203 : vector<1x8xf32>
    %c288 = arith.constant 288 : index
    %c0_250 = arith.constant 0 : index
    %205 = vector.load %arg4[%c288, %c0_250] : memref<416x32xf32, #tpu.memory_space<vmem>>, vector<128x32xf32>
    %cst_251 = arith.constant dense<0.000000e+00> : vector<128x8xf32>
    %206 = tpu.matmul %205, %176, %cst_251 {dimension_numbers = #tpu.dot_dimension_numbers<[1], [0], [0], [1], [0, 0, 1, 1], [], []>} : vector<128x32xf32>, vector<32x8xf32>, vector<128x8xf32> -> vector<128x8xf32>
    %207 = arith.addf %117, %206 : vector<128x8xf32>
    %c224 = arith.constant 224 : index
    %c0_252 = arith.constant 0 : index
    %208 = vector.load %arg4[%c224, %c0_252] : memref<416x32xf32, #tpu.memory_space<vmem>>, vector<8x8xf32>
    %cst_253 = arith.constant dense<0.000000e+00> : vector<128x8xf32>
    %209 = tpu.matmul %207, %208, %cst_253 {dimension_numbers = #tpu.dot_dimension_numbers<[1], [0], [0], [1], [0, 0, 1, 1], [], []>} : vector<128x8xf32>, vector<8x8xf32>, vector<128x8xf32> -> vector<128x8xf32>
    %c8_254 = arith.constant 8 : index
    %c0_255 = arith.constant 0 : index
    %210 = vector.load %arg5[%c8_254, %c0_255] : memref<26x128xf32, #tpu.memory_space<vmem>>, vector<18x128xf32>
    %cst_256 = arith.constant dense<0.000000e+00> : vector<18x8xf32>
    %211 = tpu.matmul %210, %209, %cst_256 {dimension_numbers = #tpu.dot_dimension_numbers<[1], [0], [0], [1], [0, 0, 1, 1], [], []>} : vector<18x128xf32>, vector<128x8xf32>, vector<18x8xf32> -> vector<18x8xf32>
    %c272 = arith.constant 272 : index
    %c0_257 = arith.constant 0 : index
    %212 = vector.load %arg4[%c272, %c0_257] : memref<416x32xf32, #tpu.memory_space<vmem>>, vector<1x8xf32>
    %213 = vector.broadcast %212 : vector<1x8xf32> to vector<18x8xf32>
    %214 = arith.addf %211, %213 : vector<18x8xf32>
    %c232 = arith.constant 232 : index
    %c0_258 = arith.constant 0 : index
    %215 = vector.load %arg4[%c232, %c0_258] : memref<416x32xf32, #tpu.memory_space<vmem>>, vector<8x8xf32>
    %cst_259 = arith.constant dense<0.000000e+00> : vector<18x8xf32>
    %216 = tpu.matmul %214, %215, %cst_259 {dimension_numbers = #tpu.dot_dimension_numbers<[1], [0], [0], [1], [0, 0, 1, 1], [], []>} : vector<18x8xf32>, vector<8x8xf32>, vector<18x8xf32> -> vector<18x8xf32>
    %c280 = arith.constant 280 : index
    %c0_260 = arith.constant 0 : index
    %217 = vector.load %arg4[%c280, %c0_260] : memref<416x32xf32, #tpu.memory_space<vmem>>, vector<1x8xf32>
    %218 = vector.broadcast %217 : vector<1x8xf32> to vector<18x8xf32>
    %219 = arith.addf %216, %218 : vector<18x8xf32>
    %220 = vector.shape_cast %219 : vector<18x8xf32> to vector<2x9x8xf32>
    %221 = tpu.iota {dimensions = array<i32: 1>} : vector<2x9x8xi32>
    %c4_i32 = arith.constant 4 : i32
    %222 = vector.broadcast %c4_i32 : i32 to vector<2x9x8xi32>
    %223 = arith.cmpi eq, %221, %222 : vector<2x9x8xi32>
    %224 = vector.shape_cast %199 : vector<2x8xf32> to vector<2x1x8xf32>
    %225 = vector.shape_cast %204 : vector<1x8xf32> to vector<1x1x8xf32>
    %226 = vector.shape_cast %224 : vector<2x1x8xf32> to vector<2x1x8xf32>
    %227 = vector.broadcast %226 : vector<2x1x8xf32> to vector<2x9x8xf32>
    %228 = vector.shape_cast %225 : vector<1x1x8xf32> to vector<1x1x8xf32>
    %229 = vector.broadcast %228 : vector<1x1x8xf32> to vector<2x9x8xf32>
    %230 = arith.select %223, %227, %229 : vector<2x9x8xi1>, vector<2x9x8xf32>
    %231 = arith.addf %220, %230 : vector<2x9x8xf32>
    %232 = arith.negf %231 : vector<2x9x8xf32>
    %233 = math.exp %232 : vector<2x9x8xf32>
    %cst_261 = arith.constant 1.000000e+00 : f32
    %234 = vector.broadcast %cst_261 : f32 to vector<2x9x8xf32>
    %235 = arith.addf %234, %233 : vector<2x9x8xf32>
    %236 = arith.divf %234, %235 : vector<2x9x8xf32>
    %c0_262 = arith.constant 0 : index
    %c0_263 = arith.constant 0 : index
    %c0_264 = arith.constant 0 : index
    %237 = vector.load %arg6[%c0_262, %c0_263, %c0_264] : memref<2x9x8xf32, #tpu.memory_space<vmem>>, vector<2x9x8xf32>
    tpu.vector_store %arg6[%c0_262, %c0_263, %c0_264], %236 {strides = array<i32>} : memref<2x9x8xf32, #tpu.memory_space<vmem>>, vector<2x9x8xf32>,
    return
  }
  func.func @transform_0(%arg0: i32) -> (i32, i32, i32, i32) {
    %c0_i32 = arith.constant 0 : i32
    %c0_i32_0 = arith.constant 0 : i32
    %c0_i32_1 = arith.constant 0 : i32
    %c0_i32_2 = arith.constant 0 : i32
    return %arg0, %c0_i32, %c0_i32_0, %c0_i32_1 : i32, i32, i32, i32
  }
  func.func @transform_1(%arg0: i32) -> (i32, i32, i32, i32) {
    %c0_i32 = arith.constant 0 : i32
    %c0_i32_0 = arith.constant 0 : i32
    %c0_i32_1 = arith.constant 0 : i32
    %c0_i32_2 = arith.constant 0 : i32
    return %arg0, %c0_i32, %c0_i32_0, %c0_i32_1 : i32, i32, i32, i32
  }
  func.func @transform_2(%arg0: i32) -> (i32, i32, i32, i32) {
    %c0_i32 = arith.constant 0 : i32
    %c0_i32_0 = arith.constant 0 : i32
    %c0_i32_1 = arith.constant 0 : i32
    %c0_i32_2 = arith.constant 0 : i32
    return %arg0, %c0_i32, %c0_i32_0, %c0_i32_1 : i32, i32, i32, i32
  }
  func.func @transform_3(%arg0: i32) -> (i32, i32) {
    %c0_i32 = arith.constant 0 : i32
    %c0_i32_0 = arith.constant 0 : i32
    %c0_i32_1 = arith.constant 0 : i32
    return %c0_i32, %c0_i32_0 : i32, i32
  }
  func.func @transform_4(%arg0: i32) -> (i32, i32) {
    %c0_i32 = arith.constant 0 : i32
    %c0_i32_0 = arith.constant 0 : i32
    %c0_i32_1 = arith.constant 0 : i32
    return %c0_i32, %c0_i32_0 : i32, i32
  }
  func.func @transform_5(%arg0: i32) -> (i32, i32, i32) {
    %c0_i32 = arith.constant 0 : i32
    %c0_i32_0 = arith.constant 0 : i32
    %c0_i32_1 = arith.constant 0 : i32
    return %arg0, %c0_i32, %c0_i32_0 : i32, i32, i32
  }
}

</mosaic_0001>

<llo_original>
// kernel: ffm_forward.1
$region0: #{ffm_forward.1}
  #allocation0 [shape = 'u32[]', space=smem, size = 0x4, offset = 0x4, fixed_abs, tag = 'smem constant byte address 0x4 - core index']
  #allocation1 [shape = 'u32[72,128]{1,0:T(1,128)}', space=vmem, size = 0x9000, scoped, tag = 'internal scratch']
  #allocation2 [shape = 'f32[2,14,14,8]{3,2,1,0:T(8,128)}', space=vmem, size = 0x38000, scoped, tag = 'scratch operand']
  #allocation3 [shape = 'f32[2,18,18,8]{3,2,1,0:T(8,128)}', space=vmem, size = 0x6c000, scoped, tag = 'scratch operand']
  #allocation4 [shape = 'f32[2,18,18,8]{3,2,1,0:T(8,128)}', space=vmem, size = 0x6c000, scoped, tag = 'scratch operand']
  %s0 = inlined_call_operand.vmem [shape: f32[2,10,10,8], index: 0, kind: input, shape index: {}]
  %s1 = inlined_call_operand.vmem [shape: f32[2,14,14,8], index: 1, kind: input, shape index: {}]
  %s2 = inlined_call_operand.vmem [shape: f32[2,14,14,8], index: 2, kind: input, shape index: {}]
  %s3 = inlined_call_operand.vmem [shape: f32[416,32], index: 3, kind: input, shape index: {}]
  %s4 = inlined_call_operand.vmem [shape: f32[26,128], index: 4, kind: input, shape index: {}]
  %s5 = inlined_call_operand.vmem [shape: f32[2,9,8], index: 5, kind: output, shape index: {}]
  %s6 = sld [smem:[#allocation0]]
  $region30: #{ffm_forward.1} parent=0
    _
  %s8 = ssub.s32 1, %s6
  %s9 = scalar_select 0, %s8, %s6
  // Predicated region
  $region2: #{ffm_forward.1} parent=0 // pred_check
    _
  $region3: #{ffm_forward.1} parent=0 // pred_check_branch
    %11 = sbr.rel (0) target = $region5
  $region4: #{ffm_forward.1} parent=0 // pred_region
    _
  $region5: #{ffm_forward.1} parent=0 // pred_fallthru
    _
  // Predicated region
  $region6: #{ffm_forward.1} parent=0 // pred_check
    _
  $region7: #{ffm_forward.1} parent=0 // pred_check_branch
    %13 = sbr.rel (0) target = $region9
  $region8: #{ffm_forward.1} parent=0 // pred_region
    _
  $region9: #{ffm_forward.1} parent=0 // pred_fallthru
    _
  // Predicated region
  $region10: #{ffm_forward.1} parent=0 // pred_check
    _
  $region11: #{ffm_forward.1} parent=0 // pred_check_branch
    %15 = sbr.rel (0) target = $region13
  $region12: #{ffm_forward.1} parent=0 // pred_region
    _
  $region13: #{ffm_forward.1} parent=0 // pred_fallthru
    _
  // Predicated region
  $region14: #{ffm_forward.1} parent=0 // pred_check
    _
  $region15: #{ffm_forward.1} parent=0 // pred_check_branch
    %17 = sbr.rel (0) target = $region17
  $region16: #{ffm_forward.1} parent=0 // pred_region
    _
  $region17: #{ffm_forward.1} parent=0 // pred_fallthru
    _
  // Predicated region
  $region18: #{ffm_forward.1} parent=0 // pred_check
    _
  $region19: #{ffm_forward.1} parent=0 // pred_check_branch
    %19 = sbr.rel (0) target = $region21
  $region20: #{ffm_forward.1} parent=0 // pred_region
    _
  $region21: #{ffm_forward.1} parent=0 // pred_fallthru
    _
  %vm20 = vcmask 64512
  %21 = vst.msk [vmem:[#allocation2] sm:$0xff] %vm20, 0.0
  %vm22 = vcmask 62464
  %23 = vst.msk [vmem:[#allocation2 + $0x8] sm:$0x3f] %vm22, 0.0
  %24 = vst.msk [vmem:[#allocation2 + $0x10] sm:$0xff] %vm20, 0.0
  %25 = vst.msk [vmem:[#allocation2 + $0x18] sm:$0x3f] %vm22, 0.0
  %26 = vst.msk [vmem:[#allocation2 + $0xe0] sm:$0xff] %vm20, 0.0
  %27 = vst.msk [vmem:[#allocation2 + $0xe8] sm:$0x3f] %vm22, 0.0
  %28 = vst.msk [vmem:[#allocation2 + $0xf0] sm:$0xff] %vm20, 0.0
  %29 = vst.msk [vmem:[#allocation2 + $0xf8] sm:$0x3f] %vm22, 0.0
  %s30 = scalar_lea.vmem [#allocation2], 192
  %31 = vst.msk [vmem:[%s30] sm:$0xff] %vm20, 0.0
  %32 = vst.msk [vmem:[%s30 + $0x8] sm:$0x3f] %vm22, 0.0
  %33 = vst.msk [vmem:[%s30 + $0x10] sm:$0xff] %vm20, 0.0
  %34 = vst.msk [vmem:[%s30 + $0x18] sm:$0x3f] %vm22, 0.0
  %35 = vst.msk [vmem:[%s30 + $0xe0] sm:$0xff] %vm20, 0.0
  %36 = vst.msk [vmem:[%s30 + $0xe8] sm:$0x3f] %vm22, 0.0
  %37 = vst.msk [vmem:[%s30 + $0xf0] sm:$0xff] %vm20, 0.0
  %38 = vst.msk [vmem:[%s30 + $0xf8] sm:$0x3f] %vm22, 0.0
  %s39 = scalar_lea.vmem [#allocation2], 32
  %vm40 = vcmask 58368
  %41 = vst.msk [vmem:[%s39] sm:$0x3] %vm40, 0.0
  %42 = vst.msk [vmem:[%s39 + $0x10] sm:$0x3] %vm40, 0.0
  %43 = vst.msk [vmem:[%s39 + $0x20] sm:$0x3] %vm40, 0.0
  %44 = vst.msk [vmem:[%s39 + $0x30] sm:$0x3] %vm40, 0.0
  %45 = vst.msk [vmem:[%s39 + $0x40] sm:$0x3] %vm40, 0.0
  %46 = vst.msk [vmem:[%s39 + $0x50] sm:$0x3] %vm40, 0.0
  %47 = vst.msk [vmem:[%s39 + $0x60] sm:$0x3] %vm40, 0.0
  %48 = vst.msk [vmem:[%s39 + $0x70] sm:$0x3] %vm40, 0.0
  %49 = vst.msk [vmem:[%s39 + $0x80] sm:$0x3] %vm40, 0.0
  %50 = vst.msk [vmem:[%s39 + $0x90] sm:$0x3] %vm40, 0.0
  %51 = vst.msk [vmem:[%s39 + $0xe0] sm:$0x3] %vm40, 0.0
  %52 = vst.msk [vmem:[%s39 + $0xf0] sm:$0x3] %vm40, 0.0
  %53 = vst.msk [vmem:[%s39 + $0x100] sm:$0x3] %vm40, 0.0
  %54 = vst.msk [vmem:[%s39 + $0x110] sm:$0x3] %vm40, 0.0
  %55 = vst.msk [vmem:[%s39 + $0x120] sm:$0x3] %vm40, 0.0
  %56 = vst.msk [vmem:[%s39 + $0x130] sm:$0x3] %vm40, 0.0
  %57 = vst.msk [vmem:[%s39 + $0x140] sm:$0x3] %vm40, 0.0
  %58 = vst.msk [vmem:[%s39 + $0x150] sm:$0x3] %vm40, 0.0
  %59 = vst.msk [vmem:[%s39 + $0x160] sm:$0x3] %vm40, 0.0
  %60 = vst.msk [vmem:[%s39 + $0x170] sm:$0x3] %vm40, 0.0
  %61 = vst.msk [vmem:[%s39 + $0xc] sm:$0x3] %vm40, 0.0
  %62 = vst.msk [vmem:[%s39 + $0x1c] sm:$0x3] %vm40, 0.0
  %63 = vst.msk [vmem:[%s39 + $0x2c] sm:$0x3] %vm40, 0.0
  %64 = vst.msk [vmem:[%s39 + $0x3c] sm:$0x3] %vm40, 0.0
  %65 = vst.msk [vmem:[%s39 + $0x4c] sm:$0x3] %vm40, 0.0
  %66 = vst.msk [vmem:[%s39 + $0x5c] sm:$0x3] %vm40, 0.0
  %67 = vst.msk [vmem:[%s39 + $0x6c] sm:$0x3] %vm40, 0.0
  %68 = vst.msk [vmem:[%s39 + $0x7c] sm:$0x3] %vm40, 0.0
  %69 = vst.msk [vmem:[%s39 + $0x8c] sm:$0x3] %vm40, 0.0
  %70 = vst.msk [vmem:[%s39 + $0x9c] sm:$0x3] %vm40, 0.0
  %71 = vst.msk [vmem:[%s39 + $0xec] sm:$0x3] %vm40, 0.0
  %72 = vst.msk [vmem:[%s39 + $0xfc] sm:$0x3] %vm40, 0.0
  %73 = vst.msk [vmem:[%s39 + $0x10c] sm:$0x3] %vm40, 0.0
  %74 = vst.msk [vmem:[%s39 + $0x11c] sm:$0x3] %vm40, 0.0
  %75 = vst.msk [vmem:[%s39 + $0x12c] sm:$0x3] %vm40, 0.0
  %76 = vst.msk [vmem:[%s39 + $0x13c] sm:$0x3] %vm40, 0.0
  %77 = vst.msk [vmem:[%s39 + $0x14c] sm:$0x3] %vm40, 0.0
  %78 = vst.msk [vmem:[%s39 + $0x15c] sm:$0x3] %vm40, 0.0
  %79 = vst.msk [vmem:[%s39 + $0x16c] sm:$0x3] %vm40, 0.0
  %80 = vst.msk [vmem:[%s39 + $0x17c] sm:$0x3] %vm40, 0.0
  %v81 = vld [vmem:[%s0] sm:$0xff]
  %v82 = vld [vmem:[%s0 + $0x8] sm:$0x3]
  %v83 = vld [vmem:[%s0 + $0x10] sm:$0xff]
  %v84 = vld [vmem:[%s0 + $0x18] sm:$0x3]
  %v85 = vld [vmem:[%s0 + $0x20] sm:$0xff]
  %v86 = vld [vmem:[%s0 + $0x28] sm:$0x3]
  %v87 = vld [vmem:[%s0 + $0x30] sm:$0xff]
  %v88 = vld [vmem:[%s0 + $0x38] sm:$0x3]
  %v89 = vld [vmem:[%s0 + $0x40] sm:$0xff]
  %v90 = vld [vmem:[%s0 + $0x48] sm:$0x3]
  %v91 = vld [vmem:[%s0 + $0x50] sm:$0xff]
  %v92 = vld [vmem:[%s0 + $0x58] sm:$0x3]
  %v93 = vld [vmem:[%s0 + $0x60] sm:$0xff]
  %v94 = vld [vmem:[%s0 + $0x68] sm:$0x3]
  %v95 = vld [vmem:[%s0 + $0x70] sm:$0xff]
  %v96 = vld [vmem:[%s0 + $0x78] sm:$0x3]
  %v97 = vld [vmem:[%s0 + $0x80] sm:$0xff]
  %v98 = vld [vmem:[%s0 + $0x88] sm:$0x3]
  %v99 = vld [vmem:[%s0 + $0x90] sm:$0xff]
  %v100 = vld [vmem:[%s0 + $0x98] sm:$0x3]
  %v101 = vld [vmem:[%s0 + $0xa0] sm:$0xff]
  %v102 = vld [vmem:[%s0 + $0xa8] sm:$0x3]
  %v103 = vld [vmem:[%s0 + $0xb0] sm:$0xff]
  %v104 = vld [vmem:[%s0 + $0xb8] sm:$0x3]
  %v105 = vld [vmem:[%s0 + $0xc0] sm:$0xff]
  %v106 = vld [vmem:[%s0 + $0xc8] sm:$0x3]
  %v107 = vld [vmem:[%s0 + $0xd0] sm:$0xff]
  %v108 = vld [vmem:[%s0 + $0xd8] sm:$0x3]
  %v109 = vld [vmem:[%s0 + $0xe0] sm:$0xff]
  %v110 = vld [vmem:[%s0 + $0xe8] sm:$0x3]
  %v111 = vld [vmem:[%s0 + $0xf0] sm:$0xff]
  %v112 = vld [vmem:[%s0 + $0xf8] sm:$0x3]
  %v113 = vld [vmem:[%s0 + $0x100] sm:$0xff]
  %v114 = vld [vmem:[%s0 + $0x108] sm:$0x3]
  %v115 = vld [vmem:[%s0 + $0x110] sm:$0xff]
  %v116 = vld [vmem:[%s0 + $0x118] sm:$0x3]
  %v117 = vld [vmem:[%s0 + $0x120] sm:$0xff]
  %v118 = vld [vmem:[%s0 + $0x128] sm:$0x3]
  %v119 = vld [vmem:[%s0 + $0x130] sm:$0xff]
  %v120 = vld [vmem:[%s0 + $0x138] sm:$0x3]
  %121 = vst.msk [vmem:[%s39 + $0x2] sm:$0xff] %vm20, %v81
  %122 = vst.msk [vmem:[%s39 + $0xa] sm:$0x3] %vm40, %v82
  %123 = vst.msk [vmem:[%s39 + $0x12] sm:$0xff] %vm20, %v83
  %124 = vst.msk [vmem:[%s39 + $0x1a] sm:$0x3] %vm40, %v84
  %125 = vst.msk [vmem:[%s39 + $0x22] sm:$0xff] %vm20, %v85
  %126 = vst.msk [vmem:[%s39 + $0x2a] sm:$0x3] %vm40, %v86
  %127 = vst.msk [vmem:[%s39 + $0x32] sm:$0xff] %vm20, %v87
  %128 = vst.msk [vmem:[%s39 + $0x3a] sm:$0x3] %vm40, %v88
  %129 = vst.msk [vmem:[%s39 + $0x42] sm:$0xff] %vm20, %v89
  %130 = vst.msk [vmem:[%s39 + $0x4a] sm:$0x3] %vm40, %v90
  %131 = vst.msk [vmem:[%s39 + $0x52] sm:$0xff] %vm20, %v91
  %132 = vst.msk [vmem:[%s39 + $0x5a] sm:$0x3] %vm40, %v92
  %133 = vst.msk [vmem:[%s39 + $0x62] sm:$0xff] %vm20, %v93
  %134 = vst.msk [vmem:[%s39 + $0x6a] sm:$0x3] %vm40, %v94
  %135 = vst.msk [vmem:[%s39 + $0x72] sm:$0xff] %vm20, %v95
  %136 = vst.msk [vmem:[%s39 + $0x7a] sm:$0x3] %vm40, %v96
  %137 = vst.msk [vmem:[%s39 + $0x82] sm:$0xff] %vm20, %v97
  %138 = vst.msk [vmem:[%s39 + $0x8a] sm:$0x3] %vm40, %v98
  %139 = vst.msk [vmem:[%s39 + $0x92] sm:$0xff] %vm20, %v99
  %140 = vst.msk [vmem:[%s39 + $0x9a] sm:$0x3] %vm40, %v100
  %141 = vst.msk [vmem:[%s39 + $0xe2] sm:$0xff] %vm20, %v101
  %142 = vst.msk [vmem:[%s39 + $0xea] sm:$0x3] %vm40, %v102
  %143 = vst.msk [vmem:[%s39 + $0xf2] sm:$0xff] %vm20, %v103
  %144 = vst.msk [vmem:[%s39 + $0xfa] sm:$0x3] %vm40, %v104
  %145 = vst.msk [vmem:[%s39 + $0x102] sm:$0xff] %vm20, %v105
  %146 = vst.msk [vmem:[%s39 + $0x10a] sm:$0x3] %vm40, %v106
  %147 = vst.msk [vmem:[%s39 + $0x112] sm:$0xff] %vm20, %v107
  %148 = vst.msk [vmem:[%s39 + $0x11a] sm:$0x3] %vm40, %v108
  %149 = vst.msk [vmem:[%s39 + $0x122] sm:$0xff] %vm20, %v109
  %150 = vst.msk [vmem:[%s39 + $0x12a] sm:$0x3] %vm40, %v110
  %151 = vst.msk [vmem:[%s39 + $0x132] sm:$0xff] %vm20, %v111
  %152 = vst.msk [vmem:[%s39 + $0x13a] sm:$0x3] %vm40, %v112
  %153 = vst.msk [vmem:[%s39 + $0x142] sm:$0xff] %vm20, %v113
  %154 = vst.msk [vmem:[%s39 + $0x14a] sm:$0x3] %vm40, %v114
  %155 = vst.msk [vmem:[%s39 + $0x152] sm:$0xff] %vm20, %v115
  %156 = vst.msk [vmem:[%s39 + $0x15a] sm:$0x3] %vm40, %v116
  %157 = vst.msk [vmem:[%s39 + $0x162] sm:$0xff] %vm20, %v117
  %158 = vst.msk [vmem:[%s39 + $0x16a] sm:$0x3] %vm40, %v118
  %159 = vst.msk [vmem:[%s39 + $0x172] sm:$0xff] %vm20, %v119
  %160 = vst.msk [vmem:[%s39 + $0x17a] sm:$0x3] %vm40, %v120
  %v161 = vld [vmem:[#allocation2] sm:$0xff]
  %v162 = vld [vmem:[#allocation2 + $0x10] sm:$0xff]
  %v163 = vld [vmem:[#allocation2 + $0x20] sm:$0xff]
  %v164 = vld [vmem:[#allocation2 + $0x30] sm:$0xff]
  %v165 = vld [vmem:[#allocation2 + $0x40] sm:$0xff]
  %v166 = vld [vmem:[#allocation2 + $0x50] sm:$0xff]
  %v167 = vld [vmem:[#allocation2 + $0x60] sm:$0xff]
  %v168 = vld [vmem:[#allocation2 + $0x70] sm:$0xff]
  %v169 = vld [vmem:[#allocation2 + $0xe0] sm:$0xff]
  %v170 = vld [vmem:[#allocation2 + $0xf0] sm:$0xff]
  %v171 = vld [vmem:[#allocation2 + $0x100] sm:$0xff]
  %v172 = vld [vmem:[#allocation2 + $0x110] sm:$0xff]
  %v173 = vld [vmem:[#allocation2 + $0x120] sm:$0xff]
  %v174 = vld [vmem:[#allocation2 + $0x130] sm:$0xff]
  %v175 = vld [vmem:[#allocation2 + $0x140] sm:$0xff]
  %v176 = vld [vmem:[#allocation2 + $0x150] sm:$0xff]
  %v177 = vld [vmem:[%s3] sm:$0xff]
  %v178 = vld [vmem:[#allocation2 + $0x3] sm:$0xff]
  %v179 = vld [vmem:[#allocation2 + $0x13] sm:$0xff]
  %v180 = vld [vmem:[#allocation2 + $0x23] sm:$0xff]
  %v181 = vld [vmem:[#allocation2 + $0x33] sm:$0xff]
  %v182 = vld [vmem:[#allocation2 + $0x43] sm:$0xff]
  %v183 = vld [vmem:[#allocation2 + $0x53] sm:$0xff]
  %v184 = vld [vmem:[#allocation2 + $0x63] sm:$0xff]
  %v185 = vld [vmem:[#allocation2 + $0x73] sm:$0xff]
  %v186 = vld [vmem:[#allocation2 + $0xe3] sm:$0xff]
  %v187 = vld [vmem:[#allocation2 + $0xf3] sm:$0xff]
  %v188 = vld [vmem:[#allocation2 + $0x103] sm:$0xff]
  %v189 = vld [vmem:[#allocation2 + $0x113] sm:$0xff]
  %v190 = vld [vmem:[#allocation2 + $0x123] sm:$0xff]
  %v191 = vld [vmem:[#allocation2 + $0x133] sm:$0xff]
  %v192 = vld [vmem:[#allocation2 + $0x143] sm:$0xff]
  %v193 = vld [vmem:[#allocation2 + $0x153] sm:$0xff]
  %v194 = vld [vmem:[%s3 + $0x8] sm:$0xff]
  %v196 = vsel %vm20, %v178, 0
  %v199 = vsel %vm20, %v179, 0
  %v202 = vsel %vm20, %v180, 0
  %v205 = vsel %vm20, %v181, 0
  %v208 = vsel %vm20, %v182, 0
  %v211 = vsel %vm20, %v183, 0
  %v214 = vsel %vm20, %v184, 0
  %v217 = vsel %vm20, %v185, 0
  %v220 = vsel %vm20, %v186, 0
  %v223 = vsel %vm20, %v187, 0
  %v226 = vsel %vm20, %v188, 0
  %v229 = vsel %vm20, %v189, 0
  %v232 = vsel %vm20, %v190, 0
  %v235 = vsel %vm20, %v191, 0
  %v238 = vsel %vm20, %v192, 0
  %v241 = vsel %vm20, %v193, 0
  %243 = vmatpush.msra.mxu0 0.0
  %244 = vmatpush.msra.mxu0 0.0
  %245 = vmatpush.msra.mxu0 0.0
  %246 = vmatpush.msra.mxu0 0.0
  %247 = vmatpush.msra.mxu0 0.0
  %248 = vmatpush.msra.mxu0 0.0
  %249 = vmatpush.msra.mxu0 0.0
  %250 = vmatpush.msra.mxu0 0.0
  %251 = vmatpush.msra.mxu0 0.0
  %252 = vmatpush.msra.mxu0 0.0
  %253 = vmatpush.msra.mxu0 0.0
  %254 = vmatpush.msra.mxu0 0.0
  %255 = vmatpush.msra.mxu0 0.0
  %256 = vmatpush.msra.mxu0 0.0
  %257 = vmatpush.msra.mxu0 0.0
  %258 = vmatpush.msra.mxu0 %v194
  %259 = vmatmul.f32.gmra.mxu0 %v196
  %v260 = vpop.f32.mrf.mxu0
  %v261 = vadd.f32 0.0, %v260
  %262 = vmatmul.f32.gmra.mxu0 %v199
  %v263 = vpop.f32.mrf.mxu0
  %v264 = vadd.f32 0.0, %v263
  %265 = vmatmul.f32.gmra.mxu0 %v202
  %v266 = vpop.f32.mrf.mxu0
  %v267 = vadd.f32 0.0, %v266
  %268 = vmatmul.f32.gmra.mxu0 %v205
  %v269 = vpop.f32.mrf.mxu0
  %v270 = vadd.f32 0.0, %v269
  %271 = vmatmul.f32.gmra.mxu0 %v208
  %v272 = vpop.f32.mrf.mxu0
  %v273 = vadd.f32 0.0, %v272
  %274 = vmatmul.f32.gmra.mxu0 %v211
  %v275 = vpop.f32.mrf.mxu0
  %v276 = vadd.f32 0.0, %v275
  %277 = vmatmul.f32.gmra.mxu0 %v214
  %v278 = vpop.f32.mrf.mxu0
  %v279 = vadd.f32 0.0, %v278
  %280 = vmatmul.f32.gmra.mxu0 %v217
  %v281 = vpop.f32.mrf.mxu0
  %v282 = vadd.f32 0.0, %v281
  %283 = vmatmul.f32.gmra.mxu0 %v220
  %v284 = vpop.f32.mrf.mxu0
  %v285 = vadd.f32 0.0, %v284
  %286 = vmatmul.f32.gmra.mxu0 %v223
  %v287 = vpop.f32.mrf.mxu0
  %v288 = vadd.f32 0.0, %v287
  %289 = vmatmul.f32.gmra.mxu0 %v226
  %v290 = vpop.f32.mrf.mxu0
  %v291 = vadd.f32 0.0, %v290
  %292 = vmatmul.f32.gmra.mxu0 %v229
  %v293 = vpop.f32.mrf.mxu0
  %v294 = vadd.f32 0.0, %v293
  %295 = vmatmul.f32.gmra.mxu0 %v232
  %v296 = vpop.f32.mrf.mxu0
  %v297 = vadd.f32 0.0, %v296
  %298 = vmatmul.f32.gmra.mxu0 %v235
  %v299 = vpop.f32.mrf.mxu0
  %v300 = vadd.f32 0.0, %v299
  %301 = vmatmul.f32.gmra.mxu0 %v238
  %v302 = vpop.f32.mrf.mxu0
  %v303 = vadd.f32 0.0, %v302
  %304 = vmatmul.f32.gmra.mxu0 %v241
  %v305 = vpop.f32.mrf.mxu0
  %v306 = vadd.f32 0.0, %v305
  %307 = vdwg.mxu0
  %v309 = vsel %vm20, %v161, 0
  %v312 = vsel %vm20, %v162, 0
  %v315 = vsel %vm20, %v163, 0
  %v318 = vsel %vm20, %v164, 0
  %v321 = vsel %vm20, %v165, 0
  %v324 = vsel %vm20, %v166, 0
  %v327 = vsel %vm20, %v167, 0
  %v330 = vsel %vm20, %v168, 0
  %v333 = vsel %vm20, %v169, 0
  %v336 = vsel %vm20, %v170, 0
  %v339 = vsel %vm20, %v171, 0
  %v342 = vsel %vm20, %v172, 0
  %v345 = vsel %vm20, %v173, 0
  %v348 = vsel %vm20, %v174, 0
  %v351 = vsel %vm20, %v175, 0
  %v354 = vsel %vm20, %v176, 0
  %356 = vmatpush.msra.mxu0 0.0
  %357 = vmatpush.msra.mxu0 0.0
  %358 = vmatpush.msra.mxu0 0.0
  %359 = vmatpush.msra.mxu0 0.0
  %360 = vmatpush.msra.mxu0 0.0
  %361 = vmatpush.msra.mxu0 0.0
  %362 = vmatpush.msra.mxu0 0.0
  %363 = vmatpush.msra.mxu0 0.0
  %364 = vmatpush.msra.mxu0 0.0
  %365 = vmatpush.msra.mxu0 0.0
  %366 = vmatpush.msra.mxu0 0.0
  %367 = vmatpush.msra.mxu0 0.0
  %368 = vmatpush.msra.mxu0 0.0
  %369 = vmatpush.msra.mxu0 0.0
  %370 = vmatpush.msra.mxu0 0.0
  %371 = vmatpush.msra.mxu0 %v177
  %372 = vmatmul.f32.gmra.mxu0 %v309
  %v373 = vpop.f32.mrf.mxu0
  %v374 = vadd.f32 %v261, %v373
  %375 = vmatmul.f32.gmra.mxu0 %v312
  %v376 = vpop.f32.mrf.mxu0
  %v377 = vadd.f32 %v264, %v376
  %378 = vmatmul.f32.gmra.mxu0 %v315
  %v379 = vpop.f32.mrf.mxu0
  %v380 = vadd.f32 %v267, %v379
  %381 = vmatmul.f32.gmra.mxu0 %v318
  %v382 = vpop.f32.mrf.mxu0
  %v383 = vadd.f32 %v270, %v382
  %384 = vmatmul.f32.gmra.mxu0 %v321
  %v385 = vpop.f32.mrf.mxu0
  %v386 = vadd.f32 %v273, %v385
  %387 = vmatmul.f32.gmra.mxu0 %v324
  %v388 = vpop.f32.mrf.mxu0
  %v389 = vadd.f32 %v276, %v388
  %390 = vmatmul.f32.gmra.mxu0 %v327
  %v391 = vpop.f32.mrf.mxu0
  %v392 = vadd.f32 %v279, %v391
  %393 = vmatmul.f32.gmra.mxu0 %v330
  %v394 = vpop.f32.mrf.mxu0
  %v395 = vadd.f32 %v282, %v394
  %396 = vmatmul.f32.gmra.mxu0 %v333
  %v397 = vpop.f32.mrf.mxu0
  %v398 = vadd.f32 %v285, %v397
  %399 = vmatmul.f32.gmra.mxu0 %v336
  %v400 = vpop.f32.mrf.mxu0
  %v401 = vadd.f32 %v288, %v400
  %402 = vmatmul.f32.gmra.mxu0 %v339
  %v403 = vpop.f32.mrf.mxu0
  %v404 = vadd.f32 %v291, %v403
  %405 = vmatmul.f32.gmra.mxu0 %v342
  %v406 = vpop.f32.mrf.mxu0
  %v407 = vadd.f32 %v294, %v406
  %408 = vmatmul.f32.gmra.mxu0 %v345
  %v409 = vpop.f32.mrf.mxu0
  %v410 = vadd.f32 %v297, %v409
  %411 = vmatmul.f32.gmra.mxu0 %v348
  %v412 = vpop.f32.mrf.mxu0
  %v413 = vadd.f32 %v300, %v412
  %414 = vmatmul.f32.gmra.mxu0 %v351
  %v415 = vpop.f32.mrf.mxu0
  %v416 = vadd.f32 %v303, %v415
  %417 = vmatmul.f32.gmra.mxu0 %v354
  %v418 = vpop.f32.mrf.mxu0
  %v419 = vadd.f32 %v306, %v418
  %420 = vdwg.mxu0
  %v421 = vld [vmem:[#allocation2 + $0x6] sm:$0xff]
  %v422 = vld [vmem:[#allocation2 + $0x16] sm:$0xff]
  %v423 = vld [vmem:[#allocation2 + $0x26] sm:$0xff]
  %v424 = vld [vmem:[#allocation2 + $0x36] sm:$0xff]
  %v425 = vld [vmem:[#allocation2 + $0x46] sm:$0xff]
  %v426 = vld [vmem:[#allocation2 + $0x56] sm:$0xff]
  %v427 = vld [vmem:[#allocation2 + $0x66] sm:$0xff]
  %v428 = vld [vmem:[#allocation2 + $0x76] sm:$0xff]
  %v429 = vld [vmem:[#allocation2 + $0xe6] sm:$0xff]
  %v430 = vld [vmem:[#allocation2 + $0xf6] sm:$0xff]
  %v431 = vld [vmem:[#allocation2 + $0x106] sm:$0xff]
  %v432 = vld [vmem:[#allocation2 + $0x116] sm:$0xff]
  %v433 = vld [vmem:[#allocation2 + $0x126] sm:$0xff]
  %v434 = vld [vmem:[#allocation2 + $0x136] sm:$0xff]
  %v435 = vld [vmem:[#allocation2 + $0x146] sm:$0xff]
  %v436 = vld [vmem:[#allocation2 + $0x156] sm:$0xff]
  %v437 = vld [vmem:[%s3 + $0x10] sm:$0xff]
  %v439 = vsel %vm20, %v421, 0
  %v442 = vsel %vm20, %v422, 0
  %v445 = vsel %vm20, %v423, 0
  %v448 = vsel %vm20, %v424, 0
  %v451 = vsel %vm20, %v425, 0
  %v454 = vsel %vm20, %v426, 0
  %v457 = vsel %vm20, %v427, 0
  %v460 = vsel %vm20, %v428, 0
  %v463 = vsel %vm20, %v429, 0
  %v466 = vsel %vm20, %v430, 0
  %v469 = vsel %vm20, %v431, 0
  %v472 = vsel %vm20, %v432, 0
  %v475 = vsel %vm20, %v433, 0
  %v478 = vsel %vm20, %v434, 0
  %v481 = vsel %vm20, %v435, 0
  %v484 = vsel %vm20, %v436, 0
  %486 = vmatpush.msra.mxu0 0.0
  %487 = vmatpush.msra.mxu0 0.0
  %488 = vmatpush.msra.mxu0 0.0
  %489 = vmatpush.msra.mxu0 0.0
  %490 = vmatpush.msra.mxu0 0.0
  %491 = vmatpush.msra.mxu0 0.0
  %492 = vmatpush.msra.mxu0 0.0
  %493 = vmatpush.msra.mxu0 0.0
  %494 = vmatpush.msra.mxu0 0.0
  %495 = vmatpush.msra.mxu0 0.0
  %496 = vmatpush.msra.mxu0 0.0
  %497 = vmatpush.msra.mxu0 0.0
  %498 = vmatpush.msra.mxu0 0.0
  %499 = vmatpush.msra.mxu0 0.0
  %500 = vmatpush.msra.mxu0 0.0
  %501 = vmatpush.msra.mxu0 %v437
  %502 = vmatmul.f32.gmra.mxu0 %v439
  %v503 = vpop.f32.mrf.mxu0
  %v504 = vadd.f32 0.0, %v503
  %505 = vmatmul.f32.gmra.mxu0 %v442
  %v506 = vpop.f32.mrf.mxu0
  %v507 = vadd.f32 0.0, %v506
  %508 = vmatmul.f32.gmra.mxu0 %v445
  %v509 = vpop.f32.mrf.mxu0
  %v510 = vadd.f32 0.0, %v509
  %511 = vmatmul.f32.gmra.mxu0 %v448
  %v512 = vpop.f32.mrf.mxu0
  %v513 = vadd.f32 0.0, %v512
  %514 = vmatmul.f32.gmra.mxu0 %v451
  %v515 = vpop.f32.mrf.mxu0
  %v516 = vadd.f32 0.0, %v515
  %517 = vmatmul.f32.gmra.mxu0 %v454
  %v518 = vpop.f32.mrf.mxu0
  %v519 = vadd.f32 0.0, %v518
  %520 = vmatmul.f32.gmra.mxu0 %v457
  %v521 = vpop.f32.mrf.mxu0
  %v522 = vadd.f32 0.0, %v521
  %523 = vmatmul.f32.gmra.mxu0 %v460
  %v524 = vpop.f32.mrf.mxu0
  %v525 = vadd.f32 0.0, %v524
  %526 = vmatmul.f32.gmra.mxu0 %v463
  %v527 = vpop.f32.mrf.mxu0
  %v528 = vadd.f32 0.0, %v527
  %529 = vmatmul.f32.gmra.mxu0 %v466
  %v530 = vpop.f32.mrf.mxu0
  %v531 = vadd.f32 0.0, %v530
  %532 = vmatmul.f32.gmra.mxu0 %v469
  %v533 = vpop.f32.mrf.mxu0
  %v534 = vadd.f32 0.0, %v533
  %535 = vmatmul.f32.gmra.mxu0 %v472
  %v536 = vpop.f32.mrf.mxu0
  %v537 = vadd.f32 0.0, %v536
  %538 = vmatmul.f32.gmra.mxu0 %v475
  %v539 = vpop.f32.mrf.mxu0
  %v540 = vadd.f32 0.0, %v539
  %541 = vmatmul.f32.gmra.mxu0 %v478
  %v542 = vpop.f32.mrf.mxu0
  %v543 = vadd.f32 0.0, %v542
  %544 = vmatmul.f32.gmra.mxu0 %v481
  %v545 = vpop.f32.mrf.mxu0
  %v546 = vadd.f32 0.0, %v545
  %547 = vmatmul.f32.gmra.mxu0 %v484
  %v548 = vpop.f32.mrf.mxu0
  %v549 = vadd.f32 0.0, %v548
  %550 = vdwg.mxu0
  %v551 = vadd.f32 %v374, %v504
  %v552 = vadd.f32 %v377, %v507
  %v553 = vadd.f32 %v380, %v510
  %v554 = vadd.f32 %v383, %v513
  %v555 = vadd.f32 %v386, %v516
  %v556 = vadd.f32 %v389, %v519
  %v557 = vadd.f32 %v392, %v522
  %v558 = vadd.f32 %v395, %v525
  %v559 = vadd.f32 %v398, %v528
  %v560 = vadd.f32 %v401, %v531
  %v561 = vadd.f32 %v404, %v534
  %v562 = vadd.f32 %v407, %v537
  %v563 = vadd.f32 %v410, %v540
  %v564 = vadd.f32 %v413, %v543
  %v565 = vadd.f32 %v416, %v546
  %v566 = vadd.f32 %v419, %v549
  %s567 = scalar_lea.vmem [#allocation2], 48
  %v568 = vld [vmem:[%s567] sm:$0xff]
  %v569 = vld [vmem:[%s567 + $0x10] sm:$0xff]
  %v570 = vld [vmem:[%s567 + $0x20] sm:$0xff]
  %v571 = vld [vmem:[%s567 + $0x30] sm:$0xff]
  %v572 = vld [vmem:[%s567 + $0x40] sm:$0xff]
  %v573 = vld [vmem:[%s567 + $0x50] sm:$0xff]
  %v574 = vld [vmem:[%s567 + $0x60] sm:$0xff]
  %v575 = vld [vmem:[%s567 + $0x70] sm:$0xff]
  %v576 = vld [vmem:[%s567 + $0xe0] sm:$0xff]
  %v577 = vld [vmem:[%s567 + $0xf0] sm:$0xff]
  %v578 = vld [vmem:[%s567 + $0x100] sm:$0xff]
  %v579 = vld [vmem:[%s567 + $0x110] sm:$0xff]
  %v580 = vld [vmem:[%s567 + $0x120] sm:$0xff]
  %v581 = vld [vmem:[%s567 + $0x130] sm:$0xff]
  %v582 = vld [vmem:[%s567 + $0x140] sm:$0xff]
  %v583 = vld [vmem:[%s567 + $0x150] sm:$0xff]
  %v584 = vld [vmem:[%s3 + $0x18] sm:$0xff]
  %v586 = vsel %vm20, %v568, 0
  %v589 = vsel %vm20, %v569, 0
  %v592 = vsel %vm20, %v570, 0
  %v595 = vsel %vm20, %v571, 0
  %v598 = vsel %vm20, %v572, 0
  %v601 = vsel %vm20, %v573, 0
  %v604 = vsel %vm20, %v574, 0
  %v607 = vsel %vm20, %v575, 0
  %v610 = vsel %vm20, %v576, 0
  %v613 = vsel %vm20, %v577, 0
  %v616 = vsel %vm20, %v578, 0
  %v619 = vsel %vm20, %v579, 0
  %v622 = vsel %vm20, %v580, 0
  %v625 = vsel %vm20, %v581, 0
  %v628 = vsel %vm20, %v582, 0
  %v631 = vsel %vm20, %v583, 0
  %633 = vmatpush.msra.mxu0 0.0
  %634 = vmatpush.msra.mxu0 0.0
  %635 = vmatpush.msra.mxu0 0.0
  %636 = vmatpush.msra.mxu0 0.0
  %637 = vmatpush.msra.mxu0 0.0
  %638 = vmatpush.msra.mxu0 0.0
  %639 = vmatpush.msra.mxu0 0.0
  %640 = vmatpush.msra.mxu0 0.0
  %641 = vmatpush.msra.mxu0 0.0
  %642 = vmatpush.msra.mxu0 0.0
  %643 = vmatpush.msra.mxu0 0.0
  %644 = vmatpush.msra.mxu0 0.0
  %645 = vmatpush.msra.mxu0 0.0
  %646 = vmatpush.msra.mxu0 0.0
  %647 = vmatpush.msra.mxu0 0.0
  %648 = vmatpush.msra.mxu0 %v584
  %649 = vmatmul.f32.gmra.mxu0 %v586
  %v650 = vpop.f32.mrf.mxu0
  %v651 = vadd.f32 0.0, %v650
  %652 = vmatmul.f32.gmra.mxu0 %v589
  %v653 = vpop.f32.mrf.mxu0
  %v654 = vadd.f32 0.0, %v653
  %655 = vmatmul.f32.gmra.mxu0 %v592
  %v656 = vpop.f32.mrf.mxu0
  %v657 = vadd.f32 0.0, %v656
  %658 = vmatmul.f32.gmra.mxu0 %v595
  %v659 = vpop.f32.mrf.mxu0
  %v660 = vadd.f32 0.0, %v659
  %661 = vmatmul.f32.gmra.mxu0 %v598
  %v662 = vpop.f32.mrf.mxu0
  %v663 = vadd.f32 0.0, %v662
  %664 = vmatmul.f32.gmra.mxu0 %v601
  %v665 = vpop.f32.mrf.mxu0
  %v666 = vadd.f32 0.0, %v665
  %667 = vmatmul.f32.gmra.mxu0 %v604
  %v668 = vpop.f32.mrf.mxu0
  %v669 = vadd.f32 0.0, %v668
  %670 = vmatmul.f32.gmra.mxu0 %v607
  %v671 = vpop.f32.mrf.mxu0
  %v672 = vadd.f32 0.0, %v671
  %673 = vmatmul.f32.gmra.mxu0 %v610
  %v674 = vpop.f32.mrf.mxu0
  %v675 = vadd.f32 0.0, %v674
  %676 = vmatmul.f32.gmra.mxu0 %v613
  %v677 = vpop.f32.mrf.mxu0
  %v678 = vadd.f32 0.0, %v677
  %679 = vmatmul.f32.gmra.mxu0 %v616
  %v680 = vpop.f32.mrf.mxu0
  %v681 = vadd.f32 0.0, %v680
  %682 = vmatmul.f32.gmra.mxu0 %v619
  %v683 = vpop.f32.mrf.mxu0
  %v684 = vadd.f32 0.0, %v683
  %685 = vmatmul.f32.gmra.mxu0 %v622
  %v686 = vpop.f32.mrf.mxu0
  %v687 = vadd.f32 0.0, %v686
  %688 = vmatmul.f32.gmra.mxu0 %v625
  %v689 = vpop.f32.mrf.mxu0
  %v690 = vadd.f32 0.0, %v689
  %691 = vmatmul.f32.gmra.mxu0 %v628
  %v692 = vpop.f32.mrf.mxu0
  %v693 = vadd.f32 0.0, %v692
  %694 = vmatmul.f32.gmra.mxu0 %v631
  %v695 = vpop.f32.mrf.mxu0
  %v696 = vadd.f32 0.0, %v695
  %697 = vdwg.mxu0
  %v698 = vadd.f32 %v551, %v651
  %v699 = vadd.f32 %v552, %v654
  %v700 = vadd.f32 %v553, %v657
  %v701 = vadd.f32 %v554, %v660
  %v702 = vadd.f32 %v555, %v663
  %v703 = vadd.f32 %v556, %v666
  %v704 = vadd.f32 %v557, %v669
  %v705 = vadd.f32 %v558, %v672
  %v706 = vadd.f32 %v559, %v675
  %v707 = vadd.f32 %v560, %v678
  %v708 = vadd.f32 %v561, %v681
  %v709 = vadd.f32 %v562, %v684
  %v710 = vadd.f32 %v563, %v687
  %v711 = vadd.f32 %v564, %v690
  %v712 = vadd.f32 %v565, %v693
  %v713 = vadd.f32 %v566, %v696
  %v714 = vld [vmem:[%s567 + $0x3] sm:$0xff]
  %v715 = vld [vmem:[%s567 + $0x13] sm:$0xff]
  %v716 = vld [vmem:[%s567 + $0x23] sm:$0xff]
  %v717 = vld [vmem:[%s567 + $0x33] sm:$0xff]
  %v718 = vld [vmem:[%s567 + $0x43] sm:$0xff]
  %v719 = vld [vmem:[%s567 + $0x53] sm:$0xff]
  %v720 = vld [vmem:[%s567 + $0x63] sm:$0xff]
  %v721 = vld [vmem:[%s567 + $0x73] sm:$0xff]
  %v722 = vld [vmem:[%s567 + $0xe3] sm:$0xff]
  %v723 = vld [vmem:[%s567 + $0xf3] sm:$0xff]
  %v724 = vld [vmem:[%s567 + $0x103] sm:$0xff]
  %v725 = vld [vmem:[%s567 + $0x113] sm:$0xff]
  %v726 = vld [vmem:[%s567 + $0x123] sm:$0xff]
  %v727 = vld [vmem:[%s567 + $0x133] sm:$0xff]
  %v728 = vld [vmem:[%s567 + $0x143] sm:$0xff]
  %v729 = vld [vmem:[%s567 + $0x153] sm:$0xff]
  %v730 = vld [vmem:[%s3 + $0x20] sm:$0xff]
  %v732 = vsel %vm20, %v714, 0
  %v735 = vsel %vm20, %v715, 0
  %v738 = vsel %vm20, %v716, 0
  %v741 = vsel %vm20, %v717, 0
  %v744 = vsel %vm20, %v718, 0
  %v747 = vsel %vm20, %v719, 0
  %v750 = vsel %vm20, %v720, 0
  %v753 = vsel %vm20, %v721, 0
  %v756 = vsel %vm20, %v722, 0
  %v759 = vsel %vm20, %v723, 0
  %v762 = vsel %vm20, %v724, 0
  %v765 = vsel %vm20, %v725, 0
  %v768 = vsel %vm20, %v726, 0
  %v771 = vsel %vm20, %v727, 0
  %v774 = vsel %vm20, %v728, 0
  %v777 = vsel %vm20, %v729, 0
  %779 = vmatpush.msra.mxu0 0.0
  %780 = vmatpush.msra.mxu0 0.0
  %781 = vmatpush.msra.mxu0 0.0
  %782 = vmatpush.msra.mxu0 0.0
  %783 = vmatpush.msra.mxu0 0.0
  %784 = vmatpush.msra.mxu0 0.0
  %785 = vmatpush.msra.mxu0 0.0
  %786 = vmatpush.msra.mxu0 0.0
  %787 = vmatpush.msra.mxu0 0.0
  %788 = vmatpush.msra.mxu0 0.0
  %789 = vmatpush.msra.mxu0 0.0
  %790 = vmatpush.msra.mxu0 0.0
  %791 = vmatpush.msra.mxu0 0.0
  %792 = vmatpush.msra.mxu0 0.0
  %793 = vmatpush.msra.mxu0 0.0
  %794 = vmatpush.msra.mxu0 %v730
  %795 = vmatmul.f32.gmra.mxu0 %v732
  %v796 = vpop.f32.mrf.mxu0
  %v797 = vadd.f32 0.0, %v796
  %798 = vmatmul.f32.gmra.mxu0 %v735
  %v799 = vpop.f32.mrf.mxu0
  %v800 = vadd.f32 0.0, %v799
  %801 = vmatmul.f32.gmra.mxu0 %v738
  %v802 = vpop.f32.mrf.mxu0
  %v803 = vadd.f32 0.0, %v802
  %804 = vmatmul.f32.gmra.mxu0 %v741
  %v805 = vpop.f32.mrf.mxu0
  %v806 = vadd.f32 0.0, %v805
  %807 = vmatmul.f32.gmra.mxu0 %v744
  %v808 = vpop.f32.mrf.mxu0
  %v809 = vadd.f32 0.0, %v808
  %810 = vmatmul.f32.gmra.mxu0 %v747
  %v811 = vpop.f32.mrf.mxu0
  %v812 = vadd.f32 0.0, %v811
  %813 = vmatmul.f32.gmra.mxu0 %v750
  %v814 = vpop.f32.mrf.mxu0
  %v815 = vadd.f32 0.0, %v814
  %816 = vmatmul.f32.gmra.mxu0 %v753
  %v817 = vpop.f32.mrf.mxu0
  %v818 = vadd.f32 0.0, %v817
  %819 = vmatmul.f32.gmra.mxu0 %v756
  %v820 = vpop.f32.mrf.mxu0
  %v821 = vadd.f32 0.0, %v820
  %822 = vmatmul.f32.gmra.mxu0 %v759
  %v823 = vpop.f32.mrf.mxu0
  %v824 = vadd.f32 0.0, %v823
  %825 = vmatmul.f32.gmra.mxu0 %v762
  %v826 = vpop.f32.mrf.mxu0
  %v827 = vadd.f32 0.0, %v826
  %828 = vmatmul.f32.gmra.mxu0 %v765
  %v829 = vpop.f32.mrf.mxu0
  %v830 = vadd.f32 0.0, %v829
  %831 = vmatmul.f32.gmra.mxu0 %v768
  %v832 = vpop.f32.mrf.mxu0
  %v833 = vadd.f32 0.0, %v832
  %834 = vmatmul.f32.gmra.mxu0 %v771
  %v835 = vpop.f32.mrf.mxu0
  %v836 = vadd.f32 0.0, %v835
  %837 = vmatmul.f32.gmra.mxu0 %v774
  %v838 = vpop.f32.mrf.mxu0
  %v839 = vadd.f32 0.0, %v838
  %840 = vmatmul.f32.gmra.mxu0 %v777
  %v841 = vpop.f32.mrf.mxu0
  %v842 = vadd.f32 0.0, %v841
  %843 = vdwg.mxu0
  %v844 = vadd.f32 %v698, %v797
  %v845 = vadd.f32 %v699, %v800
  %v846 = vadd.f32 %v700, %v803
  %v847 = vadd.f32 %v701, %v806
  %v848 = vadd.f32 %v702, %v809
  %v849 = vadd.f32 %v703, %v812
  %v850 = vadd.f32 %v704, %v815
  %v851 = vadd.f32 %v705, %v818
  %v852 = vadd.f32 %v706, %v821
  %v853 = vadd.f32 %v707, %v824
  %v854 = vadd.f32 %v708, %v827
  %v855 = vadd.f32 %v709, %v830
  %v856 = vadd.f32 %v710, %v833
  %v857 = vadd.f32 %v711, %v836
  %v858 = vadd.f32 %v712, %v839
  %v859 = vadd.f32 %v713, %v842
  %v860 = vld [vmem:[%s567 + $0x6] sm:$0xff]
  %v861 = vld [vmem:[%s567 + $0x16] sm:$0xff]
  %v862 = vld [vmem:[%s567 + $0x26] sm:$0xff]
  %v863 = vld [vmem:[%s567 + $0x36] sm:$0xff]
  %v864 = vld [vmem:[%s567 + $0x46] sm:$0xff]
  %v865 = vld [vmem:[%s567 + $0x56] sm:$0xff]
  %v866 = vld [vmem:[%s567 + $0x66] sm:$0xff]
  %v867 = vld [vmem:[%s567 + $0x76] sm:$0xff]
  %v868 = vld [vmem:[%s567 + $0xe6] sm:$0xff]
  %v869 = vld [vmem:[%s567 + $0xf6] sm:$0xff]
  %v870 = vld [vmem:[%s567 + $0x106] sm:$0xff]
  %v871 = vld [vmem:[%s567 + $0x116] sm:$0xff]
  %v872 = vld [vmem:[%s567 + $0x126] sm:$0xff]
  %v873 = vld [vmem:[%s567 + $0x136] sm:$0xff]
  %v874 = vld [vmem:[%s567 + $0x146] sm:$0xff]
  %v875 = vld [vmem:[%s567 + $0x156] sm:$0xff]
  %v876 = vld [vmem:[%s3 + $0x28] sm:$0xff]
  %v878 = vsel %vm20, %v860, 0
  %v881 = vsel %vm20, %v861, 0
  %v884 = vsel %vm20, %v862, 0
  %v887 = vsel %vm20, %v863, 0
  %v890 = vsel %vm20, %v864, 0
  %v893 = vsel %vm20, %v865, 0
  %v896 = vsel %vm20, %v866, 0
  %v899 = vsel %vm20, %v867, 0
  %v902 = vsel %vm20, %v868, 0
  %v905 = vsel %vm20, %v869, 0
  %v908 = vsel %vm20, %v870, 0
  %v911 = vsel %vm20, %v871, 0
  %v914 = vsel %vm20, %v872, 0
  %v917 = vsel %vm20, %v873, 0
  %v920 = vsel %vm20, %v874, 0
  %v923 = vsel %vm20, %v875, 0
  %925 = vmatpush.msra.mxu0 0.0
  %926 = vmatpush.msra.mxu0 0.0
  %927 = vmatpush.msra.mxu0 0.0
  %928 = vmatpush.msra.mxu0 0.0
  %929 = vmatpush.msra.mxu0 0.0
  %930 = vmatpush.msra.mxu0 0.0
  %931 = vmatpush.msra.mxu0 0.0
  %932 = vmatpush.msra.mxu0 0.0
  %933 = vmatpush.msra.mxu0 0.0
  %934 = vmatpush.msra.mxu0 0.0
  %935 = vmatpush.msra.mxu0 0.0
  %936 = vmatpush.msra.mxu0 0.0
  %937 = vmatpush.msra.mxu0 0.0
  %938 = vmatpush.msra.mxu0 0.0
  %939 = vmatpush.msra.mxu0 0.0
  %940 = vmatpush.msra.mxu0 %v876
  %941 = vmatmul.f32.gmra.mxu0 %v878
  %v942 = vpop.f32.mrf.mxu0
  %v943 = vadd.f32 0.0, %v942
  %944 = vmatmul.f32.gmra.mxu0 %v881
  %v945 = vpop.f32.mrf.mxu0
  %v946 = vadd.f32 0.0, %v945
  %947 = vmatmul.f32.gmra.mxu0 %v884
  %v948 = vpop.f32.mrf.mxu0
  %v949 = vadd.f32 0.0, %v948
  %950 = vmatmul.f32.gmra.mxu0 %v887
  %v951 = vpop.f32.mrf.mxu0
  %v952 = vadd.f32 0.0, %v951
  %953 = vmatmul.f32.gmra.mxu0 %v890
  %v954 = vpop.f32.mrf.mxu0
  %v955 = vadd.f32 0.0, %v954
  %956 = vmatmul.f32.gmra.mxu0 %v893
  %v957 = vpop.f32.mrf.mxu0
  %v958 = vadd.f32 0.0, %v957
  %959 = vmatmul.f32.gmra.mxu0 %v896
  %v960 = vpop.f32.mrf.mxu0
  %v961 = vadd.f32 0.0, %v960
  %962 = vmatmul.f32.gmra.mxu0 %v899
  %v963 = vpop.f32.mrf.mxu0
  %v964 = vadd.f32 0.0, %v963
  %965 = vmatmul.f32.gmra.mxu0 %v902
  %v966 = vpop.f32.mrf.mxu0
  %v967 = vadd.f32 0.0, %v966
  %968 = vmatmul.f32.gmra.mxu0 %v905
  %v969 = vpop.f32.mrf.mxu0
  %v970 = vadd.f32 0.0, %v969
  %971 = vmatmul.f32.gmra.mxu0 %v908
  %v972 = vpop.f32.mrf.mxu0
  %v973 = vadd.f32 0.0, %v972
  %974 = vmatmul.f32.gmra.mxu0 %v911
  %v975 = vpop.f32.mrf.mxu0
  %v976 = vadd.f32 0.0, %v975
  %977 = vmatmul.f32.gmra.mxu0 %v914
  %v978 = vpop.f32.mrf.mxu0
  %v979 = vadd.f32 0.0, %v978
  %980 = vmatmul.f32.gmra.mxu0 %v917
  %v981 = vpop.f32.mrf.mxu0
  %v982 = vadd.f32 0.0, %v981
  %983 = vmatmul.f32.gmra.mxu0 %v920
  %v984 = vpop.f32.mrf.mxu0
  %v985 = vadd.f32 0.0, %v984
  %986 = vmatmul.f32.gmra.mxu0 %v923
  %v987 = vpop.f32.mrf.mxu0
  %v988 = vadd.f32 0.0, %v987
  %989 = vdwg.mxu0
  %v990 = vadd.f32 %v844, %v943
  %v991 = vadd.f32 %v845, %v946
  %v992 = vadd.f32 %v846, %v949
  %v993 = vadd.f32 %v847, %v952
  %v994 = vadd.f32 %v848, %v955
  %v995 = vadd.f32 %v849, %v958
  %v996 = vadd.f32 %v850, %v961
  %v997 = vadd.f32 %v851, %v964
  %v998 = vadd.f32 %v852, %v967
  %v999 = vadd.f32 %v853, %v970
  %v1000 = vadd.f32 %v854, %v973
  %v1001 = vadd.f32 %v855, %v976
  %v1002 = vadd.f32 %v856, %v979
  %v1003 = vadd.f32 %v857, %v982
  %v1004 = vadd.f32 %v858, %v985
  %v1005 = vadd.f32 %v859, %v988
  %s1006 = scalar_lea.vmem [#allocation2], 96
  %v1007 = vld [vmem:[%s1006] sm:$0xff]
  %v1008 = vld [vmem:[%s1006 + $0x10] sm:$0xff]
  %v1009 = vld [vmem:[%s1006 + $0x20] sm:$0xff]
  %v1010 = vld [vmem:[%s1006 + $0x30] sm:$0xff]
  %v1011 = vld [vmem:[%s1006 + $0x40] sm:$0xff]
  %v1012 = vld [vmem:[%s1006 + $0x50] sm:$0xff]
  %v1013 = vld [vmem:[%s1006 + $0x60] sm:$0xff]
  %v1014 = vld [vmem:[%s1006 + $0x70] sm:$0xff]
  %v1015 = vld [vmem:[%s1006 + $0xe0] sm:$0xff]
  %v1016 = vld [vmem:[%s1006 + $0xf0] sm:$0xff]
  %v1017 = vld [vmem:[%s1006 + $0x100] sm:$0xff]
  %v1018 = vld [vmem:[%s1006 + $0x110] sm:$0xff]
  %v1019 = vld [vmem:[%s1006 + $0x120] sm:$0xff]
  %v1020 = vld [vmem:[%s1006 + $0x130] sm:$0xff]
  %v1021 = vld [vmem:[%s1006 + $0x140] sm:$0xff]
  %v1022 = vld [vmem:[%s1006 + $0x150] sm:$0xff]
  %v1023 = vld [vmem:[%s3 + $0x30] sm:$0xff]
  %v1025 = vsel %vm20, %v1007, 0
  %v1028 = vsel %vm20, %v1008, 0
  %v1031 = vsel %vm20, %v1009, 0
  %v1034 = vsel %vm20, %v1010, 0
  %v1037 = vsel %vm20, %v1011, 0
  %v1040 = vsel %vm20, %v1012, 0
  %v1043 = vsel %vm20, %v1013, 0
  %v1046 = vsel %vm20, %v1014, 0
  %v1049 = vsel %vm20, %v1015, 0
  %v1052 = vsel %vm20, %v1016, 0
  %v1055 = vsel %vm20, %v1017, 0
  %v1058 = vsel %vm20, %v1018, 0
  %v1061 = vsel %vm20, %v1019, 0
  %v1064 = vsel %vm20, %v1020, 0
  %v1067 = vsel %vm20, %v1021, 0
  %v1070 = vsel %vm20, %v1022, 0
  %1072 = vmatpush.msra.mxu0 0.0
  %1073 = vmatpush.msra.mxu0 0.0
  %1074 = vmatpush.msra.mxu0 0.0
  %1075 = vmatpush.msra.mxu0 0.0
  %1076 = vmatpush.msra.mxu0 0.0
  %1077 = vmatpush.msra.mxu0 0.0
  %1078 = vmatpush.msra.mxu0 0.0
  %1079 = vmatpush.msra.mxu0 0.0
  %1080 = vmatpush.msra.mxu0 0.0
  %1081 = vmatpush.msra.mxu0 0.0
  %1082 = vmatpush.msra.mxu0 0.0
  %1083 = vmatpush.msra.mxu0 0.0
  %1084 = vmatpush.msra.mxu0 0.0
  %1085 = vmatpush.msra.mxu0 0.0
  %1086 = vmatpush.msra.mxu0 0.0
  %1087 = vmatpush.msra.mxu0 %v1023
  %1088 = vmatmul.f32.gmra.mxu0 %v1025
  %v1089 = vpop.f32.mrf.mxu0
  %v1090 = vadd.f32 0.0, %v1089
  %1091 = vmatmul.f32.gmra.mxu0 %v1028
  %v1092 = vpop.f32.mrf.mxu0
  %v1093 = vadd.f32 0.0, %v1092
  %1094 = vmatmul.f32.gmra.mxu0 %v1031
  %v1095 = vpop.f32.mrf.mxu0
  %v1096 = vadd.f32 0.0, %v1095
  %1097 = vmatmul.f32.gmra.mxu0 %v1034
  %v1098 = vpop.f32.mrf.mxu0
  %v1099 = vadd.f32 0.0, %v1098
  %1100 = vmatmul.f32.gmra.mxu0 %v1037
  %v1101 = vpop.f32.mrf.mxu0
  %v1102 = vadd.f32 0.0, %v1101
  %1103 = vmatmul.f32.gmra.mxu0 %v1040
  %v1104 = vpop.f32.mrf.mxu0
  %v1105 = vadd.f32 0.0, %v1104
  %1106 = vmatmul.f32.gmra.mxu0 %v1043
  %v1107 = vpop.f32.mrf.mxu0
  %v1108 = vadd.f32 0.0, %v1107
  %1109 = vmatmul.f32.gmra.mxu0 %v1046
  %v1110 = vpop.f32.mrf.mxu0
  %v1111 = vadd.f32 0.0, %v1110
  %1112 = vmatmul.f32.gmra.mxu0 %v1049
  %v1113 = vpop.f32.mrf.mxu0
  %v1114 = vadd.f32 0.0, %v1113
  %1115 = vmatmul.f32.gmra.mxu0 %v1052
  %v1116 = vpop.f32.mrf.mxu0
  %v1117 = vadd.f32 0.0, %v1116
  %1118 = vmatmul.f32.gmra.mxu0 %v1055
  %v1119 = vpop.f32.mrf.mxu0
  %v1120 = vadd.f32 0.0, %v1119
  %1121 = vmatmul.f32.gmra.mxu0 %v1058
  %v1122 = vpop.f32.mrf.mxu0
  %v1123 = vadd.f32 0.0, %v1122
  %1124 = vmatmul.f32.gmra.mxu0 %v1061
  %v1125 = vpop.f32.mrf.mxu0
  %v1126 = vadd.f32 0.0, %v1125
  %1127 = vmatmul.f32.gmra.mxu0 %v1064
  %v1128 = vpop.f32.mrf.mxu0
  %v1129 = vadd.f32 0.0, %v1128
  %1130 = vmatmul.f32.gmra.mxu0 %v1067
  %v1131 = vpop.f32.mrf.mxu0
  %v1132 = vadd.f32 0.0, %v1131
  %1133 = vmatmul.f32.gmra.mxu0 %v1070
  %v1134 = vpop.f32.mrf.mxu0
  %v1135 = vadd.f32 0.0, %v1134
  %1136 = vdwg.mxu0
  %v1137 = vadd.f32 %v990, %v1090
  %v1138 = vadd.f32 %v991, %v1093
  %v1139 = vadd.f32 %v992, %v1096
  %v1140 = vadd.f32 %v993, %v1099
  %v1141 = vadd.f32 %v994, %v1102
  %v1142 = vadd.f32 %v995, %v1105
  %v1143 = vadd.f32 %v996, %v1108
  %v1144 = vadd.f32 %v997, %v1111
  %v1145 = vadd.f32 %v998, %v1114
  %v1146 = vadd.f32 %v999, %v1117
  %v1147 = vadd.f32 %v1000, %v1120
  %v1148 = vadd.f32 %v1001, %v1123
  %v1149 = vadd.f32 %v1002, %v1126
  %v1150 = vadd.f32 %v1003, %v1129
  %v1151 = vadd.f32 %v1004, %v1132
  %v1152 = vadd.f32 %v1005, %v1135
  %v1153 = vld [vmem:[%s1006 + $0x3] sm:$0xff]
  %v1154 = vld [vmem:[%s1006 + $0x13] sm:$0xff]
  %v1155 = vld [vmem:[%s1006 + $0x23] sm:$0xff]
  %v1156 = vld [vmem:[%s1006 + $0x33] sm:$0xff]
  %v1157 = vld [vmem:[%s1006 + $0x43] sm:$0xff]
  %v1158 = vld [vmem:[%s1006 + $0x53] sm:$0xff]
  %v1159 = vld [vmem:[%s1006 + $0x63] sm:$0xff]
  %v1160 = vld [vmem:[%s1006 + $0x73] sm:$0xff]
  %v1161 = vld [vmem:[%s1006 + $0xe3] sm:$0xff]
  %v1162 = vld [vmem:[%s1006 + $0xf3] sm:$0xff]
  %v1163 = vld [vmem:[%s1006 + $0x103] sm:$0xff]
  %v1164 = vld [vmem:[%s1006 + $0x113] sm:$0xff]
  %v1165 = vld [vmem:[%s1006 + $0x123] sm:$0xff]
  %v1166 = vld [vmem:[%s1006 + $0x133] sm:$0xff]
  %v1167 = vld [vmem:[%s1006 + $0x143] sm:$0xff]
  %v1168 = vld [vmem:[%s1006 + $0x153] sm:$0xff]
  %v1169 = vld [vmem:[%s3 + $0x38] sm:$0xff]
  %v1171 = vsel %vm20, %v1153, 0
  %v1174 = vsel %vm20, %v1154, 0
  %v1177 = vsel %vm20, %v1155, 0
  %v1180 = vsel %vm20, %v1156, 0
  %v1183 = vsel %vm20, %v1157, 0
  %v1186 = vsel %vm20, %v1158, 0
  %v1189 = vsel %vm20, %v1159, 0
  %v1192 = vsel %vm20, %v1160, 0
  %v1195 = vsel %vm20, %v1161, 0
  %v1198 = vsel %vm20, %v1162, 0
  %v1201 = vsel %vm20, %v1163, 0
  %v1204 = vsel %vm20, %v1164, 0
  %v1207 = vsel %vm20, %v1165, 0
  %v1210 = vsel %vm20, %v1166, 0
  %v1213 = vsel %vm20, %v1167, 0
  %v1216 = vsel %vm20, %v1168, 0
  %1218 = vmatpush.msra.mxu0 0.0
  %1219 = vmatpush.msra.mxu0 0.0
  %1220 = vmatpush.msra.mxu0 0.0
  %1221 = vmatpush.msra.mxu0 0.0
  %1222 = vmatpush.msra.mxu0 0.0
  %1223 = vmatpush.msra.mxu0 0.0
  %1224 = vmatpush.msra.mxu0 0.0
  %1225 = vmatpush.msra.mxu0 0.0
  %1226 = vmatpush.msra.mxu0 0.0
  %1227 = vmatpush.msra.mxu0 0.0
  %1228 = vmatpush.msra.mxu0 0.0
  %1229 = vmatpush.msra.mxu0 0.0
  %1230 = vmatpush.msra.mxu0 0.0
  %1231 = vmatpush.msra.mxu0 0.0
  %1232 = vmatpush.msra.mxu0 0.0
  %1233 = vmatpush.msra.mxu0 %v1169
  %1234 = vmatmul.f32.gmra.mxu0 %v1171
  %v1235 = vpop.f32.mrf.mxu0
  %v1236 = vadd.f32 0.0, %v1235
  %1237 = vmatmul.f32.gmra.mxu0 %v1174
  %v1238 = vpop.f32.mrf.mxu0
  %v1239 = vadd.f32 0.0, %v1238
  %1240 = vmatmul.f32.gmra.mxu0 %v1177
  %v1241 = vpop.f32.mrf.mxu0
  %v1242 = vadd.f32 0.0, %v1241
  %1243 = vmatmul.f32.gmra.mxu0 %v1180
  %v1244 = vpop.f32.mrf.mxu0
  %v1245 = vadd.f32 0.0, %v1244
  %1246 = vmatmul.f32.gmra.mxu0 %v1183
  %v1247 = vpop.f32.mrf.mxu0
  %v1248 = vadd.f32 0.0, %v1247
  %1249 = vmatmul.f32.gmra.mxu0 %v1186
  %v1250 = vpop.f32.mrf.mxu0
  %v1251 = vadd.f32 0.0, %v1250
  %1252 = vmatmul.f32.gmra.mxu0 %v1189
  %v1253 = vpop.f32.mrf.mxu0
  %v1254 = vadd.f32 0.0, %v1253
  %1255 = vmatmul.f32.gmra.mxu0 %v1192
  %v1256 = vpop.f32.mrf.mxu0
  %v1257 = vadd.f32 0.0, %v1256
  %1258 = vmatmul.f32.gmra.mxu0 %v1195
  %v1259 = vpop.f32.mrf.mxu0
  %v1260 = vadd.f32 0.0, %v1259
  %1261 = vmatmul.f32.gmra.mxu0 %v1198
  %v1262 = vpop.f32.mrf.mxu0
  %v1263 = vadd.f32 0.0, %v1262
  %1264 = vmatmul.f32.gmra.mxu0 %v1201
  %v1265 = vpop.f32.mrf.mxu0
  %v1266 = vadd.f32 0.0, %v1265
  %1267 = vmatmul.f32.gmra.mxu0 %v1204
  %v1268 = vpop.f32.mrf.mxu0
  %v1269 = vadd.f32 0.0, %v1268
  %1270 = vmatmul.f32.gmra.mxu0 %v1207
  %v1271 = vpop.f32.mrf.mxu0
  %v1272 = vadd.f32 0.0, %v1271
  %1273 = vmatmul.f32.gmra.mxu0 %v1210
  %v1274 = vpop.f32.mrf.mxu0
  %v1275 = vadd.f32 0.0, %v1274
  %1276 = vmatmul.f32.gmra.mxu0 %v1213
  %v1277 = vpop.f32.mrf.mxu0
  %v1278 = vadd.f32 0.0, %v1277
  %1279 = vmatmul.f32.gmra.mxu0 %v1216
  %v1280 = vpop.f32.mrf.mxu0
  %v1281 = vadd.f32 0.0, %v1280
  %1282 = vdwg.mxu0
  %v1283 = vadd.f32 %v1137, %v1236
  %v1284 = vadd.f32 %v1138, %v1239
  %v1285 = vadd.f32 %v1139, %v1242
  %v1286 = vadd.f32 %v1140, %v1245
  %v1287 = vadd.f32 %v1141, %v1248
  %v1288 = vadd.f32 %v1142, %v1251
  %v1289 = vadd.f32 %v1143, %v1254
  %v1290 = vadd.f32 %v1144, %v1257
  %v1291 = vadd.f32 %v1145, %v1260
  %v1292 = vadd.f32 %v1146, %v1263
  %v1293 = vadd.f32 %v1147, %v1266
  %v1294 = vadd.f32 %v1148, %v1269
  %v1295 = vadd.f32 %v1149, %v1272
  %v1296 = vadd.f32 %v1150, %v1275
  %v1297 = vadd.f32 %v1151, %v1278
  %v1298 = vadd.f32 %v1152, %v1281
  %v1299 = vld [vmem:[%s1006 + $0x6] sm:$0xff]
  %v1300 = vld [vmem:[%s1006 + $0x16] sm:$0xff]
  %v1301 = vld [vmem:[%s1006 + $0x26] sm:$0xff]
  %v1302 = vld [vmem:[%s1006 + $0x36] sm:$0xff]
  %v1303 = vld [vmem:[%s1006 + $0x46] sm:$0xff]
  %v1304 = vld [vmem:[%s1006 + $0x56] sm:$0xff]
  %v1305 = vld [vmem:[%s1006 + $0x66] sm:$0xff]
  %v1306 = vld [vmem:[%s1006 + $0x76] sm:$0xff]
  %v1307 = vld [vmem:[%s1006 + $0xe6] sm:$0xff]
  %v1308 = vld [vmem:[%s1006 + $0xf6] sm:$0xff]
  %v1309 = vld [vmem:[%s1006 + $0x106] sm:$0xff]
  %v1310 = vld [vmem:[%s1006 + $0x116] sm:$0xff]
  %v1311 = vld [vmem:[%s1006 + $0x126] sm:$0xff]
  %v1312 = vld [vmem:[%s1006 + $0x136] sm:$0xff]
  %v1313 = vld [vmem:[%s1006 + $0x146] sm:$0xff]
  %v1314 = vld [vmem:[%s1006 + $0x156] sm:$0xff]
  %v1315 = vld [vmem:[%s3 + $0x40] sm:$0xff]
  %v1317 = vsel %vm20, %v1299, 0
  %v1320 = vsel %vm20, %v1300, 0
  %v1323 = vsel %vm20, %v1301, 0
  %v1326 = vsel %vm20, %v1302, 0
  %v1329 = vsel %vm20, %v1303, 0
  %v1332 = vsel %vm20, %v1304, 0
  %v1335 = vsel %vm20, %v1305, 0
  %v1338 = vsel %vm20, %v1306, 0
  %v1341 = vsel %vm20, %v1307, 0
  %v1344 = vsel %vm20, %v1308, 0
  %v1347 = vsel %vm20, %v1309, 0
  %v1350 = vsel %vm20, %v1310, 0
  %v1353 = vsel %vm20, %v1311, 0
  %v1356 = vsel %vm20, %v1312, 0
  %v1359 = vsel %vm20, %v1313, 0
  %v1362 = vsel %vm20, %v1314, 0
  %1364 = vmatpush.msra.mxu0 0.0
  %1365 = vmatpush.msra.mxu0 0.0
  %1366 = vmatpush.msra.mxu0 0.0
  %1367 = vmatpush.msra.mxu0 0.0
  %1368 = vmatpush.msra.mxu0 0.0
  %1369 = vmatpush.msra.mxu0 0.0
  %1370 = vmatpush.msra.mxu0 0.0
  %1371 = vmatpush.msra.mxu0 0.0
  %1372 = vmatpush.msra.mxu0 0.0
  %1373 = vmatpush.msra.mxu0 0.0
  %1374 = vmatpush.msra.mxu0 0.0
  %1375 = vmatpush.msra.mxu0 0.0
  %1376 = vmatpush.msra.mxu0 0.0
  %1377 = vmatpush.msra.mxu0 0.0
  %1378 = vmatpush.msra.mxu0 0.0
  %1379 = vmatpush.msra.mxu0 %v1315
  %1380 = vmatmul.f32.gmra.mxu0 %v1317
  %v1381 = vpop.f32.mrf.mxu0
  %v1382 = vadd.f32 0.0, %v1381
  %1383 = vmatmul.f32.gmra.mxu0 %v1320
  %v1384 = vpop.f32.mrf.mxu0
  %v1385 = vadd.f32 0.0, %v1384
  %1386 = vmatmul.f32.gmra.mxu0 %v1323
  %v1387 = vpop.f32.mrf.mxu0
  %v1388 = vadd.f32 0.0, %v1387
  %1389 = vmatmul.f32.gmra.mxu0 %v1326
  %v1390 = vpop.f32.mrf.mxu0
  %v1391 = vadd.f32 0.0, %v1390
  %1392 = vmatmul.f32.gmra.mxu0 %v1329
  %v1393 = vpop.f32.mrf.mxu0
  %v1394 = vadd.f32 0.0, %v1393
  %1395 = vmatmul.f32.gmra.mxu0 %v1332
  %v1396 = vpop.f32.mrf.mxu0
  %v1397 = vadd.f32 0.0, %v1396
  %1398 = vmatmul.f32.gmra.mxu0 %v1335
  %v1399 = vpop.f32.mrf.mxu0
  %v1400 = vadd.f32 0.0, %v1399
  %1401 = vmatmul.f32.gmra.mxu0 %v1338
  %v1402 = vpop.f32.mrf.mxu0
  %v1403 = vadd.f32 0.0, %v1402
  %1404 = vmatmul.f32.gmra.mxu0 %v1341
  %v1405 = vpop.f32.mrf.mxu0
  %v1406 = vadd.f32 0.0, %v1405
  %1407 = vmatmul.f32.gmra.mxu0 %v1344
  %v1408 = vpop.f32.mrf.mxu0
  %v1409 = vadd.f32 0.0, %v1408
  %1410 = vmatmul.f32.gmra.mxu0 %v1347
  %v1411 = vpop.f32.mrf.mxu0
  %v1412 = vadd.f32 0.0, %v1411
  %1413 = vmatmul.f32.gmra.mxu0 %v1350
  %v1414 = vpop.f32.mrf.mxu0
  %v1415 = vadd.f32 0.0, %v1414
  %1416 = vmatmul.f32.gmra.mxu0 %v1353
  %v1417 = vpop.f32.mrf.mxu0
  %v1418 = vadd.f32 0.0, %v1417
  %1419 = vmatmul.f32.gmra.mxu0 %v1356
  %v1420 = vpop.f32.mrf.mxu0
  %v1421 = vadd.f32 0.0, %v1420
  %1422 = vmatmul.f32.gmra.mxu0 %v1359
  %v1423 = vpop.f32.mrf.mxu0
  %v1424 = vadd.f32 0.0, %v1423
  %1425 = vmatmul.f32.gmra.mxu0 %v1362
  %v1426 = vpop.f32.mrf.mxu0
  %v1427 = vadd.f32 0.0, %v1426
  %1428 = vdwg.mxu0
  %v1429 = vadd.f32 %v1283, %v1382
  %v1430 = vadd.f32 %v1284, %v1385
  %v1431 = vadd.f32 %v1285, %v1388
  %v1432 = vadd.f32 %v1286, %v1391
  %v1433 = vadd.f32 %v1287, %v1394
  %v1434 = vadd.f32 %v1288, %v1397
  %v1435 = vadd.f32 %v1289, %v1400
  %v1436 = vadd.f32 %v1290, %v1403
  %v1437 = vadd.f32 %v1291, %v1406
  %v1438 = vadd.f32 %v1292, %v1409
  %v1439 = vadd.f32 %v1293, %v1412
  %v1440 = vadd.f32 %v1294, %v1415
  %v1441 = vadd.f32 %v1295, %v1418
  %v1442 = vadd.f32 %v1296, %v1421
  %v1443 = vadd.f32 %v1297, %v1424
  %v1444 = vadd.f32 %v1298, %v1427
  %v1445 = vld [vmem:[%s3 + $0xf0] sm:$0x1]
  %v1446 = vperm.slane %v1445, 0
  %v1447 = vadd.f32 %v1429, %v1446
  %v1448 = vadd.f32 %v1430, %v1446
  %v1449 = vadd.f32 %v1431, %v1446
  %v1450 = vadd.f32 %v1432, %v1446
  %v1451 = vadd.f32 %v1433, %v1446
  %v1452 = vadd.f32 %v1434, %v1446
  %v1453 = vadd.f32 %v1435, %v1446
  %v1454 = vadd.f32 %v1436, %v1446
  %v1455 = vadd.f32 %v1437, %v1446
  %v1456 = vadd.f32 %v1438, %v1446
  %v1457 = vadd.f32 %v1439, %v1446
  %v1458 = vadd.f32 %v1440, %v1446
  %v1459 = vadd.f32 %v1441, %v1446
  %v1460 = vadd.f32 %v1442, %v1446
  %v1461 = vadd.f32 %v1443, %v1446
  %v1462 = vadd.f32 %v1444, %v1446
  %v1463 = vmax.f32 %v1447, 0.0
  %v1464 = vmax.f32 %v1448, 0.0
  %v1465 = vmax.f32 %v1449, 0.0
  %v1466 = vmax.f32 %v1450, 0.0
  %v1467 = vmax.f32 %v1451, 0.0
  %v1468 = vmax.f32 %v1452, 0.0
  %v1469 = vmax.f32 %v1453, 0.0
  %v1470 = vmax.f32 %v1454, 0.0
  %v1471 = vmax.f32 %v1455, 0.0
  %v1472 = vmax.f32 %v1456, 0.0
  %v1473 = vmax.f32 %v1457, 0.0
  %v1474 = vmax.f32 %v1458, 0.0
  %v1475 = vmax.f32 %v1459, 0.0
  %v1476 = vmax.f32 %v1460, 0.0
  %v1477 = vmax.f32 %v1461, 0.0
  %v1478 = vmax.f32 %v1462, 0.0
  %1479 = vst.msk [vmem:[#allocation3] sm:$0xff] %vm20, 0.0
  %1480 = vst.msk [vmem:[#allocation3 + $0x8] sm:$0xff] %vm20, 0.0
  %1481 = vst.msk [vmem:[#allocation3 + $0x10] sm:$0x3] %vm40, 0.0
  %1482 = vst.msk [vmem:[#allocation3 + $0x18] sm:$0xff] %vm20, 0.0
  %1483 = vst.msk [vmem:[#allocation3 + $0x20] sm:$0xff] %vm20, 0.0
  %1484 = vst.msk [vmem:[#allocation3 + $0x28] sm:$0x3] %vm40, 0.0
  %1485 = vst.msk [vmem:[#allocation3 + $0x1b0] sm:$0xff] %vm20, 0.0
  %1486 = vst.msk [vmem:[#allocation3 + $0x1b8] sm:$0xff] %vm20, 0.0
  %1487 = vst.msk [vmem:[#allocation3 + $0x1c0] sm:$0x3] %vm40, 0.0
  %1488 = vst.msk [vmem:[#allocation3 + $0x1c8] sm:$0xff] %vm20, 0.0
  %1489 = vst.msk [vmem:[#allocation3 + $0x1d0] sm:$0xff] %vm20, 0.0
  %1490 = vst.msk [vmem:[#allocation3 + $0x1d8] sm:$0x3] %vm40, 0.0
  %s1491 = scalar_lea.vmem [#allocation3], 384
  %1492 = vst.msk [vmem:[%s1491] sm:$0xff] %vm20, 0.0
  %1493 = vst.msk [vmem:[%s1491 + $0x8] sm:$0xff] %vm20, 0.0
  %1494 = vst.msk [vmem:[%s1491 + $0x10] sm:$0x3] %vm40, 0.0
  %1495 = vst.msk [vmem:[%s1491 + $0x18] sm:$0xff] %vm20, 0.0
  %1496 = vst.msk [vmem:[%s1491 + $0x20] sm:$0xff] %vm20, 0.0
  %1497 = vst.msk [vmem:[%s1491 + $0x28] sm:$0x3] %vm40, 0.0
  %1498 = vst.msk [vmem:[%s1491 + $0x1b0] sm:$0xff] %vm20, 0.0
  %1499 = vst.msk [vmem:[%s1491 + $0x1b8] sm:$0xff] %vm20, 0.0
  %1500 = vst.msk [vmem:[%s1491 + $0x1c0] sm:$0x3] %vm40, 0.0
  %1501 = vst.msk [vmem:[%s1491 + $0x1c8] sm:$0xff] %vm20, 0.0
  %1502 = vst.msk [vmem:[%s1491 + $0x1d0] sm:$0xff] %vm20, 0.0
  %1503 = vst.msk [vmem:[%s1491 + $0x1d8] sm:$0x3] %vm40, 0.0
  %s1504 = scalar_lea.vmem [#allocation3], 48
  %1505 = vst.msk [vmem:[%s1504] sm:$0x3] %vm40, 0.0
  %1506 = vst.msk [vmem:[%s1504 + $0x18] sm:$0x3] %vm40, 0.0
  %1507 = vst.msk [vmem:[%s1504 + $0x30] sm:$0x3] %vm40, 0.0
  %1508 = vst.msk [vmem:[%s1504 + $0x48] sm:$0x3] %vm40, 0.0
  %1509 = vst.msk [vmem:[%s1504 + $0x60] sm:$0x3] %vm40, 0.0
  %1510 = vst.msk [vmem:[%s1504 + $0x78] sm:$0x3] %vm40, 0.0
  %1511 = vst.msk [vmem:[%s1504 + $0x90] sm:$0x3] %vm40, 0.0
  %1512 = vst.msk [vmem:[%s1504 + $0xa8] sm:$0x3] %vm40, 0.0
  %1513 = vst.msk [vmem:[%s1504 + $0xc0] sm:$0x3] %vm40, 0.0
  %1514 = vst.msk [vmem:[%s1504 + $0xd8] sm:$0x3] %vm40, 0.0
  %1515 = vst.msk [vmem:[%s1504 + $0xf0] sm:$0x3] %vm40, 0.0
  %1516 = vst.msk [vmem:[%s1504 + $0x108] sm:$0x3] %vm40, 0.0
  %1517 = vst.msk [vmem:[%s1504 + $0x120] sm:$0x3] %vm40, 0.0
  %1518 = vst.msk [vmem:[%s1504 + $0x138] sm:$0x3] %vm40, 0.0
  %1519 = vst.msk [vmem:[%s1504 + $0x1b0] sm:$0x3] %vm40, 0.0
  %1520 = vst.msk [vmem:[%s1504 + $0x1c8] sm:$0x3] %vm40, 0.0
  %1521 = vst.msk [vmem:[%s1504 + $0x1e0] sm:$0x3] %vm40, 0.0
  %1522 = vst.msk [vmem:[%s1504 + $0x1f8] sm:$0x3] %vm40, 0.0
  %1523 = vst.msk [vmem:[%s1504 + $0x210] sm:$0x3] %vm40, 0.0
  %1524 = vst.msk [vmem:[%s1504 + $0x228] sm:$0x3] %vm40, 0.0
  %1525 = vst.msk [vmem:[%s1504 + $0x240] sm:$0x3] %vm40, 0.0
  %1526 = vst.msk [vmem:[%s1504 + $0x258] sm:$0x3] %vm40, 0.0
  %1527 = vst.msk [vmem:[%s1504 + $0x270] sm:$0x3] %vm40, 0.0
  %1528 = vst.msk [vmem:[%s1504 + $0x288] sm:$0x3] %vm40, 0.0
  %1529 = vst.msk [vmem:[%s1504 + $0x2a0] sm:$0x3] %vm40, 0.0
  %1530 = vst.msk [vmem:[%s1504 + $0x2b8] sm:$0x3] %vm40, 0.0
  %1531 = vst.msk [vmem:[%s1504 + $0x2d0] sm:$0x3] %vm40, 0.0
  %1532 = vst.msk [vmem:[%s1504 + $0x2e8] sm:$0x3] %vm40, 0.0
  %1533 = vst.msk [vmem:[%s1504 + $0x10] sm:$0x3] %vm40, 0.0
  %1534 = vst.msk [vmem:[%s1504 + $0x28] sm:$0x3] %vm40, 0.0
  %1535 = vst.msk [vmem:[%s1504 + $0x40] sm:$0x3] %vm40, 0.0
  %1536 = vst.msk [vmem:[%s1504 + $0x58] sm:$0x3] %vm40, 0.0
  %1537 = vst.msk [vmem:[%s1504 + $0x70] sm:$0x3] %vm40, 0.0
  %1538 = vst.msk [vmem:[%s1504 + $0x88] sm:$0x3] %vm40, 0.0
  %1539 = vst.msk [vmem:[%s1504 + $0xa0] sm:$0x3] %vm40, 0.0
  %1540 = vst.msk [vmem:[%s1504 + $0xb8] sm:$0x3] %vm40, 0.0
  %1541 = vst.msk [vmem:[%s1504 + $0xd0] sm:$0x3] %vm40, 0.0
  %1542 = vst.msk [vmem:[%s1504 + $0xe8] sm:$0x3] %vm40, 0.0
  %1543 = vst.msk [vmem:[%s1504 + $0x100] sm:$0x3] %vm40, 0.0
  %1544 = vst.msk [vmem:[%s1504 + $0x118] sm:$0x3] %vm40, 0.0
  %1545 = vst.msk [vmem:[%s1504 + $0x130] sm:$0x3] %vm40, 0.0
  %1546 = vst.msk [vmem:[%s1504 + $0x148] sm:$0x3] %vm40, 0.0
  %1547 = vst.msk [vmem:[%s1504 + $0x1c0] sm:$0x3] %vm40, 0.0
  %1548 = vst.msk [vmem:[%s1504 + $0x1d8] sm:$0x3] %vm40, 0.0
  %1549 = vst.msk [vmem:[%s1504 + $0x1f0] sm:$0x3] %vm40, 0.0
  %1550 = vst.msk [vmem:[%s1504 + $0x208] sm:$0x3] %vm40, 0.0
  %1551 = vst.msk [vmem:[%s1504 + $0x220] sm:$0x3] %vm40, 0.0
  %1552 = vst.msk [vmem:[%s1504 + $0x238] sm:$0x3] %vm40, 0.0
  %1553 = vst.msk [vmem:[%s1504 + $0x250] sm:$0x3] %vm40, 0.0
  %1554 = vst.msk [vmem:[%s1504 + $0x268] sm:$0x3] %vm40, 0.0
  %1555 = vst.msk [vmem:[%s1504 + $0x280] sm:$0x3] %vm40, 0.0
  %1556 = vst.msk [vmem:[%s1504 + $0x298] sm:$0x3] %vm40, 0.0
  %1557 = vst.msk [vmem:[%s1504 + $0x2b0] sm:$0x3] %vm40, 0.0
  %1558 = vst.msk [vmem:[%s1504 + $0x2c8] sm:$0x3] %vm40, 0.0
  %1559 = vst.msk [vmem:[%s1504 + $0x2e0] sm:$0x3] %vm40, 0.0
  %1560 = vst.msk [vmem:[%s1504 + $0x2f8] sm:$0x3] %vm40, 0.0
  %v1561 = vld [vmem:[%s1] sm:$0xff]
  %v1562 = vld [vmem:[%s1 + $0x8] sm:$0x3f]
  %v1563 = vld [vmem:[%s1 + $0x10] sm:$0xff]
  %v1564 = vld [vmem:[%s1 + $0x18] sm:$0x3f]
  %v1565 = vld [vmem:[%s1 + $0x20] sm:$0xff]
  %v1566 = vld [vmem:[%s1 + $0x28] sm:$0x3f]
  %v1567 = vld [vmem:[%s1 + $0x30] sm:$0xff]
  %v1568 = vld [vmem:[%s1 + $0x38] sm:$0x3f]
  %v1569 = vld [vmem:[%s1 + $0x40] sm:$0xff]
  %v1570 = vld [vmem:[%s1 + $0x48] sm:$0x3f]
  %v1571 = vld [vmem:[%s1 + $0x50] sm:$0xff]
  %v1572 = vld [vmem:[%s1 + $0x58] sm:$0x3f]
  %v1573 = vld [vmem:[%s1 + $0x60] sm:$0xff]
  %v1574 = vld [vmem:[%s1 + $0x68] sm:$0x3f]
  %v1575 = vld [vmem:[%s1 + $0x70] sm:$0xff]
  %v1576 = vld [vmem:[%s1 + $0x78] sm:$0x3f]
  %v1577 = vld [vmem:[%s1 + $0x80] sm:$0xff]
  %v1578 = vld [vmem:[%s1 + $0x88] sm:$0x3f]
  %v1579 = vld [vmem:[%s1 + $0x90] sm:$0xff]
  %v1580 = vld [vmem:[%s1 + $0x98] sm:$0x3f]
  %v1581 = vld [vmem:[%s1 + $0xa0] sm:$0xff]
  %v1582 = vld [vmem:[%s1 + $0xa8] sm:$0x3f]
  %v1583 = vld [vmem:[%s1 + $0xb0] sm:$0xff]
  %v1584 = vld [vmem:[%s1 + $0xb8] sm:$0x3f]
  %v1585 = vld [vmem:[%s1 + $0xc0] sm:$0xff]
  %v1586 = vld [vmem:[%s1 + $0xc8] sm:$0x3f]
  %v1587 = vld [vmem:[%s1 + $0xd0] sm:$0xff]
  %v1588 = vld [vmem:[%s1 + $0xd8] sm:$0x3f]
  %v1589 = vld [vmem:[%s1 + $0xe0] sm:$0xff]
  %v1590 = vld [vmem:[%s1 + $0xe8] sm:$0x3f]
  %v1591 = vld [vmem:[%s1 + $0xf0] sm:$0xff]
  %v1592 = vld [vmem:[%s1 + $0xf8] sm:$0x3f]
  %v1593 = vld [vmem:[%s1 + $0x100] sm:$0xff]
  %v1594 = vld [vmem:[%s1 + $0x108] sm:$0x3f]
  %v1595 = vld [vmem:[%s1 + $0x110] sm:$0xff]
  %v1596 = vld [vmem:[%s1 + $0x118] sm:$0x3f]
  %v1597 = vld [vmem:[%s1 + $0x120] sm:$0xff]
  %v1598 = vld [vmem:[%s1 + $0x128] sm:$0x3f]
  %v1599 = vld [vmem:[%s1 + $0x130] sm:$0xff]
  %v1600 = vld [vmem:[%s1 + $0x138] sm:$0x3f]
  %v1601 = vld [vmem:[%s1 + $0x140] sm:$0xff]
  %v1602 = vld [vmem:[%s1 + $0x148] sm:$0x3f]
  %v1603 = vld [vmem:[%s1 + $0x150] sm:$0xff]
  %v1604 = vld [vmem:[%s1 + $0x158] sm:$0x3f]
  %v1605 = vld [vmem:[%s1 + $0x160] sm:$0xff]
  %v1606 = vld [vmem:[%s1 + $0x168] sm:$0x3f]
  %v1607 = vld [vmem:[%s1 + $0x170] sm:$0xff]
  %v1608 = vld [vmem:[%s1 + $0x178] sm:$0x3f]
  %v1609 = vld [vmem:[%s1 + $0x180] sm:$0xff]
  %v1610 = vld [vmem:[%s1 + $0x188] sm:$0x3f]
  %v1611 = vld [vmem:[%s1 + $0x190] sm:$0xff]
  %v1612 = vld [vmem:[%s1 + $0x198] sm:$0x3f]
  %v1613 = vld [vmem:[%s1 + $0x1a0] sm:$0xff]
  %v1614 = vld [vmem:[%s1 + $0x1a8] sm:$0x3f]
  %v1615 = vld [vmem:[%s1 + $0x1b0] sm:$0xff]
  %v1616 = vld [vmem:[%s1 + $0x1b8] sm:$0x3f]
  %1617 = vst.msk [vmem:[%s1504 + $0x2] sm:$0xff] %vm20, %v1561
  %1618 = vst.msk [vmem:[%s1504 + $0xa] sm:$0x3f] %vm22, %v1562
  %1619 = vst.msk [vmem:[%s1504 + $0x1a] sm:$0xff] %vm20, %v1563
  %1620 = vst.msk [vmem:[%s1504 + $0x22] sm:$0x3f] %vm22, %v1564
  %1621 = vst.msk [vmem:[%s1504 + $0x32] sm:$0xff] %vm20, %v1565
  %1622 = vst.msk [vmem:[%s1504 + $0x3a] sm:$0x3f] %vm22, %v1566
  %1623 = vst.msk [vmem:[%s1504 + $0x4a] sm:$0xff] %vm20, %v1567
  %1624 = vst.msk [vmem:[%s1504 + $0x52] sm:$0x3f] %vm22, %v1568
  %1625 = vst.msk [vmem:[%s1504 + $0x62] sm:$0xff] %vm20, %v1569
  %1626 = vst.msk [vmem:[%s1504 + $0x6a] sm:$0x3f] %vm22, %v1570
  %1627 = vst.msk [vmem:[%s1504 + $0x7a] sm:$0xff] %vm20, %v1571
  %1628 = vst.msk [vmem:[%s1504 + $0x82] sm:$0x3f] %vm22, %v1572
  %1629 = vst.msk [vmem:[%s1504 + $0x92] sm:$0xff] %vm20, %v1573
  %1630 = vst.msk [vmem:[%s1504 + $0x9a] sm:$0x3f] %vm22, %v1574
  %1631 = vst.msk [vmem:[%s1504 + $0xaa] sm:$0xff] %vm20, %v1575
  %1632 = vst.msk [vmem:[%s1504 + $0xb2] sm:$0x3f] %vm22, %v1576
  %1633 = vst.msk [vmem:[%s1504 + $0xc2] sm:$0xff] %vm20, %v1577
  %1634 = vst.msk [vmem:[%s1504 + $0xca] sm:$0x3f] %vm22, %v1578
  %1635 = vst.msk [vmem:[%s1504 + $0xda] sm:$0xff] %vm20, %v1579
  %1636 = vst.msk [vmem:[%s1504 + $0xe2] sm:$0x3f] %vm22, %v1580
  %1637 = vst.msk [vmem:[%s1504 + $0xf2] sm:$0xff] %vm20, %v1581
  %1638 = vst.msk [vmem:[%s1504 + $0xfa] sm:$0x3f] %vm22, %v1582
  %1639 = vst.msk [vmem:[%s1504 + $0x10a] sm:$0xff] %vm20, %v1583
  %1640 = vst.msk [vmem:[%s1504 + $0x112] sm:$0x3f] %vm22, %v1584
  %1641 = vst.msk [vmem:[%s1504 + $0x122] sm:$0xff] %vm20, %v1585
  %1642 = vst.msk [vmem:[%s1504 + $0x12a] sm:$0x3f] %vm22, %v1586
  %1643 = vst.msk [vmem:[%s1504 + $0x13a] sm:$0xff] %vm20, %v1587
  %1644 = vst.msk [vmem:[%s1504 + $0x142] sm:$0x3f] %vm22, %v1588
  %1645 = vst.msk [vmem:[%s1504 + $0x1b2] sm:$0xff] %vm20, %v1589
  %1646 = vst.msk [vmem:[%s1504 + $0x1ba] sm:$0x3f] %vm22, %v1590
  %1647 = vst.msk [vmem:[%s1504 + $0x1ca] sm:$0xff] %vm20, %v1591
  %1648 = vst.msk [vmem:[%s1504 + $0x1d2] sm:$0x3f] %vm22, %v1592
  %1649 = vst.msk [vmem:[%s1504 + $0x1e2] sm:$0xff] %vm20, %v1593
  %1650 = vst.msk [vmem:[%s1504 + $0x1ea] sm:$0x3f] %vm22, %v1594
  %1651 = vst.msk [vmem:[%s1504 + $0x1fa] sm:$0xff] %vm20, %v1595
  %1652 = vst.msk [vmem:[%s1504 + $0x202] sm:$0x3f] %vm22, %v1596
  %1653 = vst.msk [vmem:[%s1504 + $0x212] sm:$0xff] %vm20, %v1597
  %1654 = vst.msk [vmem:[%s1504 + $0x21a] sm:$0x3f] %vm22, %v1598
  %1655 = vst.msk [vmem:[%s1504 + $0x22a] sm:$0xff] %vm20, %v1599
  %1656 = vst.msk [vmem:[%s1504 + $0x232] sm:$0x3f] %vm22, %v1600
  %1657 = vst.msk [vmem:[%s1504 + $0x242] sm:$0xff] %vm20, %v1601
  %1658 = vst.msk [vmem:[%s1504 + $0x24a] sm:$0x3f] %vm22, %v1602
  %1659 = vst.msk [vmem:[%s1504 + $0x25a] sm:$0xff] %vm20, %v1603
  %1660 = vst.msk [vmem:[%s1504 + $0x262] sm:$0x3f] %vm22, %v1604
  %1661 = vst.msk [vmem:[%s1504 + $0x272] sm:$0xff] %vm20, %v1605
  %1662 = vst.msk [vmem:[%s1504 + $0x27a] sm:$0x3f] %vm22, %v1606
  %1663 = vst.msk [vmem:[%s1504 + $0x28a] sm:$0xff] %vm20, %v1607
  %1664 = vst.msk [vmem:[%s1504 + $0x292] sm:$0x3f] %vm22, %v1608
  %1665 = vst.msk [vmem:[%s1504 + $0x2a2] sm:$0xff] %vm20, %v1609
  %1666 = vst.msk [vmem:[%s1504 + $0x2aa] sm:$0x3f] %vm22, %v1610
  %1667 = vst.msk [vmem:[%s1504 + $0x2ba] sm:$0xff] %vm20, %v1611
  %1668 = vst.msk [vmem:[%s1504 + $0x2c2] sm:$0x3f] %vm22, %v1612
  %1669 = vst.msk [vmem:[%s1504 + $0x2d2] sm:$0xff] %vm20, %v1613
  %1670 = vst.msk [vmem:[%s1504 + $0x2da] sm:$0x3f] %vm22, %v1614
  %1671 = vst.msk [vmem:[%s1504 + $0x2ea] sm:$0xff] %vm20, %v1615
  %1672 = vst.msk [vmem:[%s1504 + $0x2f2] sm:$0x3f] %vm22, %v1616
  %v1673 = vld [vmem:[#allocation3] sm:$0xff]
  %v1674 = vld [vmem:[#allocation3 + $0x18] sm:$0xff]
  %v1675 = vld [vmem:[#allocation3 + $0x30] sm:$0xff]
  %v1676 = vld [vmem:[#allocation3 + $0x48] sm:$0xff]
  %v1677 = vld [vmem:[#allocation3 + $0x60] sm:$0xff]
  %v1678 = vld [vmem:[#allocation3 + $0x78] sm:$0xff]
  %v1679 = vld [vmem:[#allocation3 + $0x90] sm:$0xff]
  %v1680 = vld [vmem:[#allocation3 + $0xa8] sm:$0xff]
  %v1681 = vld [vmem:[#allocation3 + $0x1b0] sm:$0xff]
  %v1682 = vld [vmem:[#allocation3 + $0x1c8] sm:$0xff]
  %v1683 = vld [vmem:[#allocation3 + $0x1e0] sm:$0xff]
  %v1684 = vld [vmem:[#allocation3 + $0x1f8] sm:$0xff]
  %v1685 = vld [vmem:[#allocation3 + $0x210] sm:$0xff]
  %v1686 = vld [vmem:[#allocation3 + $0x228] sm:$0xff]
  %v1687 = vld [vmem:[#allocation3 + $0x240] sm:$0xff]
  %v1688 = vld [vmem:[#allocation3 + $0x258] sm:$0xff]
  %v1689 = vld [vmem:[%s3 + $0x48] sm:$0xff]
  %v1690 = vld [vmem:[#allocation3 + $0x5] sm:$0xff]
  %v1691 = vld [vmem:[#allocation3 + $0x1d] sm:$0xff]
  %v1692 = vld [vmem:[#allocation3 + $0x35] sm:$0xff]
  %v1693 = vld [vmem:[#allocation3 + $0x4d] sm:$0xff]
  %v1694 = vld [vmem:[#allocation3 + $0x65] sm:$0xff]
  %v1695 = vld [vmem:[#allocation3 + $0x7d] sm:$0xff]
  %v1696 = vld [vmem:[#allocation3 + $0x95] sm:$0xff]
  %v1697 = vld [vmem:[#allocation3 + $0xad] sm:$0xff]
  %v1698 = vld [vmem:[#allocation3 + $0x1b5] sm:$0xff]
  %v1699 = vld [vmem:[#allocation3 + $0x1cd] sm:$0xff]
  %v1700 = vld [vmem:[#allocation3 + $0x1e5] sm:$0xff]
  %v1701 = vld [vmem:[#allocation3 + $0x1fd] sm:$0xff]
  %v1702 = vld [vmem:[#allocation3 + $0x215] sm:$0xff]
  %v1703 = vld [vmem:[#allocation3 + $0x22d] sm:$0xff]
  %v1704 = vld [vmem:[#allocation3 + $0x245] sm:$0xff]
  %v1705 = vld [vmem:[#allocation3 + $0x25d] sm:$0xff]
  %v1706 = vld [vmem:[%s3 + $0x50] sm:$0xff]
  %v1708 = vsel %vm20, %v1690, 0
  %v1711 = vsel %vm20, %v1691, 0
  %v1714 = vsel %vm20, %v1692, 0
  %v1717 = vsel %vm20, %v1693, 0
  %v1720 = vsel %vm20, %v1694, 0
  %v1723 = vsel %vm20, %v1695, 0
  %v1726 = vsel %vm20, %v1696, 0
  %v1729 = vsel %vm20, %v1697, 0
  %v1732 = vsel %vm20, %v1698, 0
  %v1735 = vsel %vm20, %v1699, 0
  %v1738 = vsel %vm20, %v1700, 0
  %v1741 = vsel %vm20, %v1701, 0
  %v1744 = vsel %vm20, %v1702, 0
  %v1747 = vsel %vm20, %v1703, 0
  %v1750 = vsel %vm20, %v1704, 0
  %v1753 = vsel %vm20, %v1705, 0
  %1755 = vmatpush.msra.mxu0 0.0
  %1756 = vmatpush.msra.mxu0 0.0
  %1757 = vmatpush.msra.mxu0 0.0
  %1758 = vmatpush.msra.mxu0 0.0
  %1759 = vmatpush.msra.mxu0 0.0
  %1760 = vmatpush.msra.mxu0 0.0
  %1761 = vmatpush.msra.mxu0 0.0
  %1762 = vmatpush.msra.mxu0 0.0
  %1763 = vmatpush.msra.mxu0 0.0
  %1764 = vmatpush.msra.mxu0 0.0
  %1765 = vmatpush.msra.mxu0 0.0
  %1766 = vmatpush.msra.mxu0 0.0
  %1767 = vmatpush.msra.mxu0 0.0
  %1768 = vmatpush.msra.mxu0 0.0
  %1769 = vmatpush.msra.mxu0 0.0
  %1770 = vmatpush.msra.mxu0 %v1706
  %1771 = vmatmul.f32.gmra.mxu0 %v1708
  %v1772 = vpop.f32.mrf.mxu0
  %v1773 = vadd.f32 0.0, %v1772
  %1774 = vmatmul.f32.gmra.mxu0 %v1711
  %v1775 = vpop.f32.mrf.mxu0
  %v1776 = vadd.f32 0.0, %v1775
  %1777 = vmatmul.f32.gmra.mxu0 %v1714
  %v1778 = vpop.f32.mrf.mxu0
  %v1779 = vadd.f32 0.0, %v1778
  %1780 = vmatmul.f32.gmra.mxu0 %v1717
  %v1781 = vpop.f32.mrf.mxu0
  %v1782 = vadd.f32 0.0, %v1781
  %1783 = vmatmul.f32.gmra.mxu0 %v1720
  %v1784 = vpop.f32.mrf.mxu0
  %v1785 = vadd.f32 0.0, %v1784
  %1786 = vmatmul.f32.gmra.mxu0 %v1723
  %v1787 = vpop.f32.mrf.mxu0
  %v1788 = vadd.f32 0.0, %v1787
  %1789 = vmatmul.f32.gmra.mxu0 %v1726
  %v1790 = vpop.f32.mrf.mxu0
  %v1791 = vadd.f32 0.0, %v1790
  %1792 = vmatmul.f32.gmra.mxu0 %v1729
  %v1793 = vpop.f32.mrf.mxu0
  %v1794 = vadd.f32 0.0, %v1793
  %1795 = vmatmul.f32.gmra.mxu0 %v1732
  %v1796 = vpop.f32.mrf.mxu0
  %v1797 = vadd.f32 0.0, %v1796
  %1798 = vmatmul.f32.gmra.mxu0 %v1735
  %v1799 = vpop.f32.mrf.mxu0
  %v1800 = vadd.f32 0.0, %v1799
  %1801 = vmatmul.f32.gmra.mxu0 %v1738
  %v1802 = vpop.f32.mrf.mxu0
  %v1803 = vadd.f32 0.0, %v1802
  %1804 = vmatmul.f32.gmra.mxu0 %v1741
  %v1805 = vpop.f32.mrf.mxu0
  %v1806 = vadd.f32 0.0, %v1805
  %1807 = vmatmul.f32.gmra.mxu0 %v1744
  %v1808 = vpop.f32.mrf.mxu0
  %v1809 = vadd.f32 0.0, %v1808
  %1810 = vmatmul.f32.gmra.mxu0 %v1747
  %v1811 = vpop.f32.mrf.mxu0
  %v1812 = vadd.f32 0.0, %v1811
  %1813 = vmatmul.f32.gmra.mxu0 %v1750
  %v1814 = vpop.f32.mrf.mxu0
  %v1815 = vadd.f32 0.0, %v1814
  %1816 = vmatmul.f32.gmra.mxu0 %v1753
  %v1817 = vpop.f32.mrf.mxu0
  %v1818 = vadd.f32 0.0, %v1817
  %1819 = vdwg.mxu0
  %v1821 = vsel %vm20, %v1673, 0
  %v1824 = vsel %vm20, %v1674, 0
  %v1827 = vsel %vm20, %v1675, 0
  %v1830 = vsel %vm20, %v1676, 0
  %v1833 = vsel %vm20, %v1677, 0
  %v1836 = vsel %vm20, %v1678, 0
  %v1839 = vsel %vm20, %v1679, 0
  %v1842 = vsel %vm20, %v1680, 0
  %v1845 = vsel %vm20, %v1681, 0
  %v1848 = vsel %vm20, %v1682, 0
  %v1851 = vsel %vm20, %v1683, 0
  %v1854 = vsel %vm20, %v1684, 0
  %v1857 = vsel %vm20, %v1685, 0
  %v1860 = vsel %vm20, %v1686, 0
  %v1863 = vsel %vm20, %v1687, 0
  %v1866 = vsel %vm20, %v1688, 0
  %1868 = vmatpush.msra.mxu0 0.0
  %1869 = vmatpush.msra.mxu0 0.0
  %1870 = vmatpush.msra.mxu0 0.0
  %1871 = vmatpush.msra.mxu0 0.0
  %1872 = vmatpush.msra.mxu0 0.0
  %1873 = vmatpush.msra.mxu0 0.0
  %1874 = vmatpush.msra.mxu0 0.0
  %1875 = vmatpush.msra.mxu0 0.0
  %1876 = vmatpush.msra.mxu0 0.0
  %1877 = vmatpush.msra.mxu0 0.0
  %1878 = vmatpush.msra.mxu0 0.0
  %1879 = vmatpush.msra.mxu0 0.0
  %1880 = vmatpush.msra.mxu0 0.0
  %1881 = vmatpush.msra.mxu0 0.0
  %1882 = vmatpush.msra.mxu0 0.0
  %1883 = vmatpush.msra.mxu0 %v1689
  %1884 = vmatmul.f32.gmra.mxu0 %v1821
  %v1885 = vpop.f32.mrf.mxu0
  %v1886 = vadd.f32 %v1773, %v1885
  %1887 = vmatmul.f32.gmra.mxu0 %v1824
  %v1888 = vpop.f32.mrf.mxu0
  %v1889 = vadd.f32 %v1776, %v1888
  %1890 = vmatmul.f32.gmra.mxu0 %v1827
  %v1891 = vpop.f32.mrf.mxu0
  %v1892 = vadd.f32 %v1779, %v1891
  %1893 = vmatmul.f32.gmra.mxu0 %v1830
  %v1894 = vpop.f32.mrf.mxu0
  %v1895 = vadd.f32 %v1782, %v1894
  %1896 = vmatmul.f32.gmra.mxu0 %v1833
  %v1897 = vpop.f32.mrf.mxu0
  %v1898 = vadd.f32 %v1785, %v1897
  %1899 = vmatmul.f32.gmra.mxu0 %v1836
  %v1900 = vpop.f32.mrf.mxu0
  %v1901 = vadd.f32 %v1788, %v1900
  %1902 = vmatmul.f32.gmra.mxu0 %v1839
  %v1903 = vpop.f32.mrf.mxu0
  %v1904 = vadd.f32 %v1791, %v1903
  %1905 = vmatmul.f32.gmra.mxu0 %v1842
  %v1906 = vpop.f32.mrf.mxu0
  %v1907 = vadd.f32 %v1794, %v1906
  %1908 = vmatmul.f32.gmra.mxu0 %v1845
  %v1909 = vpop.f32.mrf.mxu0
  %v1910 = vadd.f32 %v1797, %v1909
  %1911 = vmatmul.f32.gmra.mxu0 %v1848
  %v1912 = vpop.f32.mrf.mxu0
  %v1913 = vadd.f32 %v1800, %v1912
  %1914 = vmatmul.f32.gmra.mxu0 %v1851
  %v1915 = vpop.f32.mrf.mxu0
  %v1916 = vadd.f32 %v1803, %v1915
  %1917 = vmatmul.f32.gmra.mxu0 %v1854
  %v1918 = vpop.f32.mrf.mxu0
  %v1919 = vadd.f32 %v1806, %v1918
  %1920 = vmatmul.f32.gmra.mxu0 %v1857
  %v1921 = vpop.f32.mrf.mxu0
  %v1922 = vadd.f32 %v1809, %v1921
  %1923 = vmatmul.f32.gmra.mxu0 %v1860
  %v1924 = vpop.f32.mrf.mxu0
  %v1925 = vadd.f32 %v1812, %v1924
  %1926 = vmatmul.f32.gmra.mxu0 %v1863
  %v1927 = vpop.f32.mrf.mxu0
  %v1928 = vadd.f32 %v1815, %v1927
  %1929 = vmatmul.f32.gmra.mxu0 %v1866
  %v1930 = vpop.f32.mrf.mxu0
  %v1931 = vadd.f32 %v1818, %v1930
  %1932 = vdwg.mxu0
  %v1933 = vld [vmem:[#allocation3 + $0xa] sm:$0xff]
  %v1934 = vld [vmem:[#allocation3 + $0x22] sm:$0xff]
  %v1935 = vld [vmem:[#allocation3 + $0x3a] sm:$0xff]
  %v1936 = vld [vmem:[#allocation3 + $0x52] sm:$0xff]
  %v1937 = vld [vmem:[#allocation3 + $0x6a] sm:$0xff]
  %v1938 = vld [vmem:[#allocation3 + $0x82] sm:$0xff]
  %v1939 = vld [vmem:[#allocation3 + $0x9a] sm:$0xff]
  %v1940 = vld [vmem:[#allocation3 + $0xb2] sm:$0xff]
  %v1941 = vld [vmem:[#allocation3 + $0x1ba] sm:$0xff]
  %v1942 = vld [vmem:[#allocation3 + $0x1d2] sm:$0xff]
  %v1943 = vld [vmem:[#allocation3 + $0x1ea] sm:$0xff]
  %v1944 = vld [vmem:[#allocation3 + $0x202] sm:$0xff]
  %v1945 = vld [vmem:[#allocation3 + $0x21a] sm:$0xff]
  %v1946 = vld [vmem:[#allocation3 + $0x232] sm:$0xff]
  %v1947 = vld [vmem:[#allocation3 + $0x24a] sm:$0xff]
  %v1948 = vld [vmem:[#allocation3 + $0x262] sm:$0xff]
  %v1949 = vld [vmem:[%s3 + $0x58] sm:$0xff]
  %v1951 = vsel %vm20, %v1933, 0
  %v1954 = vsel %vm20, %v1934, 0
  %v1957 = vsel %vm20, %v1935, 0
  %v1960 = vsel %vm20, %v1936, 0
  %v1963 = vsel %vm20, %v1937, 0
  %v1966 = vsel %vm20, %v1938, 0
  %v1969 = vsel %vm20, %v1939, 0
  %v1972 = vsel %vm20, %v1940, 0
  %v1975 = vsel %vm20, %v1941, 0
  %v1978 = vsel %vm20, %v1942, 0
  %v1981 = vsel %vm20, %v1943, 0
  %v1984 = vsel %vm20, %v1944, 0
  %v1987 = vsel %vm20, %v1945, 0
  %v1990 = vsel %vm20, %v1946, 0
  %v1993 = vsel %vm20, %v1947, 0
  %v1996 = vsel %vm20, %v1948, 0
  %1998 = vmatpush.msra.mxu0 0.0
  %1999 = vmatpush.msra.mxu0 0.0
  %2000 = vmatpush.msra.mxu0 0.0
  %2001 = vmatpush.msra.mxu0 0.0
  %2002 = vmatpush.msra.mxu0 0.0
  %2003 = vmatpush.msra.mxu0 0.0
  %2004 = vmatpush.msra.mxu0 0.0
  %2005 = vmatpush.msra.mxu0 0.0
  %2006 = vmatpush.msra.mxu0 0.0
  %2007 = vmatpush.msra.mxu0 0.0
  %2008 = vmatpush.msra.mxu0 0.0
  %2009 = vmatpush.msra.mxu0 0.0
  %2010 = vmatpush.msra.mxu0 0.0
  %2011 = vmatpush.msra.mxu0 0.0
  %2012 = vmatpush.msra.mxu0 0.0
  %2013 = vmatpush.msra.mxu0 %v1949
  %2014 = vmatmul.f32.gmra.mxu0 %v1951
  %v2015 = vpop.f32.mrf.mxu0
  %v2016 = vadd.f32 0.0, %v2015
  %2017 = vmatmul.f32.gmra.mxu0 %v1954
  %v2018 = vpop.f32.mrf.mxu0
  %v2019 = vadd.f32 0.0, %v2018
  %2020 = vmatmul.f32.gmra.mxu0 %v1957
  %v2021 = vpop.f32.mrf.mxu0
  %v2022 = vadd.f32 0.0, %v2021
  %2023 = vmatmul.f32.gmra.mxu0 %v1960
  %v2024 = vpop.f32.mrf.mxu0
  %v2025 = vadd.f32 0.0, %v2024
  %2026 = vmatmul.f32.gmra.mxu0 %v1963
  %v2027 = vpop.f32.mrf.mxu0
  %v2028 = vadd.f32 0.0, %v2027
  %2029 = vmatmul.f32.gmra.mxu0 %v1966
  %v2030 = vpop.f32.mrf.mxu0
  %v2031 = vadd.f32 0.0, %v2030
  %2032 = vmatmul.f32.gmra.mxu0 %v1969
  %v2033 = vpop.f32.mrf.mxu0
  %v2034 = vadd.f32 0.0, %v2033
  %2035 = vmatmul.f32.gmra.mxu0 %v1972
  %v2036 = vpop.f32.mrf.mxu0
  %v2037 = vadd.f32 0.0, %v2036
  %2038 = vmatmul.f32.gmra.mxu0 %v1975
  %v2039 = vpop.f32.mrf.mxu0
  %v2040 = vadd.f32 0.0, %v2039
  %2041 = vmatmul.f32.gmra.mxu0 %v1978
  %v2042 = vpop.f32.mrf.mxu0
  %v2043 = vadd.f32 0.0, %v2042
  %2044 = vmatmul.f32.gmra.mxu0 %v1981
  %v2045 = vpop.f32.mrf.mxu0
  %v2046 = vadd.f32 0.0, %v2045
  %2047 = vmatmul.f32.gmra.mxu0 %v1984
  %v2048 = vpop.f32.mrf.mxu0
  %v2049 = vadd.f32 0.0, %v2048
  %2050 = vmatmul.f32.gmra.mxu0 %v1987
  %v2051 = vpop.f32.mrf.mxu0
  %v2052 = vadd.f32 0.0, %v2051
  %2053 = vmatmul.f32.gmra.mxu0 %v1990
  %v2054 = vpop.f32.mrf.mxu0
  %v2055 = vadd.f32 0.0, %v2054
  %2056 = vmatmul.f32.gmra.mxu0 %v1993
  %v2057 = vpop.f32.mrf.mxu0
  %v2058 = vadd.f32 0.0, %v2057
  %2059 = vmatmul.f32.gmra.mxu0 %v1996
  %v2060 = vpop.f32.mrf.mxu0
  %v2061 = vadd.f32 0.0, %v2060
  %2062 = vdwg.mxu0
  %v2063 = vadd.f32 %v1886, %v2016
  %v2064 = vadd.f32 %v1889, %v2019
  %v2065 = vadd.f32 %v1892, %v2022
  %v2066 = vadd.f32 %v1895, %v2025
  %v2067 = vadd.f32 %v1898, %v2028
  %v2068 = vadd.f32 %v1901, %v2031
  %v2069 = vadd.f32 %v1904, %v2034
  %v2070 = vadd.f32 %v1907, %v2037
  %v2071 = vadd.f32 %v1910, %v2040
  %v2072 = vadd.f32 %v1913, %v2043
  %v2073 = vadd.f32 %v1916, %v2046
  %v2074 = vadd.f32 %v1919, %v2049
  %v2075 = vadd.f32 %v1922, %v2052
  %v2076 = vadd.f32 %v1925, %v2055
  %v2077 = vadd.f32 %v1928, %v2058
  %v2078 = vadd.f32 %v1931, %v2061
  %s2079 = scalar_lea.vmem [#allocation3], 120
  %v2080 = vld [vmem:[%s2079] sm:$0xff]
  %v2081 = vld [vmem:[%s2079 + $0x18] sm:$0xff]
  %v2082 = vld [vmem:[%s2079 + $0x30] sm:$0xff]
  %v2083 = vld [vmem:[%s2079 + $0x48] sm:$0xff]
  %v2084 = vld [vmem:[%s2079 + $0x60] sm:$0xff]
  %v2085 = vld [vmem:[%s2079 + $0x78] sm:$0xff]
  %v2086 = vld [vmem:[%s2079 + $0x90] sm:$0xff]
  %v2087 = vld [vmem:[%s2079 + $0xa8] sm:$0xff]
  %v2088 = vld [vmem:[%s2079 + $0x1b0] sm:$0xff]
  %v2089 = vld [vmem:[%s2079 + $0x1c8] sm:$0xff]
  %v2090 = vld [vmem:[%s2079 + $0x1e0] sm:$0xff]
  %v2091 = vld [vmem:[%s2079 + $0x1f8] sm:$0xff]
  %v2092 = vld [vmem:[%s2079 + $0x210] sm:$0xff]
  %v2093 = vld [vmem:[%s2079 + $0x228] sm:$0xff]
  %v2094 = vld [vmem:[%s2079 + $0x240] sm:$0xff]
  %v2095 = vld [vmem:[%s2079 + $0x258] sm:$0xff]
  %v2096 = vld [vmem:[%s3 + $0x60] sm:$0xff]
  %v2098 = vsel %vm20, %v2080, 0
  %v2101 = vsel %vm20, %v2081, 0
  %v2104 = vsel %vm20, %v2082, 0
  %v2107 = vsel %vm20, %v2083, 0
  %v2110 = vsel %vm20, %v2084, 0
  %v2113 = vsel %vm20, %v2085, 0
  %v2116 = vsel %vm20, %v2086, 0
  %v2119 = vsel %vm20, %v2087, 0
  %v2122 = vsel %vm20, %v2088, 0
  %v2125 = vsel %vm20, %v2089, 0
  %v2128 = vsel %vm20, %v2090, 0
  %v2131 = vsel %vm20, %v2091, 0
  %v2134 = vsel %vm20, %v2092, 0
  %v2137 = vsel %vm20, %v2093, 0
  %v2140 = vsel %vm20, %v2094, 0
  %v2143 = vsel %vm20, %v2095, 0
  %2145 = vmatpush.msra.mxu0 0.0
  %2146 = vmatpush.msra.mxu0 0.0
  %2147 = vmatpush.msra.mxu0 0.0
  %2148 = vmatpush.msra.mxu0 0.0
  %2149 = vmatpush.msra.mxu0 0.0
  %2150 = vmatpush.msra.mxu0 0.0
  %2151 = vmatpush.msra.mxu0 0.0
  %2152 = vmatpush.msra.mxu0 0.0
  %2153 = vmatpush.msra.mxu0 0.0
  %2154 = vmatpush.msra.mxu0 0.0
  %2155 = vmatpush.msra.mxu0 0.0
  %2156 = vmatpush.msra.mxu0 0.0
  %2157 = vmatpush.msra.mxu0 0.0
  %2158 = vmatpush.msra.mxu0 0.0
  %2159 = vmatpush.msra.mxu0 0.0
  %2160 = vmatpush.msra.mxu0 %v2096
  %2161 = vmatmul.f32.gmra.mxu0 %v2098
  %v2162 = vpop.f32.mrf.mxu0
  %v2163 = vadd.f32 0.0, %v2162
  %2164 = vmatmul.f32.gmra.mxu0 %v2101
  %v2165 = vpop.f32.mrf.mxu0
  %v2166 = vadd.f32 0.0, %v2165
  %2167 = vmatmul.f32.gmra.mxu0 %v2104
  %v2168 = vpop.f32.mrf.mxu0
  %v2169 = vadd.f32 0.0, %v2168
  %2170 = vmatmul.f32.gmra.mxu0 %v2107
  %v2171 = vpop.f32.mrf.mxu0
  %v2172 = vadd.f32 0.0, %v2171
  %2173 = vmatmul.f32.gmra.mxu0 %v2110
  %v2174 = vpop.f32.mrf.mxu0
  %v2175 = vadd.f32 0.0, %v2174
  %2176 = vmatmul.f32.gmra.mxu0 %v2113
  %v2177 = vpop.f32.mrf.mxu0
  %v2178 = vadd.f32 0.0, %v2177
  %2179 = vmatmul.f32.gmra.mxu0 %v2116
  %v2180 = vpop.f32.mrf.mxu0
  %v2181 = vadd.f32 0.0, %v2180
  %2182 = vmatmul.f32.gmra.mxu0 %v2119
  %v2183 = vpop.f32.mrf.mxu0
  %v2184 = vadd.f32 0.0, %v2183
  %2185 = vmatmul.f32.gmra.mxu0 %v2122
  %v2186 = vpop.f32.mrf.mxu0
  %v2187 = vadd.f32 0.0, %v2186
  %2188 = vmatmul.f32.gmra.mxu0 %v2125
  %v2189 = vpop.f32.mrf.mxu0
  %v2190 = vadd.f32 0.0, %v2189
  %2191 = vmatmul.f32.gmra.mxu0 %v2128
  %v2192 = vpop.f32.mrf.mxu0
  %v2193 = vadd.f32 0.0, %v2192
  %2194 = vmatmul.f32.gmra.mxu0 %v2131
  %v2195 = vpop.f32.mrf.mxu0
  %v2196 = vadd.f32 0.0, %v2195
  %2197 = vmatmul.f32.gmra.mxu0 %v2134
  %v2198 = vpop.f32.mrf.mxu0
  %v2199 = vadd.f32 0.0, %v2198
  %2200 = vmatmul.f32.gmra.mxu0 %v2137
  %v2201 = vpop.f32.mrf.mxu0
  %v2202 = vadd.f32 0.0, %v2201
  %2203 = vmatmul.f32.gmra.mxu0 %v2140
  %v2204 = vpop.f32.mrf.mxu0
  %v2205 = vadd.f32 0.0, %v2204
  %2206 = vmatmul.f32.gmra.mxu0 %v2143
  %v2207 = vpop.f32.mrf.mxu0
  %v2208 = vadd.f32 0.0, %v2207
  %2209 = vdwg.mxu0
  %v2210 = vadd.f32 %v2063, %v2163
  %v2211 = vadd.f32 %v2064, %v2166
  %v2212 = vadd.f32 %v2065, %v2169
  %v2213 = vadd.f32 %v2066, %v2172
  %v2214 = vadd.f32 %v2067, %v2175
  %v2215 = vadd.f32 %v2068, %v2178
  %v2216 = vadd.f32 %v2069, %v2181
  %v2217 = vadd.f32 %v2070, %v2184
  %v2218 = vadd.f32 %v2071, %v2187
  %v2219 = vadd.f32 %v2072, %v2190
  %v2220 = vadd.f32 %v2073, %v2193
  %v2221 = vadd.f32 %v2074, %v2196
  %v2222 = vadd.f32 %v2075, %v2199
  %v2223 = vadd.f32 %v2076, %v2202
  %v2224 = vadd.f32 %v2077, %v2205
  %v2225 = vadd.f32 %v2078, %v2208
  %v2226 = vld [vmem:[%s2079 + $0x5] sm:$0xff]
  %v2227 = vld [vmem:[%s2079 + $0x1d] sm:$0xff]
  %v2228 = vld [vmem:[%s2079 + $0x35] sm:$0xff]
  %v2229 = vld [vmem:[%s2079 + $0x4d] sm:$0xff]
  %v2230 = vld [vmem:[%s2079 + $0x65] sm:$0xff]
  %v2231 = vld [vmem:[%s2079 + $0x7d] sm:$0xff]
  %v2232 = vld [vmem:[%s2079 + $0x95] sm:$0xff]
  %v2233 = vld [vmem:[%s2079 + $0xad] sm:$0xff]
  %v2234 = vld [vmem:[%s2079 + $0x1b5] sm:$0xff]
  %v2235 = vld [vmem:[%s2079 + $0x1cd] sm:$0xff]
  %v2236 = vld [vmem:[%s2079 + $0x1e5] sm:$0xff]
  %v2237 = vld [vmem:[%s2079 + $0x1fd] sm:$0xff]
  %v2238 = vld [vmem:[%s2079 + $0x215] sm:$0xff]
  %v2239 = vld [vmem:[%s2079 + $0x22d] sm:$0xff]
  %v2240 = vld [vmem:[%s2079 + $0x245] sm:$0xff]
  %v2241 = vld [vmem:[%s2079 + $0x25d] sm:$0xff]
  %v2242 = vld [vmem:[%s3 + $0x68] sm:$0xff]
  %v2244 = vsel %vm20, %v2226, 0
  %v2247 = vsel %vm20, %v2227, 0
  %v2250 = vsel %vm20, %v2228, 0
  %v2253 = vsel %vm20, %v2229, 0
  %v2256 = vsel %vm20, %v2230, 0
  %v2259 = vsel %vm20, %v2231, 0
  %v2262 = vsel %vm20, %v2232, 0
  %v2265 = vsel %vm20, %v2233, 0
  %v2268 = vsel %vm20, %v2234, 0
  %v2271 = vsel %vm20, %v2235, 0
  %v2274 = vsel %vm20, %v2236, 0
  %v2277 = vsel %vm20, %v2237, 0
  %v2280 = vsel %vm20, %v2238, 0
  %v2283 = vsel %vm20, %v2239, 0
  %v2286 = vsel %vm20, %v2240, 0
  %v2289 = vsel %vm20, %v2241, 0
  %2291 = vmatpush.msra.mxu0 0.0
  %2292 = vmatpush.msra.mxu0 0.0
  %2293 = vmatpush.msra.mxu0 0.0
  %2294 = vmatpush.msra.mxu0 0.0
  %2295 = vmatpush.msra.mxu0 0.0
  %2296 = vmatpush.msra.mxu0 0.0
  %2297 = vmatpush.msra.mxu0 0.0
  %2298 = vmatpush.msra.mxu0 0.0
  %2299 = vmatpush.msra.mxu0 0.0
  %2300 = vmatpush.msra.mxu0 0.0
  %2301 = vmatpush.msra.mxu0 0.0
  %2302 = vmatpush.msra.mxu0 0.0
  %2303 = vmatpush.msra.mxu0 0.0
  %2304 = vmatpush.msra.mxu0 0.0
  %2305 = vmatpush.msra.mxu0 0.0
  %2306 = vmatpush.msra.mxu0 %v2242
  %2307 = vmatmul.f32.gmra.mxu0 %v2244
  %v2308 = vpop.f32.mrf.mxu0
  %v2309 = vadd.f32 0.0, %v2308
  %2310 = vmatmul.f32.gmra.mxu0 %v2247
  %v2311 = vpop.f32.mrf.mxu0
  %v2312 = vadd.f32 0.0, %v2311
  %2313 = vmatmul.f32.gmra.mxu0 %v2250
  %v2314 = vpop.f32.mrf.mxu0
  %v2315 = vadd.f32 0.0, %v2314
  %2316 = vmatmul.f32.gmra.mxu0 %v2253
  %v2317 = vpop.f32.mrf.mxu0
  %v2318 = vadd.f32 0.0, %v2317
  %2319 = vmatmul.f32.gmra.mxu0 %v2256
  %v2320 = vpop.f32.mrf.mxu0
  %v2321 = vadd.f32 0.0, %v2320
  %2322 = vmatmul.f32.gmra.mxu0 %v2259
  %v2323 = vpop.f32.mrf.mxu0
  %v2324 = vadd.f32 0.0, %v2323
  %2325 = vmatmul.f32.gmra.mxu0 %v2262
  %v2326 = vpop.f32.mrf.mxu0
  %v2327 = vadd.f32 0.0, %v2326
  %2328 = vmatmul.f32.gmra.mxu0 %v2265
  %v2329 = vpop.f32.mrf.mxu0
  %v2330 = vadd.f32 0.0, %v2329
  %2331 = vmatmul.f32.gmra.mxu0 %v2268
  %v2332 = vpop.f32.mrf.mxu0
  %v2333 = vadd.f32 0.0, %v2332
  %2334 = vmatmul.f32.gmra.mxu0 %v2271
  %v2335 = vpop.f32.mrf.mxu0
  %v2336 = vadd.f32 0.0, %v2335
  %2337 = vmatmul.f32.gmra.mxu0 %v2274
  %v2338 = vpop.f32.mrf.mxu0
  %v2339 = vadd.f32 0.0, %v2338
  %2340 = vmatmul.f32.gmra.mxu0 %v2277
  %v2341 = vpop.f32.mrf.mxu0
  %v2342 = vadd.f32 0.0, %v2341
  %2343 = vmatmul.f32.gmra.mxu0 %v2280
  %v2344 = vpop.f32.mrf.mxu0
  %v2345 = vadd.f32 0.0, %v2344
  %2346 = vmatmul.f32.gmra.mxu0 %v2283
  %v2347 = vpop.f32.mrf.mxu0
  %v2348 = vadd.f32 0.0, %v2347
  %2349 = vmatmul.f32.gmra.mxu0 %v2286
  %v2350 = vpop.f32.mrf.mxu0
  %v2351 = vadd.f32 0.0, %v2350
  %2352 = vmatmul.f32.gmra.mxu0 %v2289
  %v2353 = vpop.f32.mrf.mxu0
  %v2354 = vadd.f32 0.0, %v2353
  %2355 = vdwg.mxu0
  %v2356 = vadd.f32 %v2210, %v2309
  %v2357 = vadd.f32 %v2211, %v2312
  %v2358 = vadd.f32 %v2212, %v2315
  %v2359 = vadd.f32 %v2213, %v2318
  %v2360 = vadd.f32 %v2214, %v2321
  %v2361 = vadd.f32 %v2215, %v2324
  %v2362 = vadd.f32 %v2216, %v2327
  %v2363 = vadd.f32 %v2217, %v2330
  %v2364 = vadd.f32 %v2218, %v2333
  %v2365 = vadd.f32 %v2219, %v2336
  %v2366 = vadd.f32 %v2220, %v2339
  %v2367 = vadd.f32 %v2221, %v2342
  %v2368 = vadd.f32 %v2222, %v2345
  %v2369 = vadd.f32 %v2223, %v2348
  %v2370 = vadd.f32 %v2224, %v2351
  %v2371 = vadd.f32 %v2225, %v2354
  %v2372 = vld [vmem:[%s2079 + $0xa] sm:$0xff]
  %v2373 = vld [vmem:[%s2079 + $0x22] sm:$0xff]
  %v2374 = vld [vmem:[%s2079 + $0x3a] sm:$0xff]
  %v2375 = vld [vmem:[%s2079 + $0x52] sm:$0xff]
  %v2376 = vld [vmem:[%s2079 + $0x6a] sm:$0xff]
  %v2377 = vld [vmem:[%s2079 + $0x82] sm:$0xff]
  %v2378 = vld [vmem:[%s2079 + $0x9a] sm:$0xff]
  %v2379 = vld [vmem:[%s2079 + $0xb2] sm:$0xff]
  %v2380 = vld [vmem:[%s2079 + $0x1ba] sm:$0xff]
  %v2381 = vld [vmem:[%s2079 + $0x1d2] sm:$0xff]
  %v2382 = vld [vmem:[%s2079 + $0x1ea] sm:$0xff]
  %v2383 = vld [vmem:[%s2079 + $0x202] sm:$0xff]
  %v2384 = vld [vmem:[%s2079 + $0x21a] sm:$0xff]
  %v2385 = vld [vmem:[%s2079 + $0x232] sm:$0xff]
  %v2386 = vld [vmem:[%s2079 + $0x24a] sm:$0xff]
  %v2387 = vld [vmem:[%s2079 + $0x262] sm:$0xff]
  %v2388 = vld [vmem:[%s3 + $0x70] sm:$0xff]
  %v2390 = vsel %vm20, %v2372, 0
  %v2393 = vsel %vm20, %v2373, 0
  %v2396 = vsel %vm20, %v2374, 0
  %v2399 = vsel %vm20, %v2375, 0
  %v2402 = vsel %vm20, %v2376, 0
  %v2405 = vsel %vm20, %v2377, 0
  %v2408 = vsel %vm20, %v2378, 0
  %v2411 = vsel %vm20, %v2379, 0
  %v2414 = vsel %vm20, %v2380, 0
  %v2417 = vsel %vm20, %v2381, 0
  %v2420 = vsel %vm20, %v2382, 0
  %v2423 = vsel %vm20, %v2383, 0
  %v2426 = vsel %vm20, %v2384, 0
  %v2429 = vsel %vm20, %v2385, 0
  %v2432 = vsel %vm20, %v2386, 0
  %v2435 = vsel %vm20, %v2387, 0
  %2437 = vmatpush.msra.mxu0 0.0
  %2438 = vmatpush.msra.mxu0 0.0
  %2439 = vmatpush.msra.mxu0 0.0
  %2440 = vmatpush.msra.mxu0 0.0
  %2441 = vmatpush.msra.mxu0 0.0
  %2442 = vmatpush.msra.mxu0 0.0
  %2443 = vmatpush.msra.mxu0 0.0
  %2444 = vmatpush.msra.mxu0 0.0
  %2445 = vmatpush.msra.mxu0 0.0
  %2446 = vmatpush.msra.mxu0 0.0
  %2447 = vmatpush.msra.mxu0 0.0
  %2448 = vmatpush.msra.mxu0 0.0
  %2449 = vmatpush.msra.mxu0 0.0
  %2450 = vmatpush.msra.mxu0 0.0
  %2451 = vmatpush.msra.mxu0 0.0
  %2452 = vmatpush.msra.mxu0 %v2388
  %2453 = vmatmul.f32.gmra.mxu0 %v2390
  %v2454 = vpop.f32.mrf.mxu0
  %v2455 = vadd.f32 0.0, %v2454
  %2456 = vmatmul.f32.gmra.mxu0 %v2393
  %v2457 = vpop.f32.mrf.mxu0
  %v2458 = vadd.f32 0.0, %v2457
  %2459 = vmatmul.f32.gmra.mxu0 %v2396
  %v2460 = vpop.f32.mrf.mxu0
  %v2461 = vadd.f32 0.0, %v2460
  %2462 = vmatmul.f32.gmra.mxu0 %v2399
  %v2463 = vpop.f32.mrf.mxu0
  %v2464 = vadd.f32 0.0, %v2463
  %2465 = vmatmul.f32.gmra.mxu0 %v2402
  %v2466 = vpop.f32.mrf.mxu0
  %v2467 = vadd.f32 0.0, %v2466
  %2468 = vmatmul.f32.gmra.mxu0 %v2405
  %v2469 = vpop.f32.mrf.mxu0
  %v2470 = vadd.f32 0.0, %v2469
  %2471 = vmatmul.f32.gmra.mxu0 %v2408
  %v2472 = vpop.f32.mrf.mxu0
  %v2473 = vadd.f32 0.0, %v2472
  %2474 = vmatmul.f32.gmra.mxu0 %v2411
  %v2475 = vpop.f32.mrf.mxu0
  %v2476 = vadd.f32 0.0, %v2475
  %2477 = vmatmul.f32.gmra.mxu0 %v2414
  %v2478 = vpop.f32.mrf.mxu0
  %v2479 = vadd.f32 0.0, %v2478
  %2480 = vmatmul.f32.gmra.mxu0 %v2417
  %v2481 = vpop.f32.mrf.mxu0
  %v2482 = vadd.f32 0.0, %v2481
  %2483 = vmatmul.f32.gmra.mxu0 %v2420
  %v2484 = vpop.f32.mrf.mxu0
  %v2485 = vadd.f32 0.0, %v2484
  %2486 = vmatmul.f32.gmra.mxu0 %v2423
  %v2487 = vpop.f32.mrf.mxu0
  %v2488 = vadd.f32 0.0, %v2487
  %2489 = vmatmul.f32.gmra.mxu0 %v2426
  %v2490 = vpop.f32.mrf.mxu0
  %v2491 = vadd.f32 0.0, %v2490
  %2492 = vmatmul.f32.gmra.mxu0 %v2429
  %v2493 = vpop.f32.mrf.mxu0
  %v2494 = vadd.f32 0.0, %v2493
  %2495 = vmatmul.f32.gmra.mxu0 %v2432
  %v2496 = vpop.f32.mrf.mxu0
  %v2497 = vadd.f32 0.0, %v2496
  %2498 = vmatmul.f32.gmra.mxu0 %v2435
  %v2499 = vpop.f32.mrf.mxu0
  %v2500 = vadd.f32 0.0, %v2499
  %2501 = vdwg.mxu0
  %v2502 = vadd.f32 %v2356, %v2455
  %v2503 = vadd.f32 %v2357, %v2458
  %v2504 = vadd.f32 %v2358, %v2461
  %v2505 = vadd.f32 %v2359, %v2464
  %v2506 = vadd.f32 %v2360, %v2467
  %v2507 = vadd.f32 %v2361, %v2470
  %v2508 = vadd.f32 %v2362, %v2473
  %v2509 = vadd.f32 %v2363, %v2476
  %v2510 = vadd.f32 %v2364, %v2479
  %v2511 = vadd.f32 %v2365, %v2482
  %v2512 = vadd.f32 %v2366, %v2485
  %v2513 = vadd.f32 %v2367, %v2488
  %v2514 = vadd.f32 %v2368, %v2491
  %v2515 = vadd.f32 %v2369, %v2494
  %v2516 = vadd.f32 %v2370, %v2497
  %v2517 = vadd.f32 %v2371, %v2500
  %s2518 = scalar_lea.vmem [#allocation3], 240
  %v2519 = vld [vmem:[%s2518] sm:$0xff]
  %v2520 = vld [vmem:[%s2518 + $0x18] sm:$0xff]
  %v2521 = vld [vmem:[%s2518 + $0x30] sm:$0xff]
  %v2522 = vld [vmem:[%s2518 + $0x48] sm:$0xff]
  %v2523 = vld [vmem:[%s2518 + $0x60] sm:$0xff]
  %v2524 = vld [vmem:[%s2518 + $0x78] sm:$0xff]
  %v2525 = vld [vmem:[%s2518 + $0x90] sm:$0xff]
  %v2526 = vld [vmem:[%s2518 + $0xa8] sm:$0xff]
  %v2527 = vld [vmem:[%s2518 + $0x1b0] sm:$0xff]
  %v2528 = vld [vmem:[%s2518 + $0x1c8] sm:$0xff]
  %v2529 = vld [vmem:[%s2518 + $0x1e0] sm:$0xff]
  %v2530 = vld [vmem:[%s2518 + $0x1f8] sm:$0xff]
  %v2531 = vld [vmem:[%s2518 + $0x210] sm:$0xff]
  %v2532 = vld [vmem:[%s2518 + $0x228] sm:$0xff]
  %v2533 = vld [vmem:[%s2518 + $0x240] sm:$0xff]
  %v2534 = vld [vmem:[%s2518 + $0x258] sm:$0xff]
  %v2535 = vld [vmem:[%s3 + $0x78] sm:$0xff]
  %v2537 = vsel %vm20, %v2519, 0
  %v2540 = vsel %vm20, %v2520, 0
  %v2543 = vsel %vm20, %v2521, 0
  %v2546 = vsel %vm20, %v2522, 0
  %v2549 = vsel %vm20, %v2523, 0
  %v2552 = vsel %vm20, %v2524, 0
  %v2555 = vsel %vm20, %v2525, 0
  %v2558 = vsel %vm20, %v2526, 0
  %v2561 = vsel %vm20, %v2527, 0
  %v2564 = vsel %vm20, %v2528, 0
  %v2567 = vsel %vm20, %v2529, 0
  %v2570 = vsel %vm20, %v2530, 0
  %v2573 = vsel %vm20, %v2531, 0
  %v2576 = vsel %vm20, %v2532, 0
  %v2579 = vsel %vm20, %v2533, 0
  %v2582 = vsel %vm20, %v2534, 0
  %2584 = vmatpush.msra.mxu0 0.0
  %2585 = vmatpush.msra.mxu0 0.0
  %2586 = vmatpush.msra.mxu0 0.0
  %2587 = vmatpush.msra.mxu0 0.0
  %2588 = vmatpush.msra.mxu0 0.0
  %2589 = vmatpush.msra.mxu0 0.0
  %2590 = vmatpush.msra.mxu0 0.0
  %2591 = vmatpush.msra.mxu0 0.0
  %2592 = vmatpush.msra.mxu0 0.0
  %2593 = vmatpush.msra.mxu0 0.0
  %2594 = vmatpush.msra.mxu0 0.0
  %2595 = vmatpush.msra.mxu0 0.0
  %2596 = vmatpush.msra.mxu0 0.0
  %2597 = vmatpush.msra.mxu0 0.0
  %2598 = vmatpush.msra.mxu0 0.0
  %2599 = vmatpush.msra.mxu0 %v2535
  %2600 = vmatmul.f32.gmra.mxu0 %v2537
  %v2601 = vpop.f32.mrf.mxu0
  %v2602 = vadd.f32 0.0, %v2601
  %2603 = vmatmul.f32.gmra.mxu0 %v2540
  %v2604 = vpop.f32.mrf.mxu0
  %v2605 = vadd.f32 0.0, %v2604
  %2606 = vmatmul.f32.gmra.mxu0 %v2543
  %v2607 = vpop.f32.mrf.mxu0
  %v2608 = vadd.f32 0.0, %v2607
  %2609 = vmatmul.f32.gmra.mxu0 %v2546
  %v2610 = vpop.f32.mrf.mxu0
  %v2611 = vadd.f32 0.0, %v2610
  %2612 = vmatmul.f32.gmra.mxu0 %v2549
  %v2613 = vpop.f32.mrf.mxu0
  %v2614 = vadd.f32 0.0, %v2613
  %2615 = vmatmul.f32.gmra.mxu0 %v2552
  %v2616 = vpop.f32.mrf.mxu0
  %v2617 = vadd.f32 0.0, %v2616
  %2618 = vmatmul.f32.gmra.mxu0 %v2555
  %v2619 = vpop.f32.mrf.mxu0
  %v2620 = vadd.f32 0.0, %v2619
  %2621 = vmatmul.f32.gmra.mxu0 %v2558
  %v2622 = vpop.f32.mrf.mxu0
  %v2623 = vadd.f32 0.0, %v2622
  %2624 = vmatmul.f32.gmra.mxu0 %v2561
  %v2625 = vpop.f32.mrf.mxu0
  %v2626 = vadd.f32 0.0, %v2625
  %2627 = vmatmul.f32.gmra.mxu0 %v2564
  %v2628 = vpop.f32.mrf.mxu0
  %v2629 = vadd.f32 0.0, %v2628
  %2630 = vmatmul.f32.gmra.mxu0 %v2567
  %v2631 = vpop.f32.mrf.mxu0
  %v2632 = vadd.f32 0.0, %v2631
  %2633 = vmatmul.f32.gmra.mxu0 %v2570
  %v2634 = vpop.f32.mrf.mxu0
  %v2635 = vadd.f32 0.0, %v2634
  %2636 = vmatmul.f32.gmra.mxu0 %v2573
  %v2637 = vpop.f32.mrf.mxu0
  %v2638 = vadd.f32 0.0, %v2637
  %2639 = vmatmul.f32.gmra.mxu0 %v2576
  %v2640 = vpop.f32.mrf.mxu0
  %v2641 = vadd.f32 0.0, %v2640
  %2642 = vmatmul.f32.gmra.mxu0 %v2579
  %v2643 = vpop.f32.mrf.mxu0
  %v2644 = vadd.f32 0.0, %v2643
  %2645 = vmatmul.f32.gmra.mxu0 %v2582
  %v2646 = vpop.f32.mrf.mxu0
  %v2647 = vadd.f32 0.0, %v2646
  %2648 = vdwg.mxu0
  %v2649 = vadd.f32 %v2502, %v2602
  %v2650 = vadd.f32 %v2503, %v2605
  %v2651 = vadd.f32 %v2504, %v2608
  %v2652 = vadd.f32 %v2505, %v2611
  %v2653 = vadd.f32 %v2506, %v2614
  %v2654 = vadd.f32 %v2507, %v2617
  %v2655 = vadd.f32 %v2508, %v2620
  %v2656 = vadd.f32 %v2509, %v2623
  %v2657 = vadd.f32 %v2510, %v2626
  %v2658 = vadd.f32 %v2511, %v2629
  %v2659 = vadd.f32 %v2512, %v2632
  %v2660 = vadd.f32 %v2513, %v2635
  %v2661 = vadd.f32 %v2514, %v2638
  %v2662 = vadd.f32 %v2515, %v2641
  %v2663 = vadd.f32 %v2516, %v2644
  %v2664 = vadd.f32 %v2517, %v2647
  %v2665 = vld [vmem:[%s2518 + $0x5] sm:$0xff]
  %v2666 = vld [vmem:[%s2518 + $0x1d] sm:$0xff]
  %v2667 = vld [vmem:[%s2518 + $0x35] sm:$0xff]
  %v2668 = vld [vmem:[%s2518 + $0x4d] sm:$0xff]
  %v2669 = vld [vmem:[%s2518 + $0x65] sm:$0xff]
  %v2670 = vld [vmem:[%s2518 + $0x7d] sm:$0xff]
  %v2671 = vld [vmem:[%s2518 + $0x95] sm:$0xff]
  %v2672 = vld [vmem:[%s2518 + $0xad] sm:$0xff]
  %v2673 = vld [vmem:[%s2518 + $0x1b5] sm:$0xff]
  %v2674 = vld [vmem:[%s2518 + $0x1cd] sm:$0xff]
  %v2675 = vld [vmem:[%s2518 + $0x1e5] sm:$0xff]
  %v2676 = vld [vmem:[%s2518 + $0x1fd] sm:$0xff]
  %v2677 = vld [vmem:[%s2518 + $0x215] sm:$0xff]
  %v2678 = vld [vmem:[%s2518 + $0x22d] sm:$0xff]
  %v2679 = vld [vmem:[%s2518 + $0x245] sm:$0xff]
  %v2680 = vld [vmem:[%s2518 + $0x25d] sm:$0xff]
  %v2681 = vld [vmem:[%s3 + $0x80] sm:$0xff]
  %v2683 = vsel %vm20, %v2665, 0
  %v2686 = vsel %vm20, %v2666, 0
  %v2689 = vsel %vm20, %v2667, 0
  %v2692 = vsel %vm20, %v2668, 0
  %v2695 = vsel %vm20, %v2669, 0
  %v2698 = vsel %vm20, %v2670, 0
  %v2701 = vsel %vm20, %v2671, 0
  %v2704 = vsel %vm20, %v2672, 0
  %v2707 = vsel %vm20, %v2673, 0
  %v2710 = vsel %vm20, %v2674, 0
  %v2713 = vsel %vm20, %v2675, 0
  %v2716 = vsel %vm20, %v2676, 0
  %v2719 = vsel %vm20, %v2677, 0
  %v2722 = vsel %vm20, %v2678, 0
  %v2725 = vsel %vm20, %v2679, 0
  %v2728 = vsel %vm20, %v2680, 0
  %2730 = vmatpush.msra.mxu0 0.0
  %2731 = vmatpush.msra.mxu0 0.0
  %2732 = vmatpush.msra.mxu0 0.0
  %2733 = vmatpush.msra.mxu0 0.0
  %2734 = vmatpush.msra.mxu0 0.0
  %2735 = vmatpush.msra.mxu0 0.0
  %2736 = vmatpush.msra.mxu0 0.0
  %2737 = vmatpush.msra.mxu0 0.0
  %2738 = vmatpush.msra.mxu0 0.0
  %2739 = vmatpush.msra.mxu0 0.0
  %2740 = vmatpush.msra.mxu0 0.0
  %2741 = vmatpush.msra.mxu0 0.0
  %2742 = vmatpush.msra.mxu0 0.0
  %2743 = vmatpush.msra.mxu0 0.0
  %2744 = vmatpush.msra.mxu0 0.0
  %2745 = vmatpush.msra.mxu0 %v2681
  %2746 = vmatmul.f32.gmra.mxu0 %v2683
  %v2747 = vpop.f32.mrf.mxu0
  %v2748 = vadd.f32 0.0, %v2747
  %2749 = vmatmul.f32.gmra.mxu0 %v2686
  %v2750 = vpop.f32.mrf.mxu0
  %v2751 = vadd.f32 0.0, %v2750
  %2752 = vmatmul.f32.gmra.mxu0 %v2689
  %v2753 = vpop.f32.mrf.mxu0
  %v2754 = vadd.f32 0.0, %v2753
  %2755 = vmatmul.f32.gmra.mxu0 %v2692
  %v2756 = vpop.f32.mrf.mxu0
  %v2757 = vadd.f32 0.0, %v2756
  %2758 = vmatmul.f32.gmra.mxu0 %v2695
  %v2759 = vpop.f32.mrf.mxu0
  %v2760 = vadd.f32 0.0, %v2759
  %2761 = vmatmul.f32.gmra.mxu0 %v2698
  %v2762 = vpop.f32.mrf.mxu0
  %v2763 = vadd.f32 0.0, %v2762
  %2764 = vmatmul.f32.gmra.mxu0 %v2701
  %v2765 = vpop.f32.mrf.mxu0
  %v2766 = vadd.f32 0.0, %v2765
  %2767 = vmatmul.f32.gmra.mxu0 %v2704
  %v2768 = vpop.f32.mrf.mxu0
  %v2769 = vadd.f32 0.0, %v2768
  %2770 = vmatmul.f32.gmra.mxu0 %v2707
  %v2771 = vpop.f32.mrf.mxu0
  %v2772 = vadd.f32 0.0, %v2771
  %2773 = vmatmul.f32.gmra.mxu0 %v2710
  %v2774 = vpop.f32.mrf.mxu0
  %v2775 = vadd.f32 0.0, %v2774
  %2776 = vmatmul.f32.gmra.mxu0 %v2713
  %v2777 = vpop.f32.mrf.mxu0
  %v2778 = vadd.f32 0.0, %v2777
  %2779 = vmatmul.f32.gmra.mxu0 %v2716
  %v2780 = vpop.f32.mrf.mxu0
  %v2781 = vadd.f32 0.0, %v2780
  %2782 = vmatmul.f32.gmra.mxu0 %v2719
  %v2783 = vpop.f32.mrf.mxu0
  %v2784 = vadd.f32 0.0, %v2783
  %2785 = vmatmul.f32.gmra.mxu0 %v2722
  %v2786 = vpop.f32.mrf.mxu0
  %v2787 = vadd.f32 0.0, %v2786
  %2788 = vmatmul.f32.gmra.mxu0 %v2725
  %v2789 = vpop.f32.mrf.mxu0
  %v2790 = vadd.f32 0.0, %v2789
  %2791 = vmatmul.f32.gmra.mxu0 %v2728
  %v2792 = vpop.f32.mrf.mxu0
  %v2793 = vadd.f32 0.0, %v2792
  %2794 = vdwg.mxu0
  %v2795 = vadd.f32 %v2649, %v2748
  %v2796 = vadd.f32 %v2650, %v2751
  %v2797 = vadd.f32 %v2651, %v2754
  %v2798 = vadd.f32 %v2652, %v2757
  %v2799 = vadd.f32 %v2653, %v2760
  %v2800 = vadd.f32 %v2654, %v2763
  %v2801 = vadd.f32 %v2655, %v2766
  %v2802 = vadd.f32 %v2656, %v2769
  %v2803 = vadd.f32 %v2657, %v2772
  %v2804 = vadd.f32 %v2658, %v2775
  %v2805 = vadd.f32 %v2659, %v2778
  %v2806 = vadd.f32 %v2660, %v2781
  %v2807 = vadd.f32 %v2661, %v2784
  %v2808 = vadd.f32 %v2662, %v2787
  %v2809 = vadd.f32 %v2663, %v2790
  %v2810 = vadd.f32 %v2664, %v2793
  %v2811 = vld [vmem:[%s2518 + $0xa] sm:$0xff]
  %v2812 = vld [vmem:[%s2518 + $0x22] sm:$0xff]
  %v2813 = vld [vmem:[%s2518 + $0x3a] sm:$0xff]
  %v2814 = vld [vmem:[%s2518 + $0x52] sm:$0xff]
  %v2815 = vld [vmem:[%s2518 + $0x6a] sm:$0xff]
  %v2816 = vld [vmem:[%s2518 + $0x82] sm:$0xff]
  %v2817 = vld [vmem:[%s2518 + $0x9a] sm:$0xff]
  %v2818 = vld [vmem:[%s2518 + $0xb2] sm:$0xff]
  %v2819 = vld [vmem:[%s2518 + $0x1ba] sm:$0xff]
  %v2820 = vld [vmem:[%s2518 + $0x1d2] sm:$0xff]
  %v2821 = vld [vmem:[%s2518 + $0x1ea] sm:$0xff]
  %v2822 = vld [vmem:[%s2518 + $0x202] sm:$0xff]
  %v2823 = vld [vmem:[%s2518 + $0x21a] sm:$0xff]
  %v2824 = vld [vmem:[%s2518 + $0x232] sm:$0xff]
  %v2825 = vld [vmem:[%s2518 + $0x24a] sm:$0xff]
  %v2826 = vld [vmem:[%s2518 + $0x262] sm:$0xff]
  %v2827 = vld [vmem:[%s3 + $0x88] sm:$0xff]
  %v2829 = vsel %vm20, %v2811, 0
  %v2832 = vsel %vm20, %v2812, 0
  %v2835 = vsel %vm20, %v2813, 0
  %v2838 = vsel %vm20, %v2814, 0
  %v2841 = vsel %vm20, %v2815, 0
  %v2844 = vsel %vm20, %v2816, 0
  %v2847 = vsel %vm20, %v2817, 0
  %v2850 = vsel %vm20, %v2818, 0
  %v2853 = vsel %vm20, %v2819, 0
  %v2856 = vsel %vm20, %v2820, 0
  %v2859 = vsel %vm20, %v2821, 0
  %v2862 = vsel %vm20, %v2822, 0
  %v2865 = vsel %vm20, %v2823, 0
  %v2868 = vsel %vm20, %v2824, 0
  %v2871 = vsel %vm20, %v2825, 0
  %v2874 = vsel %vm20, %v2826, 0
  %2876 = vmatpush.msra.mxu0 0.0
  %2877 = vmatpush.msra.mxu0 0.0
  %2878 = vmatpush.msra.mxu0 0.0
  %2879 = vmatpush.msra.mxu0 0.0
  %2880 = vmatpush.msra.mxu0 0.0
  %2881 = vmatpush.msra.mxu0 0.0
  %2882 = vmatpush.msra.mxu0 0.0
  %2883 = vmatpush.msra.mxu0 0.0
  %2884 = vmatpush.msra.mxu0 0.0
  %2885 = vmatpush.msra.mxu0 0.0
  %2886 = vmatpush.msra.mxu0 0.0
  %2887 = vmatpush.msra.mxu0 0.0
  %2888 = vmatpush.msra.mxu0 0.0
  %2889 = vmatpush.msra.mxu0 0.0
  %2890 = vmatpush.msra.mxu0 0.0
  %2891 = vmatpush.msra.mxu0 %v2827
  %2892 = vmatmul.f32.gmra.mxu0 %v2829
  %v2893 = vpop.f32.mrf.mxu0
  %v2894 = vadd.f32 0.0, %v2893
  %2895 = vmatmul.f32.gmra.mxu0 %v2832
  %v2896 = vpop.f32.mrf.mxu0
  %v2897 = vadd.f32 0.0, %v2896
  %2898 = vmatmul.f32.gmra.mxu0 %v2835
  %v2899 = vpop.f32.mrf.mxu0
  %v2900 = vadd.f32 0.0, %v2899
  %2901 = vmatmul.f32.gmra.mxu0 %v2838
  %v2902 = vpop.f32.mrf.mxu0
  %v2903 = vadd.f32 0.0, %v2902
  %2904 = vmatmul.f32.gmra.mxu0 %v2841
  %v2905 = vpop.f32.mrf.mxu0
  %v2906 = vadd.f32 0.0, %v2905
  %2907 = vmatmul.f32.gmra.mxu0 %v2844
  %v2908 = vpop.f32.mrf.mxu0
  %v2909 = vadd.f32 0.0, %v2908
  %2910 = vmatmul.f32.gmra.mxu0 %v2847
  %v2911 = vpop.f32.mrf.mxu0
  %v2912 = vadd.f32 0.0, %v2911
  %2913 = vmatmul.f32.gmra.mxu0 %v2850
  %v2914 = vpop.f32.mrf.mxu0
  %v2915 = vadd.f32 0.0, %v2914
  %2916 = vmatmul.f32.gmra.mxu0 %v2853
  %v2917 = vpop.f32.mrf.mxu0
  %v2918 = vadd.f32 0.0, %v2917
  %2919 = vmatmul.f32.gmra.mxu0 %v2856
  %v2920 = vpop.f32.mrf.mxu0
  %v2921 = vadd.f32 0.0, %v2920
  %2922 = vmatmul.f32.gmra.mxu0 %v2859
  %v2923 = vpop.f32.mrf.mxu0
  %v2924 = vadd.f32 0.0, %v2923
  %2925 = vmatmul.f32.gmra.mxu0 %v2862
  %v2926 = vpop.f32.mrf.mxu0
  %v2927 = vadd.f32 0.0, %v2926
  %2928 = vmatmul.f32.gmra.mxu0 %v2865
  %v2929 = vpop.f32.mrf.mxu0
  %v2930 = vadd.f32 0.0, %v2929
  %2931 = vmatmul.f32.gmra.mxu0 %v2868
  %v2932 = vpop.f32.mrf.mxu0
  %v2933 = vadd.f32 0.0, %v2932
  %2934 = vmatmul.f32.gmra.mxu0 %v2871
  %v2935 = vpop.f32.mrf.mxu0
  %v2936 = vadd.f32 0.0, %v2935
  %2937 = vmatmul.f32.gmra.mxu0 %v2874
  %v2938 = vpop.f32.mrf.mxu0
  %v2939 = vadd.f32 0.0, %v2938
  %2940 = vdwg.mxu0
  %v2941 = vadd.f32 %v2795, %v2894
  %v2942 = vadd.f32 %v2796, %v2897
  %v2943 = vadd.f32 %v2797, %v2900
  %v2944 = vadd.f32 %v2798, %v2903
  %v2945 = vadd.f32 %v2799, %v2906
  %v2946 = vadd.f32 %v2800, %v2909
  %v2947 = vadd.f32 %v2801, %v2912
  %v2948 = vadd.f32 %v2802, %v2915
  %v2949 = vadd.f32 %v2803, %v2918
  %v2950 = vadd.f32 %v2804, %v2921
  %v2951 = vadd.f32 %v2805, %v2924
  %v2952 = vadd.f32 %v2806, %v2927
  %v2953 = vadd.f32 %v2807, %v2930
  %v2954 = vadd.f32 %v2808, %v2933
  %v2955 = vadd.f32 %v2809, %v2936
  %v2956 = vadd.f32 %v2810, %v2939
  %v2957 = vld [vmem:[%s3 + $0xf8] sm:$0x1]
  %v2958 = vperm.slane %v2957, 0
  %v2959 = vadd.f32 %v2941, %v2958
  %v2960 = vadd.f32 %v2942, %v2958
  %v2961 = vadd.f32 %v2943, %v2958
  %v2962 = vadd.f32 %v2944, %v2958
  %v2963 = vadd.f32 %v2945, %v2958
  %v2964 = vadd.f32 %v2946, %v2958
  %v2965 = vadd.f32 %v2947, %v2958
  %v2966 = vadd.f32 %v2948, %v2958
  %v2967 = vadd.f32 %v2949, %v2958
  %v2968 = vadd.f32 %v2950, %v2958
  %v2969 = vadd.f32 %v2951, %v2958
  %v2970 = vadd.f32 %v2952, %v2958
  %v2971 = vadd.f32 %v2953, %v2958
  %v2972 = vadd.f32 %v2954, %v2958
  %v2973 = vadd.f32 %v2955, %v2958
  %v2974 = vadd.f32 %v2956, %v2958
  %v2975 = vmax.f32 %v2959, 0.0
  %v2976 = vmax.f32 %v2960, 0.0
  %v2977 = vmax.f32 %v2961, 0.0
  %v2978 = vmax.f32 %v2962, 0.0
  %v2979 = vmax.f32 %v2963, 0.0
  %v2980 = vmax.f32 %v2964, 0.0
  %v2981 = vmax.f32 %v2965, 0.0
  %v2982 = vmax.f32 %v2966, 0.0
  %v2983 = vmax.f32 %v2967, 0.0
  %v2984 = vmax.f32 %v2968, 0.0
  %v2985 = vmax.f32 %v2969, 0.0
  %v2986 = vmax.f32 %v2970, 0.0
  %v2987 = vmax.f32 %v2971, 0.0
  %v2988 = vmax.f32 %v2972, 0.0
  %v2989 = vmax.f32 %v2973, 0.0
  %v2990 = vmax.f32 %v2974, 0.0
  %2991 = vst.msk [vmem:[#allocation4] sm:$0xff] %vm20, 0.0
  %2992 = vst.msk [vmem:[#allocation4 + $0x8] sm:$0xff] %vm20, 0.0
  %2993 = vst.msk [vmem:[#allocation4 + $0x10] sm:$0x3] %vm40, 0.0
  %2994 = vst.msk [vmem:[#allocation4 + $0x18] sm:$0xff] %vm20, 0.0
  %2995 = vst.msk [vmem:[#allocation4 + $0x20] sm:$0xff] %vm20, 0.0
  %2996 = vst.msk [vmem:[#allocation4 + $0x28] sm:$0x3] %vm40, 0.0
  %2997 = vst.msk [vmem:[#allocation4 + $0x1b0] sm:$0xff] %vm20, 0.0
  %2998 = vst.msk [vmem:[#allocation4 + $0x1b8] sm:$0xff] %vm20, 0.0
  %2999 = vst.msk [vmem:[#allocation4 + $0x1c0] sm:$0x3] %vm40, 0.0
  %3000 = vst.msk [vmem:[#allocation4 + $0x1c8] sm:$0xff] %vm20, 0.0
  %3001 = vst.msk [vmem:[#allocation4 + $0x1d0] sm:$0xff] %vm20, 0.0
  %3002 = vst.msk [vmem:[#allocation4 + $0x1d8] sm:$0x3] %vm40, 0.0
  %s3003 = scalar_lea.vmem [#allocation4], 384
  %3004 = vst.msk [vmem:[%s3003] sm:$0xff] %vm20, 0.0
  %3005 = vst.msk [vmem:[%s3003 + $0x8] sm:$0xff] %vm20, 0.0
  %3006 = vst.msk [vmem:[%s3003 + $0x10] sm:$0x3] %vm40, 0.0
  %3007 = vst.msk [vmem:[%s3003 + $0x18] sm:$0xff] %vm20, 0.0
  %3008 = vst.msk [vmem:[%s3003 + $0x20] sm:$0xff] %vm20, 0.0
  %3009 = vst.msk [vmem:[%s3003 + $0x28] sm:$0x3] %vm40, 0.0
  %3010 = vst.msk [vmem:[%s3003 + $0x1b0] sm:$0xff] %vm20, 0.0
  %3011 = vst.msk [vmem:[%s3003 + $0x1b8] sm:$0xff] %vm20, 0.0
  %3012 = vst.msk [vmem:[%s3003 + $0x1c0] sm:$0x3] %vm40, 0.0
  %3013 = vst.msk [vmem:[%s3003 + $0x1c8] sm:$0xff] %vm20, 0.0
  %3014 = vst.msk [vmem:[%s3003 + $0x1d0] sm:$0xff] %vm20, 0.0
  %3015 = vst.msk [vmem:[%s3003 + $0x1d8] sm:$0x3] %vm40, 0.0
  %s3016 = scalar_lea.vmem [#allocation4], 48
  %3017 = vst.msk [vmem:[%s3016] sm:$0x3] %vm40, 0.0
  %3018 = vst.msk [vmem:[%s3016 + $0x18] sm:$0x3] %vm40, 0.0
  %3019 = vst.msk [vmem:[%s3016 + $0x30] sm:$0x3] %vm40, 0.0
  %3020 = vst.msk [vmem:[%s3016 + $0x48] sm:$0x3] %vm40, 0.0
  %3021 = vst.msk [vmem:[%s3016 + $0x60] sm:$0x3] %vm40, 0.0
  %3022 = vst.msk [vmem:[%s3016 + $0x78] sm:$0x3] %vm40, 0.0
  %3023 = vst.msk [vmem:[%s3016 + $0x90] sm:$0x3] %vm40, 0.0
  %3024 = vst.msk [vmem:[%s3016 + $0xa8] sm:$0x3] %vm40, 0.0
  %3025 = vst.msk [vmem:[%s3016 + $0xc0] sm:$0x3] %vm40, 0.0
  %3026 = vst.msk [vmem:[%s3016 + $0xd8] sm:$0x3] %vm40, 0.0
  %3027 = vst.msk [vmem:[%s3016 + $0xf0] sm:$0x3] %vm40, 0.0
  %3028 = vst.msk [vmem:[%s3016 + $0x108] sm:$0x3] %vm40, 0.0
  %3029 = vst.msk [vmem:[%s3016 + $0x120] sm:$0x3] %vm40, 0.0
  %3030 = vst.msk [vmem:[%s3016 + $0x138] sm:$0x3] %vm40, 0.0
  %3031 = vst.msk [vmem:[%s3016 + $0x1b0] sm:$0x3] %vm40, 0.0
  %3032 = vst.msk [vmem:[%s3016 + $0x1c8] sm:$0x3] %vm40, 0.0
  %3033 = vst.msk [vmem:[%s3016 + $0x1e0] sm:$0x3] %vm40, 0.0
  %3034 = vst.msk [vmem:[%s3016 + $0x1f8] sm:$0x3] %vm40, 0.0
  %3035 = vst.msk [vmem:[%s3016 + $0x210] sm:$0x3] %vm40, 0.0
  %3036 = vst.msk [vmem:[%s3016 + $0x228] sm:$0x3] %vm40, 0.0
  %3037 = vst.msk [vmem:[%s3016 + $0x240] sm:$0x3] %vm40, 0.0
  %3038 = vst.msk [vmem:[%s3016 + $0x258] sm:$0x3] %vm40, 0.0
  %3039 = vst.msk [vmem:[%s3016 + $0x270] sm:$0x3] %vm40, 0.0
  %3040 = vst.msk [vmem:[%s3016 + $0x288] sm:$0x3] %vm40, 0.0
  %3041 = vst.msk [vmem:[%s3016 + $0x2a0] sm:$0x3] %vm40, 0.0
  %3042 = vst.msk [vmem:[%s3016 + $0x2b8] sm:$0x3] %vm40, 0.0
  %3043 = vst.msk [vmem:[%s3016 + $0x2d0] sm:$0x3] %vm40, 0.0
  %3044 = vst.msk [vmem:[%s3016 + $0x2e8] sm:$0x3] %vm40, 0.0
  %3045 = vst.msk [vmem:[%s3016 + $0x10] sm:$0x3] %vm40, 0.0
  %3046 = vst.msk [vmem:[%s3016 + $0x28] sm:$0x3] %vm40, 0.0
  %3047 = vst.msk [vmem:[%s3016 + $0x40] sm:$0x3] %vm40, 0.0
  %3048 = vst.msk [vmem:[%s3016 + $0x58] sm:$0x3] %vm40, 0.0
  %3049 = vst.msk [vmem:[%s3016 + $0x70] sm:$0x3] %vm40, 0.0
  %3050 = vst.msk [vmem:[%s3016 + $0x88] sm:$0x3] %vm40, 0.0
  %3051 = vst.msk [vmem:[%s3016 + $0xa0] sm:$0x3] %vm40, 0.0
  %3052 = vst.msk [vmem:[%s3016 + $0xb8] sm:$0x3] %vm40, 0.0
  %3053 = vst.msk [vmem:[%s3016 + $0xd0] sm:$0x3] %vm40, 0.0
  %3054 = vst.msk [vmem:[%s3016 + $0xe8] sm:$0x3] %vm40, 0.0
  %3055 = vst.msk [vmem:[%s3016 + $0x100] sm:$0x3] %vm40, 0.0
  %3056 = vst.msk [vmem:[%s3016 + $0x118] sm:$0x3] %vm40, 0.0
  %3057 = vst.msk [vmem:[%s3016 + $0x130] sm:$0x3] %vm40, 0.0
  %3058 = vst.msk [vmem:[%s3016 + $0x148] sm:$0x3] %vm40, 0.0
  %3059 = vst.msk [vmem:[%s3016 + $0x1c0] sm:$0x3] %vm40, 0.0
  %3060 = vst.msk [vmem:[%s3016 + $0x1d8] sm:$0x3] %vm40, 0.0
  %3061 = vst.msk [vmem:[%s3016 + $0x1f0] sm:$0x3] %vm40, 0.0
  %3062 = vst.msk [vmem:[%s3016 + $0x208] sm:$0x3] %vm40, 0.0
  %3063 = vst.msk [vmem:[%s3016 + $0x220] sm:$0x3] %vm40, 0.0
  %3064 = vst.msk [vmem:[%s3016 + $0x238] sm:$0x3] %vm40, 0.0
  %3065 = vst.msk [vmem:[%s3016 + $0x250] sm:$0x3] %vm40, 0.0
  %3066 = vst.msk [vmem:[%s3016 + $0x268] sm:$0x3] %vm40, 0.0
  %3067 = vst.msk [vmem:[%s3016 + $0x280] sm:$0x3] %vm40, 0.0
  %3068 = vst.msk [vmem:[%s3016 + $0x298] sm:$0x3] %vm40, 0.0
  %3069 = vst.msk [vmem:[%s3016 + $0x2b0] sm:$0x3] %vm40, 0.0
  %3070 = vst.msk [vmem:[%s3016 + $0x2c8] sm:$0x3] %vm40, 0.0
  %3071 = vst.msk [vmem:[%s3016 + $0x2e0] sm:$0x3] %vm40, 0.0
  %3072 = vst.msk [vmem:[%s3016 + $0x2f8] sm:$0x3] %vm40, 0.0
  %v3073 = vld [vmem:[%s2] sm:$0xff]
  %v3074 = vld [vmem:[%s2 + $0x8] sm:$0x3f]
  %v3075 = vld [vmem:[%s2 + $0x10] sm:$0xff]
  %v3076 = vld [vmem:[%s2 + $0x18] sm:$0x3f]
  %v3077 = vld [vmem:[%s2 + $0x20] sm:$0xff]
  %v3078 = vld [vmem:[%s2 + $0x28] sm:$0x3f]
  %v3079 = vld [vmem:[%s2 + $0x30] sm:$0xff]
  %v3080 = vld [vmem:[%s2 + $0x38] sm:$0x3f]
  %v3081 = vld [vmem:[%s2 + $0x40] sm:$0xff]
  %v3082 = vld [vmem:[%s2 + $0x48] sm:$0x3f]
  %v3083 = vld [vmem:[%s2 + $0x50] sm:$0xff]
  %v3084 = vld [vmem:[%s2 + $0x58] sm:$0x3f]
  %v3085 = vld [vmem:[%s2 + $0x60] sm:$0xff]
  %v3086 = vld [vmem:[%s2 + $0x68] sm:$0x3f]
  %v3087 = vld [vmem:[%s2 + $0x70] sm:$0xff]
  %v3088 = vld [vmem:[%s2 + $0x78] sm:$0x3f]
  %v3089 = vld [vmem:[%s2 + $0x80] sm:$0xff]
  %v3090 = vld [vmem:[%s2 + $0x88] sm:$0x3f]
  %v3091 = vld [vmem:[%s2 + $0x90] sm:$0xff]
  %v3092 = vld [vmem:[%s2 + $0x98] sm:$0x3f]
  %v3093 = vld [vmem:[%s2 + $0xa0] sm:$0xff]
  %v3094 = vld [vmem:[%s2 + $0xa8] sm:$0x3f]
  %v3095 = vld [vmem:[%s2 + $0xb0] sm:$0xff]
  %v3096 = vld [vmem:[%s2 + $0xb8] sm:$0x3f]
  %v3097 = vld [vmem:[%s2 + $0xc0] sm:$0xff]
  %v3098 = vld [vmem:[%s2 + $0xc8] sm:$0x3f]
  %v3099 = vld [vmem:[%s2 + $0xd0] sm:$0xff]
  %v3100 = vld [vmem:[%s2 + $0xd8] sm:$0x3f]
  %v3101 = vld [vmem:[%s2 + $0xe0] sm:$0xff]
  %v3102 = vld [vmem:[%s2 + $0xe8] sm:$0x3f]
  %v3103 = vld [vmem:[%s2 + $0xf0] sm:$0xff]
  %v3104 = vld [vmem:[%s2 + $0xf8] sm:$0x3f]
  %v3105 = vld [vmem:[%s2 + $0x100] sm:$0xff]
  %v3106 = vld [vmem:[%s2 + $0x108] sm:$0x3f]
  %v3107 = vld [vmem:[%s2 + $0x110] sm:$0xff]
  %v3108 = vld [vmem:[%s2 + $0x118] sm:$0x3f]
  %v3109 = vld [vmem:[%s2 + $0x120] sm:$0xff]
  %v3110 = vld [vmem:[%s2 + $0x128] sm:$0x3f]
  %v3111 = vld [vmem:[%s2 + $0x130] sm:$0xff]
  %v3112 = vld [vmem:[%s2 + $0x138] sm:$0x3f]
  %v3113 = vld [vmem:[%s2 + $0x140] sm:$0xff]
  %v3114 = vld [vmem:[%s2 + $0x148] sm:$0x3f]
  %v3115 = vld [vmem:[%s2 + $0x150] sm:$0xff]
  %v3116 = vld [vmem:[%s2 + $0x158] sm:$0x3f]
  %v3117 = vld [vmem:[%s2 + $0x160] sm:$0xff]
  %v3118 = vld [vmem:[%s2 + $0x168] sm:$0x3f]
  %v3119 = vld [vmem:[%s2 + $0x170] sm:$0xff]
  %v3120 = vld [vmem:[%s2 + $0x178] sm:$0x3f]
  %v3121 = vld [vmem:[%s2 + $0x180] sm:$0xff]
  %v3122 = vld [vmem:[%s2 + $0x188] sm:$0x3f]
  %v3123 = vld [vmem:[%s2 + $0x190] sm:$0xff]
  %v3124 = vld [vmem:[%s2 + $0x198] sm:$0x3f]
  %v3125 = vld [vmem:[%s2 + $0x1a0] sm:$0xff]
  %v3126 = vld [vmem:[%s2 + $0x1a8] sm:$0x3f]
  %v3127 = vld [vmem:[%s2 + $0x1b0] sm:$0xff]
  %v3128 = vld [vmem:[%s2 + $0x1b8] sm:$0x3f]
  %3129 = vst.msk [vmem:[%s3016 + $0x2] sm:$0xff] %vm20, %v3073
  %3130 = vst.msk [vmem:[%s3016 + $0xa] sm:$0x3f] %vm22, %v3074
  %3131 = vst.msk [vmem:[%s3016 + $0x1a] sm:$0xff] %vm20, %v3075
  %3132 = vst.msk [vmem:[%s3016 + $0x22] sm:$0x3f] %vm22, %v3076
  %3133 = vst.msk [vmem:[%s3016 + $0x32] sm:$0xff] %vm20, %v3077
  %3134 = vst.msk [vmem:[%s3016 + $0x3a] sm:$0x3f] %vm22, %v3078
  %3135 = vst.msk [vmem:[%s3016 + $0x4a] sm:$0xff] %vm20, %v3079
  %3136 = vst.msk [vmem:[%s3016 + $0x52] sm:$0x3f] %vm22, %v3080
  %3137 = vst.msk [vmem:[%s3016 + $0x62] sm:$0xff] %vm20, %v3081
  %3138 = vst.msk [vmem:[%s3016 + $0x6a] sm:$0x3f] %vm22, %v3082
  %3139 = vst.msk [vmem:[%s3016 + $0x7a] sm:$0xff] %vm20, %v3083
  %3140 = vst.msk [vmem:[%s3016 + $0x82] sm:$0x3f] %vm22, %v3084
  %3141 = vst.msk [vmem:[%s3016 + $0x92] sm:$0xff] %vm20, %v3085
  %3142 = vst.msk [vmem:[%s3016 + $0x9a] sm:$0x3f] %vm22, %v3086
  %3143 = vst.msk [vmem:[%s3016 + $0xaa] sm:$0xff] %vm20, %v3087
  %3144 = vst.msk [vmem:[%s3016 + $0xb2] sm:$0x3f] %vm22, %v3088
  %3145 = vst.msk [vmem:[%s3016 + $0xc2] sm:$0xff] %vm20, %v3089
  %3146 = vst.msk [vmem:[%s3016 + $0xca] sm:$0x3f] %vm22, %v3090
  %3147 = vst.msk [vmem:[%s3016 + $0xda] sm:$0xff] %vm20, %v3091
  %3148 = vst.msk [vmem:[%s3016 + $0xe2] sm:$0x3f] %vm22, %v3092
  %3149 = vst.msk [vmem:[%s3016 + $0xf2] sm:$0xff] %vm20, %v3093
  %3150 = vst.msk [vmem:[%s3016 + $0xfa] sm:$0x3f] %vm22, %v3094
  %3151 = vst.msk [vmem:[%s3016 + $0x10a] sm:$0xff] %vm20, %v3095
  %3152 = vst.msk [vmem:[%s3016 + $0x112] sm:$0x3f] %vm22, %v3096
  %3153 = vst.msk [vmem:[%s3016 + $0x122] sm:$0xff] %vm20, %v3097
  %3154 = vst.msk [vmem:[%s3016 + $0x12a] sm:$0x3f] %vm22, %v3098
  %3155 = vst.msk [vmem:[%s3016 + $0x13a] sm:$0xff] %vm20, %v3099
  %3156 = vst.msk [vmem:[%s3016 + $0x142] sm:$0x3f] %vm22, %v3100
  %3157 = vst.msk [vmem:[%s3016 + $0x1b2] sm:$0xff] %vm20, %v3101
  %3158 = vst.msk [vmem:[%s3016 + $0x1ba] sm:$0x3f] %vm22, %v3102
  %3159 = vst.msk [vmem:[%s3016 + $0x1ca] sm:$0xff] %vm20, %v3103
  %3160 = vst.msk [vmem:[%s3016 + $0x1d2] sm:$0x3f] %vm22, %v3104
  %3161 = vst.msk [vmem:[%s3016 + $0x1e2] sm:$0xff] %vm20, %v3105
  %3162 = vst.msk [vmem:[%s3016 + $0x1ea] sm:$0x3f] %vm22, %v3106
  %3163 = vst.msk [vmem:[%s3016 + $0x1fa] sm:$0xff] %vm20, %v3107
  %3164 = vst.msk [vmem:[%s3016 + $0x202] sm:$0x3f] %vm22, %v3108
  %3165 = vst.msk [vmem:[%s3016 + $0x212] sm:$0xff] %vm20, %v3109
  %3166 = vst.msk [vmem:[%s3016 + $0x21a] sm:$0x3f] %vm22, %v3110
  %3167 = vst.msk [vmem:[%s3016 + $0x22a] sm:$0xff] %vm20, %v3111
  %3168 = vst.msk [vmem:[%s3016 + $0x232] sm:$0x3f] %vm22, %v3112
  %3169 = vst.msk [vmem:[%s3016 + $0x242] sm:$0xff] %vm20, %v3113
  %3170 = vst.msk [vmem:[%s3016 + $0x24a] sm:$0x3f] %vm22, %v3114
  %3171 = vst.msk [vmem:[%s3016 + $0x25a] sm:$0xff] %vm20, %v3115
  %3172 = vst.msk [vmem:[%s3016 + $0x262] sm:$0x3f] %vm22, %v3116
  %3173 = vst.msk [vmem:[%s3016 + $0x272] sm:$0xff] %vm20, %v3117
  %3174 = vst.msk [vmem:[%s3016 + $0x27a] sm:$0x3f] %vm22, %v3118
  %3175 = vst.msk [vmem:[%s3016 + $0x28a] sm:$0xff] %vm20, %v3119
  %3176 = vst.msk [vmem:[%s3016 + $0x292] sm:$0x3f] %vm22, %v3120
  %3177 = vst.msk [vmem:[%s3016 + $0x2a2] sm:$0xff] %vm20, %v3121
  %3178 = vst.msk [vmem:[%s3016 + $0x2aa] sm:$0x3f] %vm22, %v3122
  %3179 = vst.msk [vmem:[%s3016 + $0x2ba] sm:$0xff] %vm20, %v3123
  %3180 = vst.msk [vmem:[%s3016 + $0x2c2] sm:$0x3f] %vm22, %v3124
  %3181 = vst.msk [vmem:[%s3016 + $0x2d2] sm:$0xff] %vm20, %v3125
  %3182 = vst.msk [vmem:[%s3016 + $0x2da] sm:$0x3f] %vm22, %v3126
  %3183 = vst.msk [vmem:[%s3016 + $0x2ea] sm:$0xff] %vm20, %v3127
  %3184 = vst.msk [vmem:[%s3016 + $0x2f2] sm:$0x3f] %vm22, %v3128
  %v3185 = vld [vmem:[#allocation4] sm:$0xf]
  %v3186 = vld [vmem:[#allocation4 + $0x18] sm:$0xf]
  %v3187 = vld [vmem:[#allocation4 + $0x30] sm:$0xf]
  %v3188 = vld [vmem:[#allocation4 + $0x48] sm:$0xf]
  %v3189 = vld [vmem:[#allocation4 + $0x1b0] sm:$0xf]
  %v3190 = vld [vmem:[#allocation4 + $0x1c8] sm:$0xf]
  %v3191 = vld [vmem:[#allocation4 + $0x1e0] sm:$0xf]
  %v3192 = vld [vmem:[#allocation4 + $0x1f8] sm:$0xf]
  %v3193 = vld [vmem:[%s3 + $0x90] sm:$0xff]
  %v3194 = vld [vmem:[#allocation4 + $0x7] sm:$0xf]
  %v3195 = vld [vmem:[#allocation4 + $0x1f] sm:$0xf]
  %v3196 = vld [vmem:[#allocation4 + $0x37] sm:$0xf]
  %v3197 = vld [vmem:[#allocation4 + $0x4f] sm:$0xf]
  %v3198 = vld [vmem:[#allocation4 + $0x1b7] sm:$0xf]
  %v3199 = vld [vmem:[#allocation4 + $0x1cf] sm:$0xf]
  %v3200 = vld [vmem:[#allocation4 + $0x1e7] sm:$0xf]
  %v3201 = vld [vmem:[#allocation4 + $0x1ff] sm:$0xf]
  %v3202 = vld [vmem:[%s3 + $0x98] sm:$0xff]
  %3211 = vst [vmem:[#allocation1] ss:$2 sm:$0xff] %v3194
  %s3212 = scalar_lea.vmem [#allocation1], 1
  %3213 = vst [vmem:[%s3212] ss:$2 sm:$0xff] %v3195
  %s3214 = scalar_lea.vmem [#allocation1], 16
  %3215 = vst [vmem:[%s3214] ss:$2 sm:$0xff] %v3196
  %s3216 = scalar_lea.vmem [#allocation1], 17
  %3217 = vst [vmem:[%s3216] ss:$2 sm:$0xff] %v3197
  %s3218 = scalar_lea.vmem [#allocation1], 32
  %3219 = vst [vmem:[%s3218] ss:$2 sm:$0xff] %v3198
  %s3220 = scalar_lea.vmem [#allocation1], 33
  %3221 = vst [vmem:[%s3220] ss:$2 sm:$0xff] %v3199
  %s3222 = scalar_lea.vmem [#allocation1], 48
  %3223 = vst [vmem:[%s3222] ss:$2 sm:$0xff] %v3200
  %s3224 = scalar_lea.vmem [#allocation1], 49
  %3225 = vst [vmem:[%s3224] ss:$2 sm:$0xff] %v3201
  %v3226 = vld.sshfl [vmem:[#allocation1] sm:$0xff pattern:$0x75316420]
  %v3227 = vld.sshfl [vmem:[#allocation1 + $0x10] sm:$0xff pattern:$0x75316420]
  %v3228 = vld.sshfl [vmem:[#allocation1 + $0x20] sm:$0xff pattern:$0x75316420]
  %v3229 = vld.sshfl [vmem:[#allocation1 + $0x30] sm:$0xff pattern:$0x75316420]
  %v3230 = vsel %vm20, %v3226, 0
  %v3232 = vsel %vm20, %v3227, 0
  %v3234 = vsel %vm20, %v3228, 0
  %v3236 = vsel %vm20, %v3229, 0
  %3238 = vmatpush.msra.mxu0 0.0
  %3239 = vmatpush.msra.mxu0 0.0
  %3240 = vmatpush.msra.mxu0 0.0
  %3241 = vmatpush.msra.mxu0 0.0
  %3242 = vmatpush.msra.mxu0 0.0
  %3243 = vmatpush.msra.mxu0 0.0
  %3244 = vmatpush.msra.mxu0 0.0
  %3245 = vmatpush.msra.mxu0 0.0
  %3246 = vmatpush.msra.mxu0 0.0
  %3247 = vmatpush.msra.mxu0 0.0
  %3248 = vmatpush.msra.mxu0 0.0
  %3249 = vmatpush.msra.mxu0 0.0
  %3250 = vmatpush.msra.mxu0 0.0
  %3251 = vmatpush.msra.mxu0 0.0
  %3252 = vmatpush.msra.mxu0 0.0
  %3253 = vmatpush.msra.mxu0 %v3202
  %3254 = vmatmul.f32.gmra.mxu0 %v3230
  %v3255 = vpop.f32.mrf.mxu0
  %v3256 = vadd.f32 0.0, %v3255
  %3257 = vmatmul.f32.gmra.mxu0 %v3232
  %v3258 = vpop.f32.mrf.mxu0
  %v3259 = vadd.f32 0.0, %v3258
  %3260 = vmatmul.f32.gmra.mxu0 %v3234
  %v3261 = vpop.f32.mrf.mxu0
  %v3262 = vadd.f32 0.0, %v3261
  %3263 = vmatmul.f32.gmra.mxu0 %v3236
  %v3264 = vpop.f32.mrf.mxu0
  %v3265 = vadd.f32 0.0, %v3264
  %3266 = vdwg.mxu0
  %3275 = vst [vmem:[#allocation1] ss:$2 sm:$0xff] %v3185
  %s3276 = scalar_lea.vmem [#allocation1], 1
  %3277 = vst [vmem:[%s3276] ss:$2 sm:$0xff] %v3186
  %s3278 = scalar_lea.vmem [#allocation1], 16
  %3279 = vst [vmem:[%s3278] ss:$2 sm:$0xff] %v3187
  %s3280 = scalar_lea.vmem [#allocation1], 17
  %3281 = vst [vmem:[%s3280] ss:$2 sm:$0xff] %v3188
  %s3282 = scalar_lea.vmem [#allocation1], 32
  %3283 = vst [vmem:[%s3282] ss:$2 sm:$0xff] %v3189
  %s3284 = scalar_lea.vmem [#allocation1], 33
  %3285 = vst [vmem:[%s3284] ss:$2 sm:$0xff] %v3190
  %s3286 = scalar_lea.vmem [#allocation1], 48
  %3287 = vst [vmem:[%s3286] ss:$2 sm:$0xff] %v3191
  %s3288 = scalar_lea.vmem [#allocation1], 49
  %3289 = vst [vmem:[%s3288] ss:$2 sm:$0xff] %v3192
  %v3290 = vld.sshfl [vmem:[#allocation1] sm:$0xff pattern:$0x75316420]
  %v3291 = vld.sshfl [vmem:[#allocation1 + $0x10] sm:$0xff pattern:$0x75316420]
  %v3292 = vld.sshfl [vmem:[#allocation1 + $0x20] sm:$0xff pattern:$0x75316420]
  %v3293 = vld.sshfl [vmem:[#allocation1 + $0x30] sm:$0xff pattern:$0x75316420]
  %v3294 = vsel %vm20, %v3290, 0
  %v3296 = vsel %vm20, %v3291, 0
  %v3298 = vsel %vm20, %v3292, 0
  %v3300 = vsel %vm20, %v3293, 0
  %3302 = vmatpush.msra.mxu0 0.0
  %3303 = vmatpush.msra.mxu0 0.0
  %3304 = vmatpush.msra.mxu0 0.0
  %3305 = vmatpush.msra.mxu0 0.0
  %3306 = vmatpush.msra.mxu0 0.0
  %3307 = vmatpush.msra.mxu0 0.0
  %3308 = vmatpush.msra.mxu0 0.0
  %3309 = vmatpush.msra.mxu0 0.0
  %3310 = vmatpush.msra.mxu0 0.0
  %3311 = vmatpush.msra.mxu0 0.0
  %3312 = vmatpush.msra.mxu0 0.0
  %3313 = vmatpush.msra.mxu0 0.0
  %3314 = vmatpush.msra.mxu0 0.0
  %3315 = vmatpush.msra.mxu0 0.0
  %3316 = vmatpush.msra.mxu0 0.0
  %3317 = vmatpush.msra.mxu0 %v3193
  %3318 = vmatmul.f32.gmra.mxu0 %v3294
  %v3319 = vpop.f32.mrf.mxu0
  %v3320 = vadd.f32 %v3256, %v3319
  %3321 = vmatmul.f32.gmra.mxu0 %v3296
  %v3322 = vpop.f32.mrf.mxu0
  %v3323 = vadd.f32 %v3259, %v3322
  %3324 = vmatmul.f32.gmra.mxu0 %v3298
  %v3325 = vpop.f32.mrf.mxu0
  %v3326 = vadd.f32 %v3262, %v3325
  %3327 = vmatmul.f32.gmra.mxu0 %v3300
  %v3328 = vpop.f32.mrf.mxu0
  %v3329 = vadd.f32 %v3265, %v3328
  %3330 = vdwg.mxu0
  %v3331 = vld [vmem:[#allocation4 + $0xe] sm:$0xf]
  %v3332 = vld [vmem:[#allocation4 + $0x26] sm:$0xf]
  %v3333 = vld [vmem:[#allocation4 + $0x3e] sm:$0xf]
  %v3334 = vld [vmem:[#allocation4 + $0x56] sm:$0xf]
  %v3335 = vld [vmem:[#allocation4 + $0x1be] sm:$0xf]
  %v3336 = vld [vmem:[#allocation4 + $0x1d6] sm:$0xf]
  %v3337 = vld [vmem:[#allocation4 + $0x1ee] sm:$0xf]
  %v3338 = vld [vmem:[#allocation4 + $0x206] sm:$0xf]
  %v3339 = vld [vmem:[%s3 + $0xa0] sm:$0xff]
  %3348 = vst [vmem:[#allocation1] ss:$2 sm:$0xff] %v3331
  %s3349 = scalar_lea.vmem [#allocation1], 1
  %3350 = vst [vmem:[%s3349] ss:$2 sm:$0xff] %v3332
  %s3351 = scalar_lea.vmem [#allocation1], 16
  %3352 = vst [vmem:[%s3351] ss:$2 sm:$0xff] %v3333
  %s3353 = scalar_lea.vmem [#allocation1], 17
  %3354 = vst [vmem:[%s3353] ss:$2 sm:$0xff] %v3334
  %s3355 = scalar_lea.vmem [#allocation1], 32
  %3356 = vst [vmem:[%s3355] ss:$2 sm:$0xff] %v3335
  %s3357 = scalar_lea.vmem [#allocation1], 33
  %3358 = vst [vmem:[%s3357] ss:$2 sm:$0xff] %v3336
  %s3359 = scalar_lea.vmem [#allocation1], 48
  %3360 = vst [vmem:[%s3359] ss:$2 sm:$0xff] %v3337
  %s3361 = scalar_lea.vmem [#allocation1], 49
  %3362 = vst [vmem:[%s3361] ss:$2 sm:$0xff] %v3338
  %v3363 = vld.sshfl [vmem:[#allocation1] sm:$0xff pattern:$0x75316420]
  %v3364 = vld.sshfl [vmem:[#allocation1 + $0x10] sm:$0xff pattern:$0x75316420]
  %v3365 = vld.sshfl [vmem:[#allocation1 + $0x20] sm:$0xff pattern:$0x75316420]
  %v3366 = vld.sshfl [vmem:[#allocation1 + $0x30] sm:$0xff pattern:$0x75316420]
  %v3367 = vsel %vm20, %v3363, 0
  %v3369 = vsel %vm20, %v3364, 0
  %v3371 = vsel %vm20, %v3365, 0
  %v3373 = vsel %vm20, %v3366, 0
  %3375 = vmatpush.msra.mxu0 0.0
  %3376 = vmatpush.msra.mxu0 0.0
  %3377 = vmatpush.msra.mxu0 0.0
  %3378 = vmatpush.msra.mxu0 0.0
  %3379 = vmatpush.msra.mxu0 0.0
  %3380 = vmatpush.msra.mxu0 0.0
  %3381 = vmatpush.msra.mxu0 0.0
  %3382 = vmatpush.msra.mxu0 0.0
  %3383 = vmatpush.msra.mxu0 0.0
  %3384 = vmatpush.msra.mxu0 0.0
  %3385 = vmatpush.msra.mxu0 0.0
  %3386 = vmatpush.msra.mxu0 0.0
  %3387 = vmatpush.msra.mxu0 0.0
  %3388 = vmatpush.msra.mxu0 0.0
  %3389 = vmatpush.msra.mxu0 0.0
  %3390 = vmatpush.msra.mxu0 %v3339
  %3391 = vmatmul.f32.gmra.mxu0 %v3367
  %v3392 = vpop.f32.mrf.mxu0
  %v3393 = vadd.f32 0.0, %v3392
  %3394 = vmatmul.f32.gmra.mxu0 %v3369
  %v3395 = vpop.f32.mrf.mxu0
  %v3396 = vadd.f32 0.0, %v3395
  %3397 = vmatmul.f32.gmra.mxu0 %v3371
  %v3398 = vpop.f32.mrf.mxu0
  %v3399 = vadd.f32 0.0, %v3398
  %3400 = vmatmul.f32.gmra.mxu0 %v3373
  %v3401 = vpop.f32.mrf.mxu0
  %v3402 = vadd.f32 0.0, %v3401
  %3403 = vdwg.mxu0
  %v3404 = vadd.f32 %v3320, %v3393
  %v3405 = vadd.f32 %v3323, %v3396
  %v3406 = vadd.f32 %v3326, %v3399
  %v3407 = vadd.f32 %v3329, %v3402
  %s3408 = scalar_lea.vmem [#allocation4], 168
  %v3409 = vld [vmem:[%s3408] sm:$0xf]
  %v3410 = vld [vmem:[%s3408 + $0x18] sm:$0xf]
  %v3411 = vld [vmem:[%s3408 + $0x30] sm:$0xf]
  %v3412 = vld [vmem:[%s3408 + $0x48] sm:$0xf]
  %v3413 = vld [vmem:[%s3408 + $0x1b0] sm:$0xf]
  %v3414 = vld [vmem:[%s3408 + $0x1c8] sm:$0xf]
  %v3415 = vld [vmem:[%s3408 + $0x1e0] sm:$0xf]
  %v3416 = vld [vmem:[%s3408 + $0x1f8] sm:$0xf]
  %v3417 = vld [vmem:[%s3 + $0xa8] sm:$0xff]
  %3426 = vst [vmem:[#allocation1] ss:$2 sm:$0xff] %v3409
  %s3427 = scalar_lea.vmem [#allocation1], 1
  %3428 = vst [vmem:[%s3427] ss:$2 sm:$0xff] %v3410
  %s3429 = scalar_lea.vmem [#allocation1], 16
  %3430 = vst [vmem:[%s3429] ss:$2 sm:$0xff] %v3411
  %s3431 = scalar_lea.vmem [#allocation1], 17
  %3432 = vst [vmem:[%s3431] ss:$2 sm:$0xff] %v3412
  %s3433 = scalar_lea.vmem [#allocation1], 32
  %3434 = vst [vmem:[%s3433] ss:$2 sm:$0xff] %v3413
  %s3435 = scalar_lea.vmem [#allocation1], 33
  %3436 = vst [vmem:[%s3435] ss:$2 sm:$0xff] %v3414
  %s3437 = scalar_lea.vmem [#allocation1], 48
  %3438 = vst [vmem:[%s3437] ss:$2 sm:$0xff] %v3415
  %s3439 = scalar_lea.vmem [#allocation1], 49
  %3440 = vst [vmem:[%s3439] ss:$2 sm:$0xff] %v3416
  %v3441 = vld.sshfl [vmem:[#allocation1] sm:$0xff pattern:$0x75316420]
  %v3442 = vld.sshfl [vmem:[#allocation1 + $0x10] sm:$0xff pattern:$0x75316420]
  %v3443 = vld.sshfl [vmem:[#allocation1 + $0x20] sm:$0xff pattern:$0x75316420]
  %v3444 = vld.sshfl [vmem:[#allocation1 + $0x30] sm:$0xff pattern:$0x75316420]
  %v3445 = vsel %vm20, %v3441, 0
  %v3447 = vsel %vm20, %v3442, 0
  %v3449 = vsel %vm20, %v3443, 0
  %v3451 = vsel %vm20, %v3444, 0
  %3453 = vmatpush.msra.mxu0 0.0
  %3454 = vmatpush.msra.mxu0 0.0
  %3455 = vmatpush.msra.mxu0 0.0
  %3456 = vmatpush.msra.mxu0 0.0
  %3457 = vmatpush.msra.mxu0 0.0
  %3458 = vmatpush.msra.mxu0 0.0
  %3459 = vmatpush.msra.mxu0 0.0
  %3460 = vmatpush.msra.mxu0 0.0
  %3461 = vmatpush.msra.mxu0 0.0
  %3462 = vmatpush.msra.mxu0 0.0
  %3463 = vmatpush.msra.mxu0 0.0
  %3464 = vmatpush.msra.mxu0 0.0
  %3465 = vmatpush.msra.mxu0 0.0
  %3466 = vmatpush.msra.mxu0 0.0
  %3467 = vmatpush.msra.mxu0 0.0
  %3468 = vmatpush.msra.mxu0 %v3417
  %3469 = vmatmul.f32.gmra.mxu0 %v3445
  %v3470 = vpop.f32.mrf.mxu0
  %v3471 = vadd.f32 0.0, %v3470
  %3472 = vmatmul.f32.gmra.mxu0 %v3447
  %v3473 = vpop.f32.mrf.mxu0
  %v3474 = vadd.f32 0.0, %v3473
  %3475 = vmatmul.f32.gmra.mxu0 %v3449
  %v3476 = vpop.f32.mrf.mxu0
  %v3477 = vadd.f32 0.0, %v3476
  %3478 = vmatmul.f32.gmra.mxu0 %v3451
  %v3479 = vpop.f32.mrf.mxu0
  %v3480 = vadd.f32 0.0, %v3479
  %3481 = vdwg.mxu0
  %v3482 = vadd.f32 %v3404, %v3471
  %v3483 = vadd.f32 %v3405, %v3474
  %v3484 = vadd.f32 %v3406, %v3477
  %v3485 = vadd.f32 %v3407, %v3480
  %v3486 = vld [vmem:[%s3408 + $0x7] sm:$0xf]
  %v3487 = vld [vmem:[%s3408 + $0x1f] sm:$0xf]
  %v3488 = vld [vmem:[%s3408 + $0x37] sm:$0xf]
  %v3489 = vld [vmem:[%s3408 + $0x4f] sm:$0xf]
  %v3490 = vld [vmem:[%s3408 + $0x1b7] sm:$0xf]
  %v3491 = vld [vmem:[%s3408 + $0x1cf] sm:$0xf]
  %v3492 = vld [vmem:[%s3408 + $0x1e7] sm:$0xf]
  %v3493 = vld [vmem:[%s3408 + $0x1ff] sm:$0xf]
  %v3494 = vld [vmem:[%s3 + $0xb0] sm:$0xff]
  %3503 = vst [vmem:[#allocation1] ss:$2 sm:$0xff] %v3486
  %s3504 = scalar_lea.vmem [#allocation1], 1
  %3505 = vst [vmem:[%s3504] ss:$2 sm:$0xff] %v3487
  %s3506 = scalar_lea.vmem [#allocation1], 16
  %3507 = vst [vmem:[%s3506] ss:$2 sm:$0xff] %v3488
  %s3508 = scalar_lea.vmem [#allocation1], 17
  %3509 = vst [vmem:[%s3508] ss:$2 sm:$0xff] %v3489
  %s3510 = scalar_lea.vmem [#allocation1], 32
  %3511 = vst [vmem:[%s3510] ss:$2 sm:$0xff] %v3490
  %s3512 = scalar_lea.vmem [#allocation1], 33
  %3513 = vst [vmem:[%s3512] ss:$2 sm:$0xff] %v3491
  %s3514 = scalar_lea.vmem [#allocation1], 48
  %3515 = vst [vmem:[%s3514] ss:$2 sm:$0xff] %v3492
  %s3516 = scalar_lea.vmem [#allocation1], 49
  %3517 = vst [vmem:[%s3516] ss:$2 sm:$0xff] %v3493
  %v3518 = vld.sshfl [vmem:[#allocation1] sm:$0xff pattern:$0x75316420]
  %v3519 = vld.sshfl [vmem:[#allocation1 + $0x10] sm:$0xff pattern:$0x75316420]
  %v3520 = vld.sshfl [vmem:[#allocation1 + $0x20] sm:$0xff pattern:$0x75316420]
  %v3521 = vld.sshfl [vmem:[#allocation1 + $0x30] sm:$0xff pattern:$0x75316420]
  %v3522 = vsel %vm20, %v3518, 0
  %v3524 = vsel %vm20, %v3519, 0
  %v3526 = vsel %vm20, %v3520, 0
  %v3528 = vsel %vm20, %v3521, 0
  %3530 = vmatpush.msra.mxu0 0.0
  %3531 = vmatpush.msra.mxu0 0.0
  %3532 = vmatpush.msra.mxu0 0.0
  %3533 = vmatpush.msra.mxu0 0.0
  %3534 = vmatpush.msra.mxu0 0.0
  %3535 = vmatpush.msra.mxu0 0.0
  %3536 = vmatpush.msra.mxu0 0.0
  %3537 = vmatpush.msra.mxu0 0.0
  %3538 = vmatpush.msra.mxu0 0.0
  %3539 = vmatpush.msra.mxu0 0.0
  %3540 = vmatpush.msra.mxu0 0.0
  %3541 = vmatpush.msra.mxu0 0.0
  %3542 = vmatpush.msra.mxu0 0.0
  %3543 = vmatpush.msra.mxu0 0.0
  %3544 = vmatpush.msra.mxu0 0.0
  %3545 = vmatpush.msra.mxu0 %v3494
  %3546 = vmatmul.f32.gmra.mxu0 %v3522
  %v3547 = vpop.f32.mrf.mxu0
  %v3548 = vadd.f32 0.0, %v3547
  %3549 = vmatmul.f32.gmra.mxu0 %v3524
  %v3550 = vpop.f32.mrf.mxu0
  %v3551 = vadd.f32 0.0, %v3550
  %3552 = vmatmul.f32.gmra.mxu0 %v3526
  %v3553 = vpop.f32.mrf.mxu0
  %v3554 = vadd.f32 0.0, %v3553
  %3555 = vmatmul.f32.gmra.mxu0 %v3528
  %v3556 = vpop.f32.mrf.mxu0
  %v3557 = vadd.f32 0.0, %v3556
  %3558 = vdwg.mxu0
  %v3559 = vadd.f32 %v3482, %v3548
  %v3560 = vadd.f32 %v3483, %v3551
  %v3561 = vadd.f32 %v3484, %v3554
  %v3562 = vadd.f32 %v3485, %v3557
  %v3563 = vld [vmem:[%s3408 + $0xe] sm:$0xf]
  %v3564 = vld [vmem:[%s3408 + $0x26] sm:$0xf]
  %v3565 = vld [vmem:[%s3408 + $0x3e] sm:$0xf]
  %v3566 = vld [vmem:[%s3408 + $0x56] sm:$0xf]
  %v3567 = vld [vmem:[%s3408 + $0x1be] sm:$0xf]
  %v3568 = vld [vmem:[%s3408 + $0x1d6] sm:$0xf]
  %v3569 = vld [vmem:[%s3408 + $0x1ee] sm:$0xf]
  %v3570 = vld [vmem:[%s3408 + $0x206] sm:$0xf]
  %v3571 = vld [vmem:[%s3 + $0xb8] sm:$0xff]
  %3580 = vst [vmem:[#allocation1] ss:$2 sm:$0xff] %v3563
  %s3581 = scalar_lea.vmem [#allocation1], 1
  %3582 = vst [vmem:[%s3581] ss:$2 sm:$0xff] %v3564
  %s3583 = scalar_lea.vmem [#allocation1], 16
  %3584 = vst [vmem:[%s3583] ss:$2 sm:$0xff] %v3565
  %s3585 = scalar_lea.vmem [#allocation1], 17
  %3586 = vst [vmem:[%s3585] ss:$2 sm:$0xff] %v3566
  %s3587 = scalar_lea.vmem [#allocation1], 32
  %3588 = vst [vmem:[%s3587] ss:$2 sm:$0xff] %v3567
  %s3589 = scalar_lea.vmem [#allocation1], 33
  %3590 = vst [vmem:[%s3589] ss:$2 sm:$0xff] %v3568
  %s3591 = scalar_lea.vmem [#allocation1], 48
  %3592 = vst [vmem:[%s3591] ss:$2 sm:$0xff] %v3569
  %s3593 = scalar_lea.vmem [#allocation1], 49
  %3594 = vst [vmem:[%s3593] ss:$2 sm:$0xff] %v3570
  %v3595 = vld.sshfl [vmem:[#allocation1] sm:$0xff pattern:$0x75316420]
  %v3596 = vld.sshfl [vmem:[#allocation1 + $0x10] sm:$0xff pattern:$0x75316420]
  %v3597 = vld.sshfl [vmem:[#allocation1 + $0x20] sm:$0xff pattern:$0x75316420]
  %v3598 = vld.sshfl [vmem:[#allocation1 + $0x30] sm:$0xff pattern:$0x75316420]
  %v3599 = vsel %vm20, %v3595, 0
  %v3601 = vsel %vm20, %v3596, 0
  %v3603 = vsel %vm20, %v3597, 0
  %v3605 = vsel %vm20, %v3598, 0
  %3607 = vmatpush.msra.mxu0 0.0
  %3608 = vmatpush.msra.mxu0 0.0
  %3609 = vmatpush.msra.mxu0 0.0
  %3610 = vmatpush.msra.mxu0 0.0
  %3611 = vmatpush.msra.mxu0 0.0
  %3612 = vmatpush.msra.mxu0 0.0
  %3613 = vmatpush.msra.mxu0 0.0
  %3614 = vmatpush.msra.mxu0 0.0
  %3615 = vmatpush.msra.mxu0 0.0
  %3616 = vmatpush.msra.mxu0 0.0
  %3617 = vmatpush.msra.mxu0 0.0
  %3618 = vmatpush.msra.mxu0 0.0
  %3619 = vmatpush.msra.mxu0 0.0
  %3620 = vmatpush.msra.mxu0 0.0
  %3621 = vmatpush.msra.mxu0 0.0
  %3622 = vmatpush.msra.mxu0 %v3571
  %3623 = vmatmul.f32.gmra.mxu0 %v3599
  %v3624 = vpop.f32.mrf.mxu0
  %v3625 = vadd.f32 0.0, %v3624
  %3626 = vmatmul.f32.gmra.mxu0 %v3601
  %v3627 = vpop.f32.mrf.mxu0
  %v3628 = vadd.f32 0.0, %v3627
  %3629 = vmatmul.f32.gmra.mxu0 %v3603
  %v3630 = vpop.f32.mrf.mxu0
  %v3631 = vadd.f32 0.0, %v3630
  %3632 = vmatmul.f32.gmra.mxu0 %v3605
  %v3633 = vpop.f32.mrf.mxu0
  %v3634 = vadd.f32 0.0, %v3633
  %3635 = vdwg.mxu0
  %v3636 = vadd.f32 %v3559, %v3625
  %v3637 = vadd.f32 %v3560, %v3628
  %v3638 = vadd.f32 %v3561, %v3631
  %v3639 = vadd.f32 %v3562, %v3634
  %s3640 = scalar_lea.vmem [#allocation4], 336
  %v3641 = vld [vmem:[%s3640] sm:$0xf]
  %v3642 = vld [vmem:[%s3640 + $0x18] sm:$0xf]
  %v3643 = vld [vmem:[%s3640 + $0x30] sm:$0xf]
  %v3644 = vld [vmem:[%s3640 + $0x48] sm:$0xf]
  %v3645 = vld [vmem:[%s3640 + $0x1b0] sm:$0xf]
  %v3646 = vld [vmem:[%s3640 + $0x1c8] sm:$0xf]
  %v3647 = vld [vmem:[%s3640 + $0x1e0] sm:$0xf]
  %v3648 = vld [vmem:[%s3640 + $0x1f8] sm:$0xf]
  %v3649 = vld [vmem:[%s3 + $0xc0] sm:$0xff]
  %3658 = vst [vmem:[#allocation1] ss:$2 sm:$0xff] %v3641
  %s3659 = scalar_lea.vmem [#allocation1], 1
  %3660 = vst [vmem:[%s3659] ss:$2 sm:$0xff] %v3642
  %s3661 = scalar_lea.vmem [#allocation1], 16
  %3662 = vst [vmem:[%s3661] ss:$2 sm:$0xff] %v3643
  %s3663 = scalar_lea.vmem [#allocation1], 17
  %3664 = vst [vmem:[%s3663] ss:$2 sm:$0xff] %v3644
  %s3665 = scalar_lea.vmem [#allocation1], 32
  %3666 = vst [vmem:[%s3665] ss:$2 sm:$0xff] %v3645
  %s3667 = scalar_lea.vmem [#allocation1], 33
  %3668 = vst [vmem:[%s3667] ss:$2 sm:$0xff] %v3646
  %s3669 = scalar_lea.vmem [#allocation1], 48
  %3670 = vst [vmem:[%s3669] ss:$2 sm:$0xff] %v3647
  %s3671 = scalar_lea.vmem [#allocation1], 49
  %3672 = vst [vmem:[%s3671] ss:$2 sm:$0xff] %v3648
  %v3673 = vld.sshfl [vmem:[#allocation1] sm:$0xff pattern:$0x75316420]
  %v3674 = vld.sshfl [vmem:[#allocation1 + $0x10] sm:$0xff pattern:$0x75316420]
  %v3675 = vld.sshfl [vmem:[#allocation1 + $0x20] sm:$0xff pattern:$0x75316420]
  %v3676 = vld.sshfl [vmem:[#allocation1 + $0x30] sm:$0xff pattern:$0x75316420]
  %v3677 = vsel %vm20, %v3673, 0
  %v3679 = vsel %vm20, %v3674, 0
  %v3681 = vsel %vm20, %v3675, 0
  %v3683 = vsel %vm20, %v3676, 0
  %3685 = vmatpush.msra.mxu0 0.0
  %3686 = vmatpush.msra.mxu0 0.0
  %3687 = vmatpush.msra.mxu0 0.0
  %3688 = vmatpush.msra.mxu0 0.0
  %3689 = vmatpush.msra.mxu0 0.0
  %3690 = vmatpush.msra.mxu0 0.0
  %3691 = vmatpush.msra.mxu0 0.0
  %3692 = vmatpush.msra.mxu0 0.0
  %3693 = vmatpush.msra.mxu0 0.0
  %3694 = vmatpush.msra.mxu0 0.0
  %3695 = vmatpush.msra.mxu0 0.0
  %3696 = vmatpush.msra.mxu0 0.0
  %3697 = vmatpush.msra.mxu0 0.0
  %3698 = vmatpush.msra.mxu0 0.0
  %3699 = vmatpush.msra.mxu0 0.0
  %3700 = vmatpush.msra.mxu0 %v3649
  %3701 = vmatmul.f32.gmra.mxu0 %v3677
  %v3702 = vpop.f32.mrf.mxu0
  %v3703 = vadd.f32 0.0, %v3702
  %3704 = vmatmul.f32.gmra.mxu0 %v3679
  %v3705 = vpop.f32.mrf.mxu0
  %v3706 = vadd.f32 0.0, %v3705
  %3707 = vmatmul.f32.gmra.mxu0 %v3681
  %v3708 = vpop.f32.mrf.mxu0
  %v3709 = vadd.f32 0.0, %v3708
  %3710 = vmatmul.f32.gmra.mxu0 %v3683
  %v3711 = vpop.f32.mrf.mxu0
  %v3712 = vadd.f32 0.0, %v3711
  %3713 = vdwg.mxu0
  %v3714 = vadd.f32 %v3636, %v3703
  %v3715 = vadd.f32 %v3637, %v3706
  %v3716 = vadd.f32 %v3638, %v3709
  %v3717 = vadd.f32 %v3639, %v3712
  %v3718 = vld [vmem:[%s3640 + $0x7] sm:$0xf]
  %v3719 = vld [vmem:[%s3640 + $0x1f] sm:$0xf]
  %v3720 = vld [vmem:[%s3640 + $0x37] sm:$0xf]
  %v3721 = vld [vmem:[%s3640 + $0x4f] sm:$0xf]
  %v3722 = vld [vmem:[%s3640 + $0x1b7] sm:$0xf]
  %v3723 = vld [vmem:[%s3640 + $0x1cf] sm:$0xf]
  %v3724 = vld [vmem:[%s3640 + $0x1e7] sm:$0xf]
  %v3725 = vld [vmem:[%s3640 + $0x1ff] sm:$0xf]
  %v3726 = vld [vmem:[%s3 + $0xc8] sm:$0xff]
  %3735 = vst [vmem:[#allocation1] ss:$2 sm:$0xff] %v3718
  %s3736 = scalar_lea.vmem [#allocation1], 1
  %3737 = vst [vmem:[%s3736] ss:$2 sm:$0xff] %v3719
  %s3738 = scalar_lea.vmem [#allocation1], 16
  %3739 = vst [vmem:[%s3738] ss:$2 sm:$0xff] %v3720
  %s3740 = scalar_lea.vmem [#allocation1], 17
  %3741 = vst [vmem:[%s3740] ss:$2 sm:$0xff] %v3721
  %s3742 = scalar_lea.vmem [#allocation1], 32
  %3743 = vst [vmem:[%s3742] ss:$2 sm:$0xff] %v3722
  %s3744 = scalar_lea.vmem [#allocation1], 33
  %3745 = vst [vmem:[%s3744] ss:$2 sm:$0xff] %v3723
  %s3746 = scalar_lea.vmem [#allocation1], 48
  %3747 = vst [vmem:[%s3746] ss:$2 sm:$0xff] %v3724
  %s3748 = scalar_lea.vmem [#allocation1], 49
  %3749 = vst [vmem:[%s3748] ss:$2 sm:$0xff] %v3725
  %v3750 = vld.sshfl [vmem:[#allocation1] sm:$0xff pattern:$0x75316420]
  %v3751 = vld.sshfl [vmem:[#allocation1 + $0x10] sm:$0xff pattern:$0x75316420]
  %v3752 = vld.sshfl [vmem:[#allocation1 + $0x20] sm:$0xff pattern:$0x75316420]
  %v3753 = vld.sshfl [vmem:[#allocation1 + $0x30] sm:$0xff pattern:$0x75316420]
  %v3754 = vsel %vm20, %v3750, 0
  %v3756 = vsel %vm20, %v3751, 0
  %v3758 = vsel %vm20, %v3752, 0
  %v3760 = vsel %vm20, %v3753, 0
  %3762 = vmatpush.msra.mxu0 0.0
  %3763 = vmatpush.msra.mxu0 0.0
  %3764 = vmatpush.msra.mxu0 0.0
  %3765 = vmatpush.msra.mxu0 0.0
  %3766 = vmatpush.msra.mxu0 0.0
  %3767 = vmatpush.msra.mxu0 0.0
  %3768 = vmatpush.msra.mxu0 0.0
  %3769 = vmatpush.msra.mxu0 0.0
  %3770 = vmatpush.msra.mxu0 0.0
  %3771 = vmatpush.msra.mxu0 0.0
  %3772 = vmatpush.msra.mxu0 0.0
  %3773 = vmatpush.msra.mxu0 0.0
  %3774 = vmatpush.msra.mxu0 0.0
  %3775 = vmatpush.msra.mxu0 0.0
  %3776 = vmatpush.msra.mxu0 0.0
  %3777 = vmatpush.msra.mxu0 %v3726
  %3778 = vmatmul.f32.gmra.mxu0 %v3754
  %v3779 = vpop.f32.mrf.mxu0
  %v3780 = vadd.f32 0.0, %v3779
  %3781 = vmatmul.f32.gmra.mxu0 %v3756
  %v3782 = vpop.f32.mrf.mxu0
  %v3783 = vadd.f32 0.0, %v3782
  %3784 = vmatmul.f32.gmra.mxu0 %v3758
  %v3785 = vpop.f32.mrf.mxu0
  %v3786 = vadd.f32 0.0, %v3785
  %3787 = vmatmul.f32.gmra.mxu0 %v3760
  %v3788 = vpop.f32.mrf.mxu0
  %v3789 = vadd.f32 0.0, %v3788
  %3790 = vdwg.mxu0
  %v3791 = vadd.f32 %v3714, %v3780
  %v3792 = vadd.f32 %v3715, %v3783
  %v3793 = vadd.f32 %v3716, %v3786
  %v3794 = vadd.f32 %v3717, %v3789
  %v3795 = vld [vmem:[%s3640 + $0xe] sm:$0xf]
  %v3796 = vld [vmem:[%s3640 + $0x26] sm:$0xf]
  %v3797 = vld [vmem:[%s3640 + $0x3e] sm:$0xf]
  %v3798 = vld [vmem:[%s3640 + $0x56] sm:$0xf]
  %v3799 = vld [vmem:[%s3640 + $0x1be] sm:$0xf]
  %v3800 = vld [vmem:[%s3640 + $0x1d6] sm:$0xf]
  %v3801 = vld [vmem:[%s3640 + $0x1ee] sm:$0xf]
  %v3802 = vld [vmem:[%s3640 + $0x206] sm:$0xf]
  %v3803 = vld [vmem:[%s3 + $0xd0] sm:$0xff]
  %3812 = vst [vmem:[#allocation1] ss:$2 sm:$0xff] %v3795
  %s3813 = scalar_lea.vmem [#allocation1], 1
  %3814 = vst [vmem:[%s3813] ss:$2 sm:$0xff] %v3796
  %s3815 = scalar_lea.vmem [#allocation1], 16
  %3816 = vst [vmem:[%s3815] ss:$2 sm:$0xff] %v3797
  %s3817 = scalar_lea.vmem [#allocation1], 17
  %3818 = vst [vmem:[%s3817] ss:$2 sm:$0xff] %v3798
  %s3819 = scalar_lea.vmem [#allocation1], 32
  %3820 = vst [vmem:[%s3819] ss:$2 sm:$0xff] %v3799
  %s3821 = scalar_lea.vmem [#allocation1], 33
  %3822 = vst [vmem:[%s3821] ss:$2 sm:$0xff] %v3800
  %s3823 = scalar_lea.vmem [#allocation1], 48
  %3824 = vst [vmem:[%s3823] ss:$2 sm:$0xff] %v3801
  %s3825 = scalar_lea.vmem [#allocation1], 49
  %3826 = vst [vmem:[%s3825] ss:$2 sm:$0xff] %v3802
  %v3827 = vld.sshfl [vmem:[#allocation1] sm:$0xff pattern:$0x75316420]
  %v3828 = vld.sshfl [vmem:[#allocation1 + $0x10] sm:$0xff pattern:$0x75316420]
  %v3829 = vld.sshfl [vmem:[#allocation1 + $0x20] sm:$0xff pattern:$0x75316420]
  %v3830 = vld.sshfl [vmem:[#allocation1 + $0x30] sm:$0xff pattern:$0x75316420]
  %v3831 = vsel %vm20, %v3827, 0
  %v3833 = vsel %vm20, %v3828, 0
  %v3835 = vsel %vm20, %v3829, 0
  %v3837 = vsel %vm20, %v3830, 0
  %3839 = vmatpush.msra.mxu0 0.0
  %3840 = vmatpush.msra.mxu0 0.0
  %3841 = vmatpush.msra.mxu0 0.0
  %3842 = vmatpush.msra.mxu0 0.0
  %3843 = vmatpush.msra.mxu0 0.0
  %3844 = vmatpush.msra.mxu0 0.0
  %3845 = vmatpush.msra.mxu0 0.0
  %3846 = vmatpush.msra.mxu0 0.0
  %3847 = vmatpush.msra.mxu0 0.0
  %3848 = vmatpush.msra.mxu0 0.0
  %3849 = vmatpush.msra.mxu0 0.0
  %3850 = vmatpush.msra.mxu0 0.0
  %3851 = vmatpush.msra.mxu0 0.0
  %3852 = vmatpush.msra.mxu0 0.0
  %3853 = vmatpush.msra.mxu0 0.0
  %3854 = vmatpush.msra.mxu0 %v3803
  %3855 = vmatmul.f32.gmra.mxu0 %v3831
  %v3856 = vpop.f32.mrf.mxu0
  %v3857 = vadd.f32 0.0, %v3856
  %3858 = vmatmul.f32.gmra.mxu0 %v3833
  %v3859 = vpop.f32.mrf.mxu0
  %v3860 = vadd.f32 0.0, %v3859
  %3861 = vmatmul.f32.gmra.mxu0 %v3835
  %v3862 = vpop.f32.mrf.mxu0
  %v3863 = vadd.f32 0.0, %v3862
  %3864 = vmatmul.f32.gmra.mxu0 %v3837
  %v3865 = vpop.f32.mrf.mxu0
  %v3866 = vadd.f32 0.0, %v3865
  %3867 = vdwg.mxu0
  %v3868 = vadd.f32 %v3791, %v3857
  %v3869 = vadd.f32 %v3792, %v3860
  %v3870 = vadd.f32 %v3793, %v3863
  %v3871 = vadd.f32 %v3794, %v3866
  %v3872 = vld [vmem:[%s3 + $0x100] sm:$0x1]
  %v3873 = vperm.slane %v3872, 0
  %v3874 = vadd.f32 %v3868, %v3873
  %v3875 = vadd.f32 %v3869, %v3873
  %v3876 = vadd.f32 %v3870, %v3873
  %v3877 = vadd.f32 %v3871, %v3873
  %v3878 = vmax.f32 %v3874, 0.0
  %v3879 = vmax.f32 %v3875, 0.0
  %v3880 = vmax.f32 %v3876, 0.0
  %v3881 = vmax.f32 %v3877, 0.0
  %v3882 = vld [vmem:[%s4] sm:$0x3]
  %v3883 = vadd.f32 %v1463, %v2975
  %v3884 = vadd.f32 %v1464, %v2976
  %v3885 = vadd.f32 %v1465, %v2977
  %v3886 = vadd.f32 %v1466, %v2978
  %v3887 = vadd.f32 %v1467, %v2979
  %v3888 = vadd.f32 %v1468, %v2980
  %v3889 = vadd.f32 %v1469, %v2981
  %v3890 = vadd.f32 %v1470, %v2982
  %v3891 = vadd.f32 %v1471, %v2983
  %v3892 = vadd.f32 %v1472, %v2984
  %v3893 = vadd.f32 %v1473, %v2985
  %v3894 = vadd.f32 %v1474, %v2986
  %v3895 = vadd.f32 %v1475, %v2987
  %v3896 = vadd.f32 %v1476, %v2988
  %v3897 = vadd.f32 %v1477, %v2989
  %v3898 = vadd.f32 %v1478, %v2990
  %3899 = vmatpush.msra.mxu0 %v3898
  %3900 = vmatpush.msra.mxu0 %v3897
  %3901 = vmatpush.msra.mxu0 %v3896
  %3902 = vmatpush.msra.mxu0 %v3895
  %3903 = vmatpush.msra.mxu0 %v3894
  %3904 = vmatpush.msra.mxu0 %v3893
  %3905 = vmatpush.msra.mxu0 %v3892
  %3906 = vmatpush.msra.mxu0 %v3891
  %3907 = vmatpush.msra.mxu0 %v3890
  %3908 = vmatpush.msra.mxu0 %v3889
  %3909 = vmatpush.msra.mxu0 %v3888
  %3910 = vmatpush.msra.mxu0 %v3887
  %3911 = vmatpush.msra.mxu0 %v3886
  %3912 = vmatpush.msra.mxu0 %v3885
  %3913 = vmatpush.msra.mxu0 %v3884
  %3914 = vmatpush.msra.mxu0 %v3883
  %3915 = vmatmul.f32.gmra.mxu0 %v3882
  %v3916 = vpop.f32.mrf.mxu0
  %v3917 = vadd.f32 0.0, %v3916
  %3918 = vdwg.mxu0
  %v3919 = vsel %vm40, %v3917, -inf
  %3920 = vmax.xlane.f32.xlu0 %v3919
  %v3921 = vpop.xlane.xlu0 %3920
  %v3922 = vsub.f32 %v3917, %v3921
  %v3923 = vmul.f32 %v3922, 1.442695
  %v3924 = vpow.pop %v3923
  %v3925 = vsel %vm40, %v3924, 0.0
  %3926 = vadd.xlane.f32.xlu0 %v3925
  %v3927 = vpop.xlane.xlu0 %3926
  %v3928 = vrcp.pop %v3927
  %v3929 = vmul.f32 %v3924, %v3928
  %v3930 = vld [vmem:[%s3 + $0x108] sm:$0x1]
  %v3931 = vld [vmem:[%s3 + $0xd8] sm:$0xff]
  %v3932 = vperm.slane %v3930, 0
  %v3934 = vsel %vm20, %v3929, 0
  %3936 = vmatpush.msra.mxu0 0.0
  %3937 = vmatpush.msra.mxu0 0.0
  %3938 = vmatpush.msra.mxu0 0.0
  %3939 = vmatpush.msra.mxu0 0.0
  %3940 = vmatpush.msra.mxu0 0.0
  %3941 = vmatpush.msra.mxu0 0.0
  %3942 = vmatpush.msra.mxu0 0.0
  %3943 = vmatpush.msra.mxu0 0.0
  %3944 = vmatpush.msra.mxu0 0.0
  %3945 = vmatpush.msra.mxu0 0.0
  %3946 = vmatpush.msra.mxu0 0.0
  %3947 = vmatpush.msra.mxu0 0.0
  %3948 = vmatpush.msra.mxu0 0.0
  %3949 = vmatpush.msra.mxu0 0.0
  %3950 = vmatpush.msra.mxu0 0.0
  %3951 = vmatpush.msra.mxu0 %v3931
  %3952 = vmatmul.f32.gmra.mxu0 %v3934
  %v3953 = vpop.f32.mrf.mxu0
  %v3954 = vadd.f32 %v3932, %v3953
  %3955 = vdwg.mxu0
  %v3956 = vxor.u32 %v3954, 2147483648
  %v3957 = vmul.f32 %v3956, 1.442695
  %v3958 = vpow.pop %v3957
  %v3959 = vadd.f32 %v3958, 1.0
  %v3960 = vrcp.pop %v3959
  %v3961 = vmul.f32 %v3959, %v3960
  %v3962 = vsub.f32 1.0, %v3961
  %v3963 = vmul.f32 %v3960, %v3962
  %v3964 = vadd.f32 %v3960, %v3963
  %vm3965 = vweird.f32 %v3959
  %vm3966 = vweird.f32 %v3960
  %vm3967 = vmor %vm3965, %vm3966
  %v3968 = vsel %vm3967, %v3960, %v3964
  %v3969 = vand.u32 2147483647, %v3959
  %vm3970 = vcmp.eq.f32.partialorder %v3969, 8.507059e+37
  %v3971 = vand.u32 %v3959, 2147483648
  %v3972 = vor.u32 1.1754944e-38, %v3971
  %v3973 = vsel %vm3970, %v3972, %v3968
  %v3974 = vmul.f32 1.0, %v3973
  %v3975 = vxor.u32 %v3930, 2147483648
  %v3976 = vmul.f32 %v3975, 1.442695
  %v3977 = vpow.pop %v3976
  %v3978 = vadd.f32 %v3977, 1.0
  %v3979 = vrcp.pop %v3978
  %v3980 = vmul.f32 %v3978, %v3979
  %v3981 = vsub.f32 1.0, %v3980
  %v3982 = vmul.f32 %v3979, %v3981
  %v3983 = vadd.f32 %v3979, %v3982
  %vm3984 = vweird.f32 %v3978
  %vm3985 = vweird.f32 %v3979
  %vm3986 = vmor %vm3984, %vm3985
  %v3987 = vsel %vm3986, %v3979, %v3983
  %v3988 = vand.u32 2147483647, %v3978
  %vm3989 = vcmp.eq.f32.partialorder %v3988, 8.507059e+37
  %v3990 = vand.u32 %v3978, 2147483648
  %v3991 = vor.u32 1.1754944e-38, %v3990
  %v3992 = vsel %vm3989, %v3991, %v3987
  %v3993 = vmul.f32 1.0, %v3992
  %v3994 = vld [vmem:[%s3 + $0x120] sm:$0xff]
  %v3995 = vld [vmem:[%s3 + $0x128] sm:$0xff]
  %v3996 = vld [vmem:[%s3 + $0x130] sm:$0xff]
  %v3997 = vld [vmem:[%s3 + $0x138] sm:$0xff]
  %v3998 = vld [vmem:[%s3 + $0x140] sm:$0xff]
  %v3999 = vld [vmem:[%s3 + $0x148] sm:$0xff]
  %v4000 = vld [vmem:[%s3 + $0x150] sm:$0xff]
  %v4001 = vld [vmem:[%s3 + $0x158] sm:$0xff]
  %v4002 = vld [vmem:[%s3 + $0x160] sm:$0xff]
  %v4003 = vld [vmem:[%s3 + $0x168] sm:$0xff]
  %v4004 = vld [vmem:[%s3 + $0x170] sm:$0xff]
  %v4005 = vld [vmem:[%s3 + $0x178] sm:$0xff]
  %v4006 = vld [vmem:[%s3 + $0x180] sm:$0xff]
  %v4007 = vld [vmem:[%s3 + $0x188] sm:$0xff]
  %v4008 = vld [vmem:[%s3 + $0x190] sm:$0xff]
  %v4009 = vld [vmem:[%s3 + $0x198] sm:$0xff]
  %vm4010 = vcmask 261120
  %v4012 = vsel %vm4010, %v3994, 0
  %v4015 = vsel %vm4010, %v3995, 0
  %v4018 = vsel %vm4010, %v3996, 0
  %v4021 = vsel %vm4010, %v3997, 0
  %v4024 = vsel %vm4010, %v3998, 0
  %v4027 = vsel %vm4010, %v3999, 0
  %v4030 = vsel %vm4010, %v4000, 0
  %v4033 = vsel %vm4010, %v4001, 0
  %v4036 = vsel %vm4010, %v4002, 0
  %v4039 = vsel %vm4010, %v4003, 0
  %v4042 = vsel %vm4010, %v4004, 0
  %v4045 = vsel %vm4010, %v4005, 0
  %v4048 = vsel %vm4010, %v4006, 0
  %v4051 = vsel %vm4010, %v4007, 0
  %v4054 = vsel %vm4010, %v4008, 0
  %v4057 = vsel %vm4010, %v4009, 0
  %4059 = vmatpush.msra.mxu0 0.0
  %4060 = vmatpush.msra.mxu0 0.0
  %4061 = vmatpush.msra.mxu0 0.0
  %4062 = vmatpush.msra.mxu0 0.0
  %4063 = vmatpush.msra.mxu0 0.0
  %4064 = vmatpush.msra.mxu0 0.0
  %4065 = vmatpush.msra.mxu0 0.0
  %4066 = vmatpush.msra.mxu0 0.0
  %4067 = vmatpush.msra.mxu0 0.0
  %4068 = vmatpush.msra.mxu0 0.0
  %4069 = vmatpush.msra.mxu0 0.0
  %4070 = vmatpush.msra.mxu0 0.0
  %4071 = vmatpush.msra.mxu0 %v3881
  %4072 = vmatpush.msra.mxu0 %v3880
  %4073 = vmatpush.msra.mxu0 %v3879
  %4074 = vmatpush.msra.mxu0 %v3878
  %4075 = vmatmul.f32.gmra.mxu0 %v4012
  %v4076 = vpop.f32.mrf.mxu0
  %v4077 = vadd.f32 0.0, %v4076
  %4078 = vmatmul.f32.gmra.mxu0 %v4015
  %v4079 = vpop.f32.mrf.mxu0
  %v4080 = vadd.f32 0.0, %v4079
  %4081 = vmatmul.f32.gmra.mxu0 %v4018
  %v4082 = vpop.f32.mrf.mxu0
  %v4083 = vadd.f32 0.0, %v4082
  %4084 = vmatmul.f32.gmra.mxu0 %v4021
  %v4085 = vpop.f32.mrf.mxu0
  %v4086 = vadd.f32 0.0, %v4085
  %4087 = vmatmul.f32.gmra.mxu0 %v4024
  %v4088 = vpop.f32.mrf.mxu0
  %v4089 = vadd.f32 0.0, %v4088
  %4090 = vmatmul.f32.gmra.mxu0 %v4027
  %v4091 = vpop.f32.mrf.mxu0
  %v4092 = vadd.f32 0.0, %v4091
  %4093 = vmatmul.f32.gmra.mxu0 %v4030
  %v4094 = vpop.f32.mrf.mxu0
  %v4095 = vadd.f32 0.0, %v4094
  %4096 = vmatmul.f32.gmra.mxu0 %v4033
  %v4097 = vpop.f32.mrf.mxu0
  %v4098 = vadd.f32 0.0, %v4097
  %4099 = vmatmul.f32.gmra.mxu0 %v4036
  %v4100 = vpop.f32.mrf.mxu0
  %v4101 = vadd.f32 0.0, %v4100
  %4102 = vmatmul.f32.gmra.mxu0 %v4039
  %v4103 = vpop.f32.mrf.mxu0
  %v4104 = vadd.f32 0.0, %v4103
  %4105 = vmatmul.f32.gmra.mxu0 %v4042
  %v4106 = vpop.f32.mrf.mxu0
  %v4107 = vadd.f32 0.0, %v4106
  %4108 = vmatmul.f32.gmra.mxu0 %v4045
  %v4109 = vpop.f32.mrf.mxu0
  %v4110 = vadd.f32 0.0, %v4109
  %4111 = vmatmul.f32.gmra.mxu0 %v4048
  %v4112 = vpop.f32.mrf.mxu0
  %v4113 = vadd.f32 0.0, %v4112
  %4114 = vmatmul.f32.gmra.mxu0 %v4051
  %v4115 = vpop.f32.mrf.mxu0
  %v4116 = vadd.f32 0.0, %v4115
  %4117 = vmatmul.f32.gmra.mxu0 %v4054
  %v4118 = vpop.f32.mrf.mxu0
  %v4119 = vadd.f32 0.0, %v4118
  %4120 = vmatmul.f32.gmra.mxu0 %v4057
  %v4121 = vpop.f32.mrf.mxu0
  %v4122 = vadd.f32 0.0, %v4121
  %4123 = vdwg.mxu0
  %v4124 = vadd.f32 %v2975, %v4077
  %v4125 = vadd.f32 %v2976, %v4080
  %v4126 = vadd.f32 %v2977, %v4083
  %v4127 = vadd.f32 %v2978, %v4086
  %v4128 = vadd.f32 %v2979, %v4089
  %v4129 = vadd.f32 %v2980, %v4092
  %v4130 = vadd.f32 %v2981, %v4095
  %v4131 = vadd.f32 %v2982, %v4098
  %v4132 = vadd.f32 %v2983, %v4101
  %v4133 = vadd.f32 %v2984, %v4104
  %v4134 = vadd.f32 %v2985, %v4107
  %v4135 = vadd.f32 %v2986, %v4110
  %v4136 = vadd.f32 %v2987, %v4113
  %v4137 = vadd.f32 %v2988, %v4116
  %v4138 = vadd.f32 %v2989, %v4119
  %v4139 = vadd.f32 %v2990, %v4122
  %v4140 = vld [vmem:[%s3 + $0xe0] sm:$0xff]
  %v4142 = vsel %vm20, %v4124, 0
  %v4145 = vsel %vm20, %v4125, 0
  %v4148 = vsel %vm20, %v4126, 0
  %v4151 = vsel %vm20, %v4127, 0
  %v4154 = vsel %vm20, %v4128, 0
  %v4157 = vsel %vm20, %v4129, 0
  %v4160 = vsel %vm20, %v4130, 0
  %v4163 = vsel %vm20, %v4131, 0
  %v4166 = vsel %vm20, %v4132, 0
  %v4169 = vsel %vm20, %v4133, 0
  %v4172 = vsel %vm20, %v4134, 0
  %v4175 = vsel %vm20, %v4135, 0
  %v4178 = vsel %vm20, %v4136, 0
  %v4181 = vsel %vm20, %v4137, 0
  %v4184 = vsel %vm20, %v4138, 0
  %v4187 = vsel %vm20, %v4139, 0
  %4189 = vmatpush.msra.mxu0 0.0
  %4190 = vmatpush.msra.mxu0 0.0
  %4191 = vmatpush.msra.mxu0 0.0
  %4192 = vmatpush.msra.mxu0 0.0
  %4193 = vmatpush.msra.mxu0 0.0
  %4194 = vmatpush.msra.mxu0 0.0
  %4195 = vmatpush.msra.mxu0 0.0
  %4196 = vmatpush.msra.mxu0 0.0
  %4197 = vmatpush.msra.mxu0 0.0
  %4198 = vmatpush.msra.mxu0 0.0
  %4199 = vmatpush.msra.mxu0 0.0
  %4200 = vmatpush.msra.mxu0 0.0
  %4201 = vmatpush.msra.mxu0 0.0
  %4202 = vmatpush.msra.mxu0 0.0
  %4203 = vmatpush.msra.mxu0 0.0
  %4204 = vmatpush.msra.mxu0 %v4140
  %4205 = vmatmul.f32.gmra.mxu0 %v4142
  %v4206 = vpop.f32.mrf.mxu0
  %v4207 = vadd.f32 0.0, %v4206
  %4208 = vmatmul.f32.gmra.mxu0 %v4145
  %v4209 = vpop.f32.mrf.mxu0
  %v4210 = vadd.f32 0.0, %v4209
  %4211 = vmatmul.f32.gmra.mxu0 %v4148
  %v4212 = vpop.f32.mrf.mxu0
  %v4213 = vadd.f32 0.0, %v4212
  %4214 = vmatmul.f32.gmra.mxu0 %v4151
  %v4215 = vpop.f32.mrf.mxu0
  %v4216 = vadd.f32 0.0, %v4215
  %4217 = vmatmul.f32.gmra.mxu0 %v4154
  %v4218 = vpop.f32.mrf.mxu0
  %v4219 = vadd.f32 0.0, %v4218
  %4220 = vmatmul.f32.gmra.mxu0 %v4157
  %v4221 = vpop.f32.mrf.mxu0
  %v4222 = vadd.f32 0.0, %v4221
  %4223 = vmatmul.f32.gmra.mxu0 %v4160
  %v4224 = vpop.f32.mrf.mxu0
  %v4225 = vadd.f32 0.0, %v4224
  %4226 = vmatmul.f32.gmra.mxu0 %v4163
  %v4227 = vpop.f32.mrf.mxu0
  %v4228 = vadd.f32 0.0, %v4227
  %4229 = vmatmul.f32.gmra.mxu0 %v4166
  %v4230 = vpop.f32.mrf.mxu0
  %v4231 = vadd.f32 0.0, %v4230
  %4232 = vmatmul.f32.gmra.mxu0 %v4169
  %v4233 = vpop.f32.mrf.mxu0
  %v4234 = vadd.f32 0.0, %v4233
  %4235 = vmatmul.f32.gmra.mxu0 %v4172
  %v4236 = vpop.f32.mrf.mxu0
  %v4237 = vadd.f32 0.0, %v4236
  %4238 = vmatmul.f32.gmra.mxu0 %v4175
  %v4239 = vpop.f32.mrf.mxu0
  %v4240 = vadd.f32 0.0, %v4239
  %4241 = vmatmul.f32.gmra.mxu0 %v4178
  %v4242 = vpop.f32.mrf.mxu0
  %v4243 = vadd.f32 0.0, %v4242
  %4244 = vmatmul.f32.gmra.mxu0 %v4181
  %v4245 = vpop.f32.mrf.mxu0
  %v4246 = vadd.f32 0.0, %v4245
  %4247 = vmatmul.f32.gmra.mxu0 %v4184
  %v4248 = vpop.f32.mrf.mxu0
  %v4249 = vadd.f32 0.0, %v4248
  %4250 = vmatmul.f32.gmra.mxu0 %v4187
  %v4251 = vpop.f32.mrf.mxu0
  %v4252 = vadd.f32 0.0, %v4251
  %4253 = vdwg.mxu0
  %v4254 = vld [vmem:[%s4 + $0x8] sm:$0xff]
  %v4255 = vld [vmem:[%s4 + $0x10] sm:$0xff]
  %v4256 = vld [vmem:[%s4 + $0x18] sm:$0x3]
  %v4257 = vld [vmem:[%s3 + $0x110] sm:$0x1]
  %v4258 = vperm.slane %v4257, 0
  %4259 = vmatpush.msra.mxu0 %v4252
  %4260 = vmatpush.msra.mxu0 %v4249
  %4261 = vmatpush.msra.mxu0 %v4246
  %4262 = vmatpush.msra.mxu0 %v4243
  %4263 = vmatpush.msra.mxu0 %v4240
  %4264 = vmatpush.msra.mxu0 %v4237
  %4265 = vmatpush.msra.mxu0 %v4234
  %4266 = vmatpush.msra.mxu0 %v4231
  %4267 = vmatpush.msra.mxu0 %v4228
  %4268 = vmatpush.msra.mxu0 %v4225
  %4269 = vmatpush.msra.mxu0 %v4222
  %4270 = vmatpush.msra.mxu0 %v4219
  %4271 = vmatpush.msra.mxu0 %v4216
  %4272 = vmatpush.msra.mxu0 %v4213
  %4273 = vmatpush.msra.mxu0 %v4210
  %4274 = vmatpush.msra.mxu0 %v4207
  %4275 = vmatmul.f32.gmra.mxu0 %v4254
  %v4276 = vpop.f32.mrf.mxu0
  %v4277 = vadd.f32 %v4258, %v4276
  %4278 = vmatmul.f32.gmra.mxu0 %v4255
  %v4279 = vpop.f32.mrf.mxu0
  %v4280 = vadd.f32 %v4258, %v4279
  %4281 = vmatmul.f32.gmra.mxu0 %v4256
  %v4282 = vpop.f32.mrf.mxu0
  %v4283 = vadd.f32 %v4258, %v4282
  %4284 = vdwg.mxu0
  %v4285 = vld [vmem:[%s3 + $0xe8] sm:$0xff]
  %v4286 = vld [vmem:[%s3 + $0x118] sm:$0x1]
  %v4287 = vperm.slane %v4286, 0
  %v4289 = vsel %vm20, %v4277, 0
  %v4292 = vsel %vm20, %v4280, 0
  %v4295 = vsel %vm20, %v4283, 0
  %4297 = vmatpush.msra.mxu0 0.0
  %4298 = vmatpush.msra.mxu0 0.0
  %4299 = vmatpush.msra.mxu0 0.0
  %4300 = vmatpush.msra.mxu0 0.0
  %4301 = vmatpush.msra.mxu0 0.0
  %4302 = vmatpush.msra.mxu0 0.0
  %4303 = vmatpush.msra.mxu0 0.0
  %4304 = vmatpush.msra.mxu0 0.0
  %4305 = vmatpush.msra.mxu0 0.0
  %4306 = vmatpush.msra.mxu0 0.0
  %4307 = vmatpush.msra.mxu0 0.0
  %4308 = vmatpush.msra.mxu0 0.0
  %4309 = vmatpush.msra.mxu0 0.0
  %4310 = vmatpush.msra.mxu0 0.0
  %4311 = vmatpush.msra.mxu0 0.0
  %4312 = vmatpush.msra.mxu0 %v4285
  %4313 = vmatmul.f32.gmra.mxu0 %v4289
  %v4314 = vpop.f32.mrf.mxu0
  %v4315 = vadd.f32 %v4287, %v4314
  %4316 = vmatmul.f32.gmra.mxu0 %v4292
  %v4317 = vpop.f32.mrf.mxu0
  %v4318 = vadd.f32 %v4287, %v4317
  %4319 = vmatmul.f32.gmra.mxu0 %v4295
  %v4320 = vpop.f32.mrf.mxu0
  %v4321 = vadd.f32 %v4287, %v4320
  %4322 = vdwg.mxu0
  %v4326 = vrot.slane %v4315, 1
  %v4327 = vrot.slane %v4315, 2
  %v4328 = vrot.slane %v4315, 3
  %v4329 = vrot.slane %v4315, 4
  %v4330 = vrot.slane %v4315, 5
  %v4331 = vrot.slane %v4315, 6
  %v4332 = vrot.slane %v4315, 7
  %v4333 = vrot.slane %v4318, 1
  %v4334 = vrot.slane %v4318, 2
  %v4335 = vrot.slane %v4318, 3
  %v4336 = vrot.slane %v4318, 4
  %v4337 = vrot.slane %v4318, 5
  %v4338 = vrot.slane %v4318, 6
  %v4339 = vrot.slane %v4318, 7
  %v4340 = vrot.slane %v4321, 1
  %v4356 = vlaneseq
  %v4357 = vshrl.u32 %v4356, 7
  %v4358 = vadd.s32 %v4357, 8
  %vm4359 = vcmp.eq.s32.totalorder %v4357, 4
  %vm4360 = vcmp.eq.s32.totalorder %v4358, 4
  %v4362 = vrot.slane %v3974, 1
  %v4363 = vperm.slane %v3974, 0
  %v4364 = vperm.slane %v4362, 0
  %v4367 = vperm.slane %v3993, 0
  %v4368 = vsel %vm4359, %v4363, %v4367
  %v4369 = vsel %vm4360, %v4363, %v4367
  %v4370 = vsel %vm4359, %v4364, %v4367
  %v4371 = vsel %vm4360, %v4364, %v4367
  %v4374 = vrot.slane %v4368, 1
  %v4375 = vrot.slane %v4368, 2
  %v4376 = vrot.slane %v4368, 3
  %v4377 = vrot.slane %v4368, 4
  %v4378 = vrot.slane %v4368, 5
  %v4379 = vrot.slane %v4368, 6
  %v4380 = vrot.slane %v4368, 7
  %v4381 = vrot.slane %v4370, 1
  %v4382 = vrot.slane %v4370, 2
  %v4383 = vrot.slane %v4370, 3
  %v4384 = vrot.slane %v4370, 4
  %v4385 = vrot.slane %v4370, 5
  %v4386 = vrot.slane %v4370, 6
  %v4387 = vrot.slane %v4370, 7
  %v4402 = vadd.f32 %v4315, %v4368
  %v4403 = vadd.f32 %v4326, %v4374
  %v4404 = vadd.f32 %v4327, %v4375
  %v4405 = vadd.f32 %v4328, %v4376
  %v4406 = vadd.f32 %v4329, %v4377
  %v4407 = vadd.f32 %v4330, %v4378
  %v4408 = vadd.f32 %v4331, %v4379
  %v4409 = vadd.f32 %v4332, %v4380
  %v4410 = vadd.f32 %v4318, %v4369
  %v4411 = vadd.f32 %v4333, %v4370
  %v4412 = vadd.f32 %v4334, %v4381
  %v4413 = vadd.f32 %v4335, %v4382
  %v4414 = vadd.f32 %v4336, %v4383
  %v4415 = vadd.f32 %v4337, %v4384
  %v4416 = vadd.f32 %v4338, %v4385
  %v4417 = vadd.f32 %v4339, %v4386
  %v4418 = vadd.f32 %v4321, %v4387
  %v4419 = vadd.f32 %v4340, %v4371
  %v4420 = vxor.u32 %v4402, 2147483648
  %v4421 = vxor.u32 %v4403, 2147483648
  %v4422 = vxor.u32 %v4404, 2147483648
  %v4423 = vxor.u32 %v4405, 2147483648
  %v4424 = vxor.u32 %v4406, 2147483648
  %v4425 = vxor.u32 %v4407, 2147483648
  %v4426 = vxor.u32 %v4408, 2147483648
  %v4427 = vxor.u32 %v4409, 2147483648
  %v4428 = vxor.u32 %v4410, 2147483648
  %v4429 = vxor.u32 %v4411, 2147483648
  %v4430 = vxor.u32 %v4412, 2147483648
  %v4431 = vxor.u32 %v4413, 2147483648
  %v4432 = vxor.u32 %v4414, 2147483648
  %v4433 = vxor.u32 %v4415, 2147483648
  %v4434 = vxor.u32 %v4416, 2147483648
  %v4435 = vxor.u32 %v4417, 2147483648
  %v4436 = vxor.u32 %v4418, 2147483648
  %v4437 = vxor.u32 %v4419, 2147483648
  %v4438 = vmul.f32 %v4420, 1.442695
  %v4439 = vpow.pop %v4438
  %v4440 = vmul.f32 %v4421, 1.442695
  %v4441 = vpow.pop %v4440
  %v4442 = vmul.f32 %v4422, 1.442695
  %v4443 = vpow.pop %v4442
  %v4444 = vmul.f32 %v4423, 1.442695
  %v4445 = vpow.pop %v4444
  %v4446 = vmul.f32 %v4424, 1.442695
  %v4447 = vpow.pop %v4446
  %v4448 = vmul.f32 %v4425, 1.442695
  %v4449 = vpow.pop %v4448
  %v4450 = vmul.f32 %v4426, 1.442695
  %v4451 = vpow.pop %v4450
  %v4452 = vmul.f32 %v4427, 1.442695
  %v4453 = vpow.pop %v4452
  %v4454 = vmul.f32 %v4428, 1.442695
  %v4455 = vpow.pop %v4454
  %v4456 = vmul.f32 %v4429, 1.442695
  %v4457 = vpow.pop %v4456
  %v4458 = vmul.f32 %v4430, 1.442695
  %v4459 = vpow.pop %v4458
  %v4460 = vmul.f32 %v4431, 1.442695
  %v4461 = vpow.pop %v4460
  %v4462 = vmul.f32 %v4432, 1.442695
  %v4463 = vpow.pop %v4462
  %v4464 = vmul.f32 %v4433, 1.442695
  %v4465 = vpow.pop %v4464
  %v4466 = vmul.f32 %v4434, 1.442695
  %v4467 = vpow.pop %v4466
  %v4468 = vmul.f32 %v4435, 1.442695
  %v4469 = vpow.pop %v4468
  %v4470 = vmul.f32 %v4436, 1.442695
  %v4471 = vpow.pop %v4470
  %v4472 = vmul.f32 %v4437, 1.442695
  %v4473 = vpow.pop %v4472
  %v4474 = vadd.f32 %v4439, 1.0
  %v4475 = vadd.f32 %v4441, 1.0
  %v4476 = vadd.f32 %v4443, 1.0
  %v4477 = vadd.f32 %v4445, 1.0
  %v4478 = vadd.f32 %v4447, 1.0
  %v4479 = vadd.f32 %v4449, 1.0
  %v4480 = vadd.f32 %v4451, 1.0
  %v4481 = vadd.f32 %v4453, 1.0
  %v4482 = vadd.f32 %v4455, 1.0
  %v4483 = vadd.f32 %v4457, 1.0
  %v4484 = vadd.f32 %v4459, 1.0
  %v4485 = vadd.f32 %v4461, 1.0
  %v4486 = vadd.f32 %v4463, 1.0
  %v4487 = vadd.f32 %v4465, 1.0
  %v4488 = vadd.f32 %v4467, 1.0
  %v4489 = vadd.f32 %v4469, 1.0
  %v4490 = vadd.f32 %v4471, 1.0
  %v4491 = vadd.f32 %v4473, 1.0
  %v4492 = vrcp.pop %v4474
  %v4493 = vmul.f32 %v4474, %v4492
  %v4494 = vsub.f32 1.0, %v4493
  %v4495 = vmul.f32 %v4492, %v4494
  %v4496 = vadd.f32 %v4492, %v4495
  %vm4497 = vweird.f32 %v4474
  %vm4498 = vweird.f32 %v4492
  %vm4499 = vmor %vm4497, %vm4498
  %v4500 = vsel %vm4499, %v4492, %v4496
  %v4501 = vand.u32 2147483647, %v4474
  %vm4502 = vcmp.eq.f32.partialorder %v4501, 8.507059e+37
  %v4503 = vand.u32 %v4474, 2147483648
  %v4504 = vor.u32 1.1754944e-38, %v4503
  %v4505 = vsel %vm4502, %v4504, %v4500
  %v4506 = vmul.f32 1.0, %v4505
  %v4507 = vrcp.pop %v4475
  %v4508 = vmul.f32 %v4475, %v4507
  %v4509 = vsub.f32 1.0, %v4508
  %v4510 = vmul.f32 %v4507, %v4509
  %v4511 = vadd.f32 %v4507, %v4510
  %vm4512 = vweird.f32 %v4475
  %vm4513 = vweird.f32 %v4507
  %vm4514 = vmor %vm4512, %vm4513
  %v4515 = vsel %vm4514, %v4507, %v4511
  %v4516 = vand.u32 2147483647, %v4475
  %vm4517 = vcmp.eq.f32.partialorder %v4516, 8.507059e+37
  %v4518 = vand.u32 %v4475, 2147483648
  %v4519 = vor.u32 1.1754944e-38, %v4518
  %v4520 = vsel %vm4517, %v4519, %v4515
  %v4521 = vmul.f32 1.0, %v4520
  %v4522 = vrcp.pop %v4476
  %v4523 = vmul.f32 %v4476, %v4522
  %v4524 = vsub.f32 1.0, %v4523
  %v4525 = vmul.f32 %v4522, %v4524
  %v4526 = vadd.f32 %v4522, %v4525
  %vm4527 = vweird.f32 %v4476
  %vm4528 = vweird.f32 %v4522
  %vm4529 = vmor %vm4527, %vm4528
  %v4530 = vsel %vm4529, %v4522, %v4526
  %v4531 = vand.u32 2147483647, %v4476
  %vm4532 = vcmp.eq.f32.partialorder %v4531, 8.507059e+37
  %v4533 = vand.u32 %v4476, 2147483648
  %v4534 = vor.u32 1.1754944e-38, %v4533
  %v4535 = vsel %vm4532, %v4534, %v4530
  %v4536 = vmul.f32 1.0, %v4535
  %v4537 = vrcp.pop %v4477
  %v4538 = vmul.f32 %v4477, %v4537
  %v4539 = vsub.f32 1.0, %v4538
  %v4540 = vmul.f32 %v4537, %v4539
  %v4541 = vadd.f32 %v4537, %v4540
  %vm4542 = vweird.f32 %v4477
  %vm4543 = vweird.f32 %v4537
  %vm4544 = vmor %vm4542, %vm4543
  %v4545 = vsel %vm4544, %v4537, %v4541
  %v4546 = vand.u32 2147483647, %v4477
  %vm4547 = vcmp.eq.f32.partialorder %v4546, 8.507059e+37
  %v4548 = vand.u32 %v4477, 2147483648
  %v4549 = vor.u32 1.1754944e-38, %v4548
  %v4550 = vsel %vm4547, %v4549, %v4545
  %v4551 = vmul.f32 1.0, %v4550
  %v4552 = vrcp.pop %v4478
  %v4553 = vmul.f32 %v4478, %v4552
  %v4554 = vsub.f32 1.0, %v4553
  %v4555 = vmul.f32 %v4552, %v4554
  %v4556 = vadd.f32 %v4552, %v4555
  %vm4557 = vweird.f32 %v4478
  %vm4558 = vweird.f32 %v4552
  %vm4559 = vmor %vm4557, %vm4558
  %v4560 = vsel %vm4559, %v4552, %v4556
  %v4561 = vand.u32 2147483647, %v4478
  %vm4562 = vcmp.eq.f32.partialorder %v4561, 8.507059e+37
  %v4563 = vand.u32 %v4478, 2147483648
  %v4564 = vor.u32 1.1754944e-38, %v4563
  %v4565 = vsel %vm4562, %v4564, %v4560
  %v4566 = vmul.f32 1.0, %v4565
  %v4567 = vrcp.pop %v4479
  %v4568 = vmul.f32 %v4479, %v4567
  %v4569 = vsub.f32 1.0, %v4568
  %v4570 = vmul.f32 %v4567, %v4569
  %v4571 = vadd.f32 %v4567, %v4570
  %vm4572 = vweird.f32 %v4479
  %vm4573 = vweird.f32 %v4567
  %vm4574 = vmor %vm4572, %vm4573
  %v4575 = vsel %vm4574, %v4567, %v4571
  %v4576 = vand.u32 2147483647, %v4479
  %vm4577 = vcmp.eq.f32.partialorder %v4576, 8.507059e+37
  %v4578 = vand.u32 %v4479, 2147483648
  %v4579 = vor.u32 1.1754944e-38, %v4578
  %v4580 = vsel %vm4577, %v4579, %v4575
  %v4581 = vmul.f32 1.0, %v4580
  %v4582 = vrcp.pop %v4480
  %v4583 = vmul.f32 %v4480, %v4582
  %v4584 = vsub.f32 1.0, %v4583
  %v4585 = vmul.f32 %v4582, %v4584
  %v4586 = vadd.f32 %v4582, %v4585
  %vm4587 = vweird.f32 %v4480
  %vm4588 = vweird.f32 %v4582
  %vm4589 = vmor %vm4587, %vm4588
  %v4590 = vsel %vm4589, %v4582, %v4586
  %v4591 = vand.u32 2147483647, %v4480
  %vm4592 = vcmp.eq.f32.partialorder %v4591, 8.507059e+37
  %v4593 = vand.u32 %v4480, 2147483648
  %v4594 = vor.u32 1.1754944e-38, %v4593
  %v4595 = vsel %vm4592, %v4594, %v4590
  %v4596 = vmul.f32 1.0, %v4595
  %v4597 = vrcp.pop %v4481
  %v4598 = vmul.f32 %v4481, %v4597
  %v4599 = vsub.f32 1.0, %v4598
  %v4600 = vmul.f32 %v4597, %v4599
  %v4601 = vadd.f32 %v4597, %v4600
  %vm4602 = vweird.f32 %v4481
  %vm4603 = vweird.f32 %v4597
  %vm4604 = vmor %vm4602, %vm4603
  %v4605 = vsel %vm4604, %v4597, %v4601
  %v4606 = vand.u32 2147483647, %v4481
  %vm4607 = vcmp.eq.f32.partialorder %v4606, 8.507059e+37
  %v4608 = vand.u32 %v4481, 2147483648
  %v4609 = vor.u32 1.1754944e-38, %v4608
  %v4610 = vsel %vm4607, %v4609, %v4605
  %v4611 = vmul.f32 1.0, %v4610
  %v4612 = vrcp.pop %v4482
  %v4613 = vmul.f32 %v4482, %v4612
  %v4614 = vsub.f32 1.0, %v4613
  %v4615 = vmul.f32 %v4612, %v4614
  %v4616 = vadd.f32 %v4612, %v4615
  %vm4617 = vweird.f32 %v4482
  %vm4618 = vweird.f32 %v4612
  %vm4619 = vmor %vm4617, %vm4618
  %v4620 = vsel %vm4619, %v4612, %v4616
  %v4621 = vand.u32 2147483647, %v4482
  %vm4622 = vcmp.eq.f32.partialorder %v4621, 8.507059e+37
  %v4623 = vand.u32 %v4482, 2147483648
  %v4624 = vor.u32 1.1754944e-38, %v4623
  %v4625 = vsel %vm4622, %v4624, %v4620
  %v4626 = vmul.f32 1.0, %v4625
  %v4627 = vrcp.pop %v4483
  %v4628 = vmul.f32 %v4483, %v4627
  %v4629 = vsub.f32 1.0, %v4628
  %v4630 = vmul.f32 %v4627, %v4629
  %v4631 = vadd.f32 %v4627, %v4630
  %vm4632 = vweird.f32 %v4483
  %vm4633 = vweird.f32 %v4627
  %vm4634 = vmor %vm4632, %vm4633
  %v4635 = vsel %vm4634, %v4627, %v4631
  %v4636 = vand.u32 2147483647, %v4483
  %vm4637 = vcmp.eq.f32.partialorder %v4636, 8.507059e+37
  %v4638 = vand.u32 %v4483, 2147483648
  %v4639 = vor.u32 1.1754944e-38, %v4638
  %v4640 = vsel %vm4637, %v4639, %v4635
  %v4641 = vmul.f32 1.0, %v4640
  %v4642 = vrcp.pop %v4484
  %v4643 = vmul.f32 %v4484, %v4642
  %v4644 = vsub.f32 1.0, %v4643
  %v4645 = vmul.f32 %v4642, %v4644
  %v4646 = vadd.f32 %v4642, %v4645
  %vm4647 = vweird.f32 %v4484
  %vm4648 = vweird.f32 %v4642
  %vm4649 = vmor %vm4647, %vm4648
  %v4650 = vsel %vm4649, %v4642, %v4646
  %v4651 = vand.u32 2147483647, %v4484
  %vm4652 = vcmp.eq.f32.partialorder %v4651, 8.507059e+37
  %v4653 = vand.u32 %v4484, 2147483648
  %v4654 = vor.u32 1.1754944e-38, %v4653
  %v4655 = vsel %vm4652, %v4654, %v4650
  %v4656 = vmul.f32 1.0, %v4655
  %v4657 = vrcp.pop %v4485
  %v4658 = vmul.f32 %v4485, %v4657
  %v4659 = vsub.f32 1.0, %v4658
  %v4660 = vmul.f32 %v4657, %v4659
  %v4661 = vadd.f32 %v4657, %v4660
  %vm4662 = vweird.f32 %v4485
  %vm4663 = vweird.f32 %v4657
  %vm4664 = vmor %vm4662, %vm4663
  %v4665 = vsel %vm4664, %v4657, %v4661
  %v4666 = vand.u32 2147483647, %v4485
  %vm4667 = vcmp.eq.f32.partialorder %v4666, 8.507059e+37
  %v4668 = vand.u32 %v4485, 2147483648
  %v4669 = vor.u32 1.1754944e-38, %v4668
  %v4670 = vsel %vm4667, %v4669, %v4665
  %v4671 = vmul.f32 1.0, %v4670
  %v4672 = vrcp.pop %v4486
  %v4673 = vmul.f32 %v4486, %v4672
  %v4674 = vsub.f32 1.0, %v4673
  %v4675 = vmul.f32 %v4672, %v4674
  %v4676 = vadd.f32 %v4672, %v4675
  %vm4677 = vweird.f32 %v4486
  %vm4678 = vweird.f32 %v4672
  %vm4679 = vmor %vm4677, %vm4678
  %v4680 = vsel %vm4679, %v4672, %v4676
  %v4681 = vand.u32 2147483647, %v4486
  %vm4682 = vcmp.eq.f32.partialorder %v4681, 8.507059e+37
  %v4683 = vand.u32 %v4486, 2147483648
  %v4684 = vor.u32 1.1754944e-38, %v4683
  %v4685 = vsel %vm4682, %v4684, %v4680
  %v4686 = vmul.f32 1.0, %v4685
  %v4687 = vrcp.pop %v4487
  %v4688 = vmul.f32 %v4487, %v4687
  %v4689 = vsub.f32 1.0, %v4688
  %v4690 = vmul.f32 %v4687, %v4689
  %v4691 = vadd.f32 %v4687, %v4690
  %vm4692 = vweird.f32 %v4487
  %vm4693 = vweird.f32 %v4687
  %vm4694 = vmor %vm4692, %vm4693
  %v4695 = vsel %vm4694, %v4687, %v4691
  %v4696 = vand.u32 2147483647, %v4487
  %vm4697 = vcmp.eq.f32.partialorder %v4696, 8.507059e+37
  %v4698 = vand.u32 %v4487, 2147483648
  %v4699 = vor.u32 1.1754944e-38, %v4698
  %v4700 = vsel %vm4697, %v4699, %v4695
  %v4701 = vmul.f32 1.0, %v4700
  %v4702 = vrcp.pop %v4488
  %v4703 = vmul.f32 %v4488, %v4702
  %v4704 = vsub.f32 1.0, %v4703
  %v4705 = vmul.f32 %v4702, %v4704
  %v4706 = vadd.f32 %v4702, %v4705
  %vm4707 = vweird.f32 %v4488
  %vm4708 = vweird.f32 %v4702
  %vm4709 = vmor %vm4707, %vm4708
  %v4710 = vsel %vm4709, %v4702, %v4706
  %v4711 = vand.u32 2147483647, %v4488
  %vm4712 = vcmp.eq.f32.partialorder %v4711, 8.507059e+37
  %v4713 = vand.u32 %v4488, 2147483648
  %v4714 = vor.u32 1.1754944e-38, %v4713
  %v4715 = vsel %vm4712, %v4714, %v4710
  %v4716 = vmul.f32 1.0, %v4715
  %v4717 = vrcp.pop %v4489
  %v4718 = vmul.f32 %v4489, %v4717
  %v4719 = vsub.f32 1.0, %v4718
  %v4720 = vmul.f32 %v4717, %v4719
  %v4721 = vadd.f32 %v4717, %v4720
  %vm4722 = vweird.f32 %v4489
  %vm4723 = vweird.f32 %v4717
  %vm4724 = vmor %vm4722, %vm4723
  %v4725 = vsel %vm4724, %v4717, %v4721
  %v4726 = vand.u32 2147483647, %v4489
  %vm4727 = vcmp.eq.f32.partialorder %v4726, 8.507059e+37
  %v4728 = vand.u32 %v4489, 2147483648
  %v4729 = vor.u32 1.1754944e-38, %v4728
  %v4730 = vsel %vm4727, %v4729, %v4725
  %v4731 = vmul.f32 1.0, %v4730
  %v4732 = vrcp.pop %v4490
  %v4733 = vmul.f32 %v4490, %v4732
  %v4734 = vsub.f32 1.0, %v4733
  %v4735 = vmul.f32 %v4732, %v4734
  %v4736 = vadd.f32 %v4732, %v4735
  %vm4737 = vweird.f32 %v4490
  %vm4738 = vweird.f32 %v4732
  %vm4739 = vmor %vm4737, %vm4738
  %v4740 = vsel %vm4739, %v4732, %v4736
  %v4741 = vand.u32 2147483647, %v4490
  %vm4742 = vcmp.eq.f32.partialorder %v4741, 8.507059e+37
  %v4743 = vand.u32 %v4490, 2147483648
  %v4744 = vor.u32 1.1754944e-38, %v4743
  %v4745 = vsel %vm4742, %v4744, %v4740
  %v4746 = vmul.f32 1.0, %v4745
  %v4747 = vrcp.pop %v4491
  %v4748 = vmul.f32 %v4491, %v4747
  %v4749 = vsub.f32 1.0, %v4748
  %v4750 = vmul.f32 %v4747, %v4749
  %v4751 = vadd.f32 %v4747, %v4750
  %vm4752 = vweird.f32 %v4491
  %vm4753 = vweird.f32 %v4747
  %vm4754 = vmor %vm4752, %vm4753
  %v4755 = vsel %vm4754, %v4747, %v4751
  %v4756 = vand.u32 2147483647, %v4491
  %vm4757 = vcmp.eq.f32.partialorder %v4756, 8.507059e+37
  %v4758 = vand.u32 %v4491, 2147483648
  %v4759 = vor.u32 1.1754944e-38, %v4758
  %v4760 = vsel %vm4757, %v4759, %v4755
  %v4761 = vmul.f32 1.0, %v4760
  %4780 = vst [vmem:[#allocation1] ss:$9 sm:$0xff] %v4506
  %s4781 = scalar_lea.vmem [#allocation1], 1
  %4782 = vst [vmem:[%s4781] ss:$9 sm:$0xff] %v4521
  %s4783 = scalar_lea.vmem [#allocation1], 2
  %4784 = vst [vmem:[%s4783] ss:$9 sm:$0xff] %v4536
  %s4785 = scalar_lea.vmem [#allocation1], 3
  %4786 = vst [vmem:[%s4785] ss:$9 sm:$0xff] %v4551
  %s4787 = scalar_lea.vmem [#allocation1], 4
  %4788 = vst [vmem:[%s4787] ss:$9 sm:$0xff] %v4566
  %s4789 = scalar_lea.vmem [#allocation1], 5
  %4790 = vst [vmem:[%s4789] ss:$9 sm:$0xff] %v4581
  %s4791 = scalar_lea.vmem [#allocation1], 6
  %4792 = vst [vmem:[%s4791] ss:$9 sm:$0xff] %v4596
  %s4793 = scalar_lea.vmem [#allocation1], 7
  %4794 = vst [vmem:[%s4793] ss:$9 sm:$0xff] %v4611
  %v4795 = vld [vmem:[#allocation1] sm:$0xff]
  %4796 = vst [vmem:[#allocation1] ss:$9 sm:$0xff] %v4626
  %v4797 = vld [vmem:[#allocation1] sm:$0xff]
  %4798 = vst [vmem:[#allocation1] ss:$9 sm:$0xff] %v4641
  %4799 = vst [vmem:[%s4781] ss:$9 sm:$0xff] %v4656
  %4800 = vst [vmem:[%s4783] ss:$9 sm:$0xff] %v4671
  %4801 = vst [vmem:[%s4785] ss:$9 sm:$0xff] %v4686
  %4802 = vst [vmem:[%s4787] ss:$9 sm:$0xff] %v4701
  %4803 = vst [vmem:[%s4789] ss:$9 sm:$0xff] %v4716
  %4804 = vst [vmem:[%s4791] ss:$9 sm:$0xff] %v4731
  %4805 = vst [vmem:[%s4793] ss:$9 sm:$0xff] %v4746
  %v4806 = vld [vmem:[#allocation1] sm:$0xff]
  %4807 = vst [vmem:[#allocation1] ss:$9 sm:$0xff] %v4761
  %v4808 = vld [vmem:[#allocation1] sm:$0xff]
  %4813 = vst.msk [vmem:[%s5] sm:$0xff] %vm20, %v4795
  %vm4814 = vcmask 57344
  %4815 = vst.msk [vmem:[%s5 + $0x8] sm:$0x1] %vm4814, %v4797
  %4816 = vst.msk [vmem:[%s5 + $0x10] sm:$0xff] %vm20, %v4806
  %4817 = vst.msk [vmem:[%s5 + $0x18] sm:$0x1] %vm4814, %v4808
  // Predicated region
  $region22: #{ffm_forward.1} parent=0 // pred_check
    _
  $region23: #{ffm_forward.1} parent=0 // pred_check_branch
    %4819 = sbr.rel (0) target = $region25
  $region24: #{ffm_forward.1} parent=0 // pred_region
    _
  $region25: #{ffm_forward.1} parent=0 // pred_fallthru
    _
  // Predicated region
  $region26: #{ffm_forward.1} parent=0 // pred_check
    _
  $region27: #{ffm_forward.1} parent=0 // pred_check_branch
    %4821 = sbr.rel (0) target = $region29
  $region28: #{ffm_forward.1} parent=0 // pred_region
    _
  $region29: #{ffm_forward.1} parent=0 // pred_fallthru
    _

</llo_original>
